<compile_context>
chip_gen: v7x
topology: tpu7x:2x2x1
jax: 0.10.0
libtpu: 0.0.40
codegen_flags: <defaults>
</compile_context>

<pallas_src>
import numpy as np
import jax
import jax.numpy as jnp
from jax import lax
from jax.experimental import pallas as pl
from jax.experimental.pallas import tpu as pltpu

NUM_LAYERS = 1
SOS_TOKEN = 1
MAX_LEN_SEQ_A = 10   # encoder sequence length
MAX_LEN_SEQ_B = 8    # decoder steps
TEACHER_FORCE_EPS = 1.0


# ----------------------------------------------------------------------------- kernel
def _decoder_kernel(
    enc_ref, h0_ref, xemb_ref,
    ua_t_ref, bua_ref, va_ref, bva_ref,
    wh_ref, bh_ref,          # fused hidden-side: (H, 4H), (1, 4H)   [Wa | W_hr | W_hz | W_hn]
    wie_ref, wic_ref, bi_ref,  # fused input-side: (H,3H) emb-half, (H,3H) ctx-half, (1,3H)
    wout_t_ref, bout_ref,
    out_ref, attn_ref, hfin_ref,
    h_all_ref, ig_emb_ref,
):
    B, S_A, H = enc_ref.shape
    T = xemb_ref.shape[0]
    V = out_ref.shape[2]
    f32 = jnp.float32

    keys = enc_ref[...]                                              # (B, S_A, H)

    # Ua(keys) is constant across steps: one 2-D MXU matmul over all (b, s) rows.
    ua_keys = (jnp.dot(keys.reshape(B * S_A, H), ua_t_ref[...],
                       preferred_element_type=f32)
               + bua_ref[...]).reshape(B, S_A, H)                    # (B, S_A, H)

    # Precompute the embedding-dependent half of the GRU input gates for all T steps
    # (off the serial dependency chain): one (T*B, H) @ (H, 3H) matmul.
    ig_emb_ref[...] = (jnp.dot(xemb_ref[...].reshape(T * B, H), wie_ref[...],
                               preferred_element_type=f32)
                       + bi_ref[...]).reshape(T, B, 3 * H)           # (T, B, 3H)

    wh, bh = wh_ref[...], bh_ref[...]                                # (H, 4H), (1, 4H)
    wic = wic_ref[...]                                               # (H, 3H)
    va, bva = va_ref[...], bva_ref[...]                              # (1, H), (1, 1)

    def step(t, hidden):
        # --- fused hidden-side projection: [Wa(h) | W_hr(h)+b | W_hz(h)+b | W_hn(h)+b] ---
        hg = jnp.dot(hidden, wh, preferred_element_type=f32) + bh    # (B, 4H)
        wa_q = hg[:, :H]

        # --- Bahdanau attention: scores = Va(tanh(Wa(query) + Ua(keys))) ---
        e = jnp.tanh(wa_q[:, None, :] + ua_keys)                     # (B, S_A, H)
        scores = jnp.sum(e * va, axis=-1) + bva                      # (B, S_A)
        scores = scores - jnp.max(scores, axis=-1, keepdims=True)
        ew = jnp.exp(scores)
        weights = ew / jnp.sum(ew, axis=-1, keepdims=True)           # softmax
        context = jnp.sum(weights[:, :, None] * keys, axis=1)        # (B, H)

        # --- GRU cell (PyTorch gate order r, z, n); input gates = emb-half + ctx-half ---
        i_gates = ig_emb_ref[t] + jnp.dot(context, wic,
                                          preferred_element_type=f32)  # (B, 3H)
        r = jax.nn.sigmoid(i_gates[:, :H] + hg[:, H:2 * H])
        z = jax.nn.sigmoid(i_gates[:, H:2 * H] + hg[:, 2 * H:3 * H])
        n = jnp.tanh(i_gates[:, 2 * H:3 * H] + r * hg[:, 3 * H:4 * H])
        h_new = (1.0 - z) * n + z * hidden                           # (B, H)

        h_all_ref[t] = h_new
        # F.pad to MAX_LEN_SEQ_A is a no-op here: S_A == MAX_LEN_SEQ_A.
        attn_ref[t] = weights
        return h_new

    hfin_ref[...] = lax.fori_loop(0, T, step, h0_ref[...], unroll=True)

    # --- output projection hoisted out of the recurrence: one (T*B, H) @ (H, V) matmul ---
    out_ref[...] = (jnp.dot(h_all_ref[...].reshape(T * B, H), wout_t_ref[...],
                            preferred_element_type=f32)
                    + bout_ref[...]).reshape(T, B, V)


# ----------------------------------------------------------------------------- wrapper
def decoder_rnn_forward(params, encoder_outputs, encoder_hidden, targets):
    B, S_A, H = encoder_outputs.shape
    V = params["emb"].shape[0]
    T = MAX_LEN_SEQ_B
    assert S_A == MAX_LEN_SEQ_A

    # Teacher forcing (eps = 1.0): input[0] = SOS, input[t] = targets[:, t-1].
    tok_ids = jnp.concatenate(
        [jnp.full((B, 1), SOS_TOKEN, dtype=targets.dtype), targets[:, : T - 1]], axis=1)
    # Embedding gather in the wrapper (dropout is identity in eval) -> (T, B, H) time-major.
    x_emb_all = jnp.transpose(params["emb"][tok_ids], (1, 0, 2)).astype(jnp.float32)

    h0 = encoder_hidden.reshape(B, H).astype(jnp.float32)

    # Fused hidden-side weights/biases: [Wa | W_hr | W_hz | W_hn]  -> (H, 4H), (1, 4H).
    w_h_fused = jnp.concatenate(
        [params["wa"].T, params["w_hr"].T, params["w_hz"].T, params["w_hn"].T], axis=1)
    b_h_fused = jnp.concatenate(
        [params["ba"], params["b_hr"], params["b_hz"], params["b_hn"]], axis=1)

    # Fused input-side weights, split into embedding half and context half -> (H, 3H) each.
    w_i_emb = jnp.concatenate(
        [params["w_ir"][:, :H].T, params["w_iz"][:, :H].T, params["w_in"][:, :H].T], axis=1)
    w_i_ctx = jnp.concatenate(
        [params["w_ir"][:, H:].T, params["w_iz"][:, H:].T, params["w_in"][:, H:].T], axis=1)
    b_i_fused = jnp.concatenate([params["b_ir"], params["b_iz"], params["b_in"]], axis=1)

    inputs = (
        encoder_outputs.astype(jnp.float32), h0, x_emb_all,
        params["ua"].T, params["bua"], params["va"], params["bva"],
        w_h_fused, b_h_fused,
        w_i_emb, w_i_ctx, b_i_fused,
        params["w_out"].T, params["b_out"],
    )

    vmem = pl.BlockSpec(memory_space=pltpu.MemorySpace.VMEM)
    out_t, attn_t, h_fin = pl.pallas_call(
        _decoder_kernel,
        out_shape=(
            jax.ShapeDtypeStruct((T, B, V), jnp.float32),
            jax.ShapeDtypeStruct((T, B, S_A), jnp.float32),
            jax.ShapeDtypeStruct((B, H), jnp.float32),
        ),
        in_specs=[vmem] * len(inputs),
        out_specs=(vmem, vmem, vmem),
        scratch_shapes=[
            pltpu.VMEM((T, B, H), jnp.float32),       # per-step hidden states
            pltpu.VMEM((T, B, 3 * H), jnp.float32),   # precomputed emb-half of input gates
        ],
    )(*inputs)

    decoder_outputs = jnp.transpose(out_t, (1, 0, 2))          # (B, T, V)  == torch.cat(dim=1)
    decoder_hidden = h_fin[None]                               # (NUM_LAYERS=1, B, H)
    attentions = [attn_t[t] for t in range(T)]                 # list of (B, MAX_LEN_SEQ_A)
    return decoder_outputs, decoder_hidden, attentions


# ----------------------------------------------------------------------------- pure-JAX reference
def decoder_rnn_reference(params, encoder_outputs, encoder_hidden, targets):
    B, S_A, H = encoder_outputs.shape
    T = MAX_LEN_SEQ_B
    dot = lambda a, b: jnp.dot(a, b, precision=lax.Precision.HIGHEST)
    keys = encoder_outputs
    ua_keys = jnp.einsum("bsh,oh->bso", keys, params["ua"],
                         precision=lax.Precision.HIGHEST) + params["bua"]
    tok_ids = jnp.concatenate(
        [jnp.full((B, 1), SOS_TOKEN, dtype=targets.dtype), targets[:, : T - 1]], axis=1)
    h = encoder_hidden[0]
    outs, attns = [], []
    for t in range(T):
        x_emb = params["emb"][tok_ids[:, t]]
        wa_q = dot(h, params["wa"].T) + params["ba"]
        e = jnp.tanh(wa_q[:, None, :] + ua_keys)
        scores = jnp.sum(e * params["va"], axis=-1) + params["bva"]
        weights = jax.nn.softmax(scores, axis=-1)
        context = jnp.sum(weights[:, :, None] * keys, axis=1)
        x = jnp.concatenate([x_emb, context], axis=-1)
        r = jax.nn.sigmoid(dot(x, params["w_ir"].T) + params["b_ir"]
                           + dot(h, params["w_hr"].T) + params["b_hr"])
        z = jax.nn.sigmoid(dot(x, params["w_iz"].T) + params["b_iz"]
                           + dot(h, params["w_hz"].T) + params["b_hz"])
        n = jnp.tanh(dot(x, params["w_in"].T) + params["b_in"]
                     + r * (dot(h, params["w_hn"].T) + params["b_hn"]))
        h = (1.0 - z) * n + z * h
        outs.append((dot(h, params["w_out"].T) + params["b_out"])[:, None, :])
        attns.append(weights)
    return jnp.concatenate(outs, axis=1), h[None], attns


# ----------------------------------------------------------------------------- params
def init_params(key, hidden_size, vocab_count):
    H, V = hidden_size, vocab_count
    ks = jax.random.split(key, 24)

    def u(k, shape, fan_in):
        bound = 1.0 / np.sqrt(fan_in)
        return jax.random.uniform(k, shape, jnp.float32, -bound, bound)

    p = {"emb": jax.random.normal(ks[0], (V, H), jnp.float32)}
    p["wa"], p["ba"] = u(ks[1], (H, H), H), u(ks[2], (1, H), H)
    p["ua"], p["bua"] = u(ks[3], (H, H), H), u(ks[4], (1, H), H)
    p["va"], p["bva"] = u(ks[5], (1, H), H), u(ks[6], (1, 1), H)      # nn.Linear(H, 1)
    names = ["r", "z", "n"]
    for i, g in enumerate(names):
        p[f"w_i{g}"] = u(ks[7 + i], (H, 2 * H), H)                    # GRU W_ih rows
        p[f"w_h{g}"] = u(ks[10 + i], (H, H), H)                       # GRU W_hh rows
        p[f"b_i{g}"] = u(ks[13 + i], (1, H), H)
        p[f"b_h{g}"] = u(ks[16 + i], (1, H), H)
    p["w_out"], p["b_out"] = u(ks[19], (V, H), H), u(ks[20], (1, V), H)
    return p


# ----------------------------------------------------------------------------- main
if __name__ == "__main__":
    B, H, V = 2, 32, 24
    key = jax.random.PRNGKey(0)
    k_enc, k_hid, k_tgt, k_par = jax.random.split(key, 4)

    params = init_params(k_par, H, V)
    encoder_outputs = jax.random.normal(k_enc, (B, MAX_LEN_SEQ_A, H), jnp.float32)
    encoder_hidden = jax.random.normal(k_hid, (NUM_LAYERS, B, H), jnp.float32)
    targets = jax.random.randint(k_tgt, (B, MAX_LEN_SEQ_B), 0, V, jnp.int32)

    dec_out, dec_hid, attns = decoder_rnn_forward(params, encoder_outputs, encoder_hidden, targets)
    jax.block_until_ready((dec_out, dec_hid, attns))

    ref_out, ref_hid, ref_attns = decoder_rnn_reference(params, encoder_outputs, encoder_hidden, targets)
    np.testing.assert_allclose(np.asarray(dec_out), np.asarray(ref_out), rtol=2e-2, atol=2e-2)
    np.testing.assert_allclose(np.asarray(dec_hid), np.asarray(ref_hid), rtol=2e-2, atol=2e-2)
    np.testing.assert_allclose(np.asarray(jnp.stack(attns)), np.asarray(jnp.stack(ref_attns)),
                               rtol=2e-2, atol=2e-2)
    print("KERNEL_OK")
</pallas_src>

<mosaic_0001>
module attributes {stable_mosaic.version = 11 : i64} {
  func.func @_decoder_kernel(%arg0: memref<2x10x32xf32, #tpu.memory_space<vmem>>, %arg1: memref<2x32xf32, #tpu.memory_space<vmem>>, %arg2: memref<8x2x32xf32, #tpu.memory_space<vmem>>, %arg3: memref<32x32xf32, #tpu.memory_space<vmem>>, %arg4: memref<1x32xf32, #tpu.memory_space<vmem>>, %arg5: memref<1x32xf32, #tpu.memory_space<vmem>>, %arg6: memref<1x1xf32, #tpu.memory_space<vmem>>, %arg7: memref<32x128xf32, #tpu.memory_space<vmem>>, %arg8: memref<1x128xf32, #tpu.memory_space<vmem>>, %arg9: memref<32x96xf32, #tpu.memory_space<vmem>>, %arg10: memref<32x96xf32, #tpu.memory_space<vmem>>, %arg11: memref<1x96xf32, #tpu.memory_space<vmem>>, %arg12: memref<32x24xf32, #tpu.memory_space<vmem>>, %arg13: memref<1x24xf32, #tpu.memory_space<vmem>>, %arg14: memref<8x2x24xf32, #tpu.memory_space<vmem>>, %arg15: memref<8x2x10xf32, #tpu.memory_space<vmem>>, %arg16: memref<2x32xf32, #tpu.memory_space<vmem>>, %arg17: memref<8x2x32xf32, #tpu.memory_space<vmem>>, %arg18: memref<8x2x96xf32, #tpu.memory_space<vmem>>) attributes {dimension_semantics = [], scalar_prefetch = 0 : i64, scratch_operands = 2 : i64, tpu.core_type = #tpu.core_type<tc>} {
    %c0 = arith.constant 0 : index
    %c0_0 = arith.constant 0 : index
    %c0_1 = arith.constant 0 : index
    %0 = vector.load %arg0[%c0, %c0_0, %c0_1] : memref<2x10x32xf32, #tpu.memory_space<vmem>>, vector<2x10x32xf32>
    %1 = vector.shape_cast %0 : vector<2x10x32xf32> to vector<20x32xf32>
    %c0_2 = arith.constant 0 : index
    %c0_3 = arith.constant 0 : index
    %2 = vector.load %arg3[%c0_2, %c0_3] : memref<32x32xf32, #tpu.memory_space<vmem>>, vector<32x32xf32>
    %cst = arith.constant dense<0.000000e+00> : vector<20x32xf32>
    %3 = tpu.matmul %1, %2, %cst {dimension_numbers = #tpu.dot_dimension_numbers<[1], [0], [0], [1], [0, 0, 1, 1], [], []>} : vector<20x32xf32>, vector<32x32xf32>, vector<20x32xf32> -> vector<20x32xf32>
    %c0_4 = arith.constant 0 : index
    %c0_5 = arith.constant 0 : index
    %4 = vector.load %arg4[%c0_4, %c0_5] : memref<1x32xf32, #tpu.memory_space<vmem>>, vector<1x32xf32>
    %5 = vector.broadcast %4 : vector<1x32xf32> to vector<20x32xf32>
    %6 = arith.addf %3, %5 : vector<20x32xf32>
    %7 = vector.shape_cast %6 : vector<20x32xf32> to vector<2x10x32xf32>
    %c0_6 = arith.constant 0 : index
    %c0_7 = arith.constant 0 : index
    %c0_8 = arith.constant 0 : index
    %8 = vector.load %arg2[%c0_6, %c0_7, %c0_8] : memref<8x2x32xf32, #tpu.memory_space<vmem>>, vector<8x2x32xf32>
    %9 = vector.shape_cast %8 : vector<8x2x32xf32> to vector<16x32xf32>
    %c0_9 = arith.constant 0 : index
    %c0_10 = arith.constant 0 : index
    %10 = vector.load %arg9[%c0_9, %c0_10] : memref<32x96xf32, #tpu.memory_space<vmem>>, vector<32x96xf32>
    %cst_11 = arith.constant dense<0.000000e+00> : vector<16x96xf32>
    %11 = tpu.matmul %9, %10, %cst_11 {dimension_numbers = #tpu.dot_dimension_numbers<[1], [0], [0], [1], [0, 0, 1, 1], [], []>} : vector<16x32xf32>, vector<32x96xf32>, vector<16x96xf32> -> vector<16x96xf32>
    %c0_12 = arith.constant 0 : index
    %c0_13 = arith.constant 0 : index
    %12 = vector.load %arg11[%c0_12, %c0_13] : memref<1x96xf32, #tpu.memory_space<vmem>>, vector<1x96xf32>
    %13 = vector.broadcast %12 : vector<1x96xf32> to vector<16x96xf32>
    %14 = arith.addf %11, %13 : vector<16x96xf32>
    %15 = vector.shape_cast %14 : vector<16x96xf32> to vector<8x2x96xf32>
    %c0_14 = arith.constant 0 : index
    %c0_15 = arith.constant 0 : index
    %c0_16 = arith.constant 0 : index
    %16 = vector.load %arg18[%c0_14, %c0_15, %c0_16] : memref<8x2x96xf32, #tpu.memory_space<vmem>>, vector<8x2x96xf32>
    tpu.vector_store %arg18[%c0_14, %c0_15, %c0_16], %15 {strides = array<i32>} : memref<8x2x96xf32, #tpu.memory_space<vmem>>, vector<8x2x96xf32>,
    %c0_17 = arith.constant 0 : index
    %c0_18 = arith.constant 0 : index
    %17 = vector.load %arg7[%c0_17, %c0_18] : memref<32x128xf32, #tpu.memory_space<vmem>>, vector<32x128xf32>
    %c0_19 = arith.constant 0 : index
    %c0_20 = arith.constant 0 : index
    %18 = vector.load %arg8[%c0_19, %c0_20] : memref<1x128xf32, #tpu.memory_space<vmem>>, vector<1x128xf32>
    %c0_21 = arith.constant 0 : index
    %c0_22 = arith.constant 0 : index
    %19 = vector.load %arg10[%c0_21, %c0_22] : memref<32x96xf32, #tpu.memory_space<vmem>>, vector<32x96xf32>
    %c0_23 = arith.constant 0 : index
    %c0_24 = arith.constant 0 : index
    %20 = vector.load %arg5[%c0_23, %c0_24] : memref<1x32xf32, #tpu.memory_space<vmem>>, vector<1x32xf32>
    %c0_25 = arith.constant 0 : index
    %c0_26 = arith.constant 0 : index
    %21 = vector.load %arg6[%c0_25, %c0_26] : memref<1x1xf32, #tpu.memory_space<vmem>>, vector<1x1xf32>
    %c0_27 = arith.constant 0 : index
    %c0_28 = arith.constant 0 : index
    %22 = vector.load %arg1[%c0_27, %c0_28] : memref<2x32xf32, #tpu.memory_space<vmem>>, vector<2x32xf32>
    %c0_i32 = arith.constant 0 : i32
    %cst_29 = arith.constant dense<0.000000e+00> : vector<2x128xf32>
    %23 = tpu.matmul %22, %17, %cst_29 {dimension_numbers = #tpu.dot_dimension_numbers<[1], [0], [0], [1], [0, 0, 1, 1], [], []>} : vector<2x32xf32>, vector<32x128xf32>, vector<2x128xf32> -> vector<2x128xf32>
    %24 = vector.broadcast %18 : vector<1x128xf32> to vector<2x128xf32>
    %25 = arith.addf %23, %24 : vector<2x128xf32>
    %26 = vector.extract_strided_slice %25 {offsets = [0, 0], sizes = [2, 32], strides = [1, 1]} : vector<2x128xf32> to vector<2x32xf32>
    %27 = vector.shape_cast %26 : vector<2x32xf32> to vector<2x1x32xf32>
    %28 = vector.broadcast %27 : vector<2x1x32xf32> to vector<2x10x32xf32>
    %29 = arith.addf %28, %7 : vector<2x10x32xf32>
    %30 = math.tanh %29 : vector<2x10x32xf32>
    %31 = vector.shape_cast %20 : vector<1x32xf32> to vector<1x1x32xf32>
    %32 = vector.broadcast %31 : vector<1x1x32xf32> to vector<2x10x32xf32>
    %33 = arith.mulf %30, %32 : vector<2x10x32xf32>
    %cst_30 = arith.constant dense<0.000000e+00> : vector<2x10xf32>
    %34 = vector.multi_reduction <add>, %33, %cst_30 [2] : vector<2x10x32xf32> to vector<2x10xf32>
    %35 = vector.broadcast %21 : vector<1x1xf32> to vector<2x10xf32>
    %36 = arith.addf %34, %35 : vector<2x10xf32>
    %cst_31 = arith.constant dense<0xFF800000> : vector<2xf32>
    %37 = vector.multi_reduction <maximumf>, %36, %cst_31 [1] : vector<2x10xf32> to vector<2xf32>
    %38 = vector.shape_cast %37 : vector<2xf32> to vector<2x1xf32>
    %39 = vector.broadcast %38 : vector<2x1xf32> to vector<2x10xf32>
    %40 = arith.subf %36, %39 : vector<2x10xf32>
    %41 = math.exp %40 : vector<2x10xf32>
    %cst_32 = arith.constant dense<0.000000e+00> : vector<2xf32>
    %42 = vector.multi_reduction <add>, %41, %cst_32 [1] : vector<2x10xf32> to vector<2xf32>
    %43 = vector.shape_cast %42 : vector<2xf32> to vector<2x1xf32>
    %44 = vector.broadcast %43 : vector<2x1xf32> to vector<2x10xf32>
    %45 = arith.divf %41, %44 : vector<2x10xf32>
    %46 = vector.shape_cast %45 : vector<2x10xf32> to vector<2x10x1xf32>
    %47 = vector.broadcast %46 : vector<2x10x1xf32> to vector<2x10x32xf32>
    %48 = arith.mulf %47, %0 : vector<2x10x32xf32>
    %cst_33 = arith.constant dense<0.000000e+00> : vector<2x32xf32>
    %49 = vector.multi_reduction <add>, %48, %cst_33 [1] : vector<2x10x32xf32> to vector<2x32xf32>
    %50 = arith.index_cast %c0_i32 : i32 to index
    %c0_34 = arith.constant 0 : index
    %c0_35 = arith.constant 0 : index
    %51 = vector.load %arg18[%50, %c0_34, %c0_35] : memref<8x2x96xf32, #tpu.memory_space<vmem>>, vector<1x2x96xf32>
    %52 = vector.shape_cast %51 : vector<1x2x96xf32> to vector<2x96xf32>
    %cst_36 = arith.constant dense<0.000000e+00> : vector<2x96xf32>
    %53 = tpu.matmul %49, %19, %cst_36 {dimension_numbers = #tpu.dot_dimension_numbers<[1], [0], [0], [1], [0, 0, 1, 1], [], []>} : vector<2x32xf32>, vector<32x96xf32>, vector<2x96xf32> -> vector<2x96xf32>
    %54 = arith.addf %52, %53 : vector<2x96xf32>
    %55 = vector.extract_strided_slice %54 {offsets = [0, 0], sizes = [2, 32], strides = [1, 1]} : vector<2x96xf32> to vector<2x32xf32>
    %56 = vector.extract_strided_slice %25 {offsets = [0, 32], sizes = [2, 32], strides = [1, 1]} : vector<2x128xf32> to vector<2x32xf32>
    %57 = arith.addf %55, %56 : vector<2x32xf32>
    %58 = arith.negf %57 : vector<2x32xf32>
    %59 = math.exp %58 : vector<2x32xf32>
    %cst_37 = arith.constant 1.000000e+00 : f32
    %60 = vector.broadcast %cst_37 : f32 to vector<2x32xf32>
    %61 = arith.addf %60, %59 : vector<2x32xf32>
    %62 = arith.divf %60, %61 : vector<2x32xf32>
    %63 = vector.extract_strided_slice %54 {offsets = [0, 32], sizes = [2, 32], strides = [1, 1]} : vector<2x96xf32> to vector<2x32xf32>
    %64 = vector.extract_strided_slice %25 {offsets = [0, 64], sizes = [2, 32], strides = [1, 1]} : vector<2x128xf32> to vector<2x32xf32>
    %65 = arith.addf %63, %64 : vector<2x32xf32>
    %66 = arith.negf %65 : vector<2x32xf32>
    %67 = math.exp %66 : vector<2x32xf32>
    %cst_38 = arith.constant 1.000000e+00 : f32
    %68 = vector.broadcast %cst_38 : f32 to vector<2x32xf32>
    %69 = arith.addf %68, %67 : vector<2x32xf32>
    %70 = arith.divf %68, %69 : vector<2x32xf32>
    %71 = vector.extract_strided_slice %54 {offsets = [0, 64], sizes = [2, 32], strides = [1, 1]} : vector<2x96xf32> to vector<2x32xf32>
    %72 = vector.extract_strided_slice %25 {offsets = [0, 96], sizes = [2, 32], strides = [1, 1]} : vector<2x128xf32> to vector<2x32xf32>
    %73 = arith.mulf %62, %72 : vector<2x32xf32>
    %74 = arith.addf %71, %73 : vector<2x32xf32>
    %75 = math.tanh %74 : vector<2x32xf32>
    %cst_39 = arith.constant 1.000000e+00 : f32
    %76 = vector.broadcast %cst_39 : f32 to vector<2x32xf32>
    %77 = arith.subf %76, %70 : vector<2x32xf32>
    %78 = arith.mulf %77, %75 : vector<2x32xf32>
    %79 = arith.mulf %70, %22 : vector<2x32xf32>
    %80 = arith.addf %78, %79 : vector<2x32xf32>
    %81 = arith.index_cast %c0_i32 : i32 to index
    %c0_40 = arith.constant 0 : index
    %c0_41 = arith.constant 0 : index
    %82 = vector.load %arg17[%81, %c0_40, %c0_41] : memref<8x2x32xf32, #tpu.memory_space<vmem>>, vector<1x2x32xf32>
    %83 = vector.shape_cast %82 : vector<1x2x32xf32> to vector<2x32xf32>
    %84 = vector.shape_cast %80 : vector<2x32xf32> to vector<1x2x32xf32>
    tpu.vector_store %arg17[%81, %c0_40, %c0_41], %84 {strides = array<i32>} : memref<8x2x32xf32, #tpu.memory_space<vmem>>, vector<1x2x32xf32>,
    %85 = arith.index_cast %c0_i32 : i32 to index
    %c0_42 = arith.constant 0 : index
    %c0_43 = arith.constant 0 : index
    %86 = vector.load %arg15[%85, %c0_42, %c0_43] : memref<8x2x10xf32, #tpu.memory_space<vmem>>, vector<1x2x10xf32>
    %87 = vector.shape_cast %86 : vector<1x2x10xf32> to vector<2x10xf32>
    %88 = vector.shape_cast %45 : vector<2x10xf32> to vector<1x2x10xf32>
    tpu.vector_store %arg15[%85, %c0_42, %c0_43], %88 {strides = array<i32>} : memref<8x2x10xf32, #tpu.memory_space<vmem>>, vector<1x2x10xf32>,
    %c1_i32 = arith.constant 1 : i32
    %cst_44 = arith.constant dense<0.000000e+00> : vector<2x128xf32>
    %89 = tpu.matmul %80, %17, %cst_44 {dimension_numbers = #tpu.dot_dimension_numbers<[1], [0], [0], [1], [0, 0, 1, 1], [], []>} : vector<2x32xf32>, vector<32x128xf32>, vector<2x128xf32> -> vector<2x128xf32>
    %90 = vector.broadcast %18 : vector<1x128xf32> to vector<2x128xf32>
    %91 = arith.addf %89, %90 : vector<2x128xf32>
    %92 = vector.extract_strided_slice %91 {offsets = [0, 0], sizes = [2, 32], strides = [1, 1]} : vector<2x128xf32> to vector<2x32xf32>
    %93 = vector.shape_cast %92 : vector<2x32xf32> to vector<2x1x32xf32>
    %94 = vector.broadcast %93 : vector<2x1x32xf32> to vector<2x10x32xf32>
    %95 = arith.addf %94, %7 : vector<2x10x32xf32>
    %96 = math.tanh %95 : vector<2x10x32xf32>
    %97 = vector.shape_cast %20 : vector<1x32xf32> to vector<1x1x32xf32>
    %98 = vector.broadcast %97 : vector<1x1x32xf32> to vector<2x10x32xf32>
    %99 = arith.mulf %96, %98 : vector<2x10x32xf32>
    %cst_45 = arith.constant dense<0.000000e+00> : vector<2x10xf32>
    %100 = vector.multi_reduction <add>, %99, %cst_45 [2] : vector<2x10x32xf32> to vector<2x10xf32>
    %101 = vector.broadcast %21 : vector<1x1xf32> to vector<2x10xf32>
    %102 = arith.addf %100, %101 : vector<2x10xf32>
    %cst_46 = arith.constant dense<0xFF800000> : vector<2xf32>
    %103 = vector.multi_reduction <maximumf>, %102, %cst_46 [1] : vector<2x10xf32> to vector<2xf32>
    %104 = vector.shape_cast %103 : vector<2xf32> to vector<2x1xf32>
    %105 = vector.broadcast %104 : vector<2x1xf32> to vector<2x10xf32>
    %106 = arith.subf %102, %105 : vector<2x10xf32>
    %107 = math.exp %106 : vector<2x10xf32>
    %cst_47 = arith.constant dense<0.000000e+00> : vector<2xf32>
    %108 = vector.multi_reduction <add>, %107, %cst_47 [1] : vector<2x10xf32> to vector<2xf32>
    %109 = vector.shape_cast %108 : vector<2xf32> to vector<2x1xf32>
    %110 = vector.broadcast %109 : vector<2x1xf32> to vector<2x10xf32>
    %111 = arith.divf %107, %110 : vector<2x10xf32>
    %112 = vector.shape_cast %111 : vector<2x10xf32> to vector<2x10x1xf32>
    %113 = vector.broadcast %112 : vector<2x10x1xf32> to vector<2x10x32xf32>
    %114 = arith.mulf %113, %0 : vector<2x10x32xf32>
    %cst_48 = arith.constant dense<0.000000e+00> : vector<2x32xf32>
    %115 = vector.multi_reduction <add>, %114, %cst_48 [1] : vector<2x10x32xf32> to vector<2x32xf32>
    %116 = arith.index_cast %c1_i32 : i32 to index
    %c0_49 = arith.constant 0 : index
    %c0_50 = arith.constant 0 : index
    %117 = vector.load %arg18[%116, %c0_49, %c0_50] : memref<8x2x96xf32, #tpu.memory_space<vmem>>, vector<1x2x96xf32>
    %118 = vector.shape_cast %117 : vector<1x2x96xf32> to vector<2x96xf32>
    %cst_51 = arith.constant dense<0.000000e+00> : vector<2x96xf32>
    %119 = tpu.matmul %115, %19, %cst_51 {dimension_numbers = #tpu.dot_dimension_numbers<[1], [0], [0], [1], [0, 0, 1, 1], [], []>} : vector<2x32xf32>, vector<32x96xf32>, vector<2x96xf32> -> vector<2x96xf32>
    %120 = arith.addf %118, %119 : vector<2x96xf32>
    %121 = vector.extract_strided_slice %120 {offsets = [0, 0], sizes = [2, 32], strides = [1, 1]} : vector<2x96xf32> to vector<2x32xf32>
    %122 = vector.extract_strided_slice %91 {offsets = [0, 32], sizes = [2, 32], strides = [1, 1]} : vector<2x128xf32> to vector<2x32xf32>
    %123 = arith.addf %121, %122 : vector<2x32xf32>
    %124 = arith.negf %123 : vector<2x32xf32>
    %125 = math.exp %124 : vector<2x32xf32>
    %cst_52 = arith.constant 1.000000e+00 : f32
    %126 = vector.broadcast %cst_52 : f32 to vector<2x32xf32>
    %127 = arith.addf %126, %125 : vector<2x32xf32>
    %128 = arith.divf %126, %127 : vector<2x32xf32>
    %129 = vector.extract_strided_slice %120 {offsets = [0, 32], sizes = [2, 32], strides = [1, 1]} : vector<2x96xf32> to vector<2x32xf32>
    %130 = vector.extract_strided_slice %91 {offsets = [0, 64], sizes = [2, 32], strides = [1, 1]} : vector<2x128xf32> to vector<2x32xf32>
    %131 = arith.addf %129, %130 : vector<2x32xf32>
    %132 = arith.negf %131 : vector<2x32xf32>
    %133 = math.exp %132 : vector<2x32xf32>
    %cst_53 = arith.constant 1.000000e+00 : f32
    %134 = vector.broadcast %cst_53 : f32 to vector<2x32xf32>
    %135 = arith.addf %134, %133 : vector<2x32xf32>
    %136 = arith.divf %134, %135 : vector<2x32xf32>
    %137 = vector.extract_strided_slice %120 {offsets = [0, 64], sizes = [2, 32], strides = [1, 1]} : vector<2x96xf32> to vector<2x32xf32>
    %138 = vector.extract_strided_slice %91 {offsets = [0, 96], sizes = [2, 32], strides = [1, 1]} : vector<2x128xf32> to vector<2x32xf32>
    %139 = arith.mulf %128, %138 : vector<2x32xf32>
    %140 = arith.addf %137, %139 : vector<2x32xf32>
    %141 = math.tanh %140 : vector<2x32xf32>
    %cst_54 = arith.constant 1.000000e+00 : f32
    %142 = vector.broadcast %cst_54 : f32 to vector<2x32xf32>
    %143 = arith.subf %142, %136 : vector<2x32xf32>
    %144 = arith.mulf %143, %141 : vector<2x32xf32>
    %145 = arith.mulf %136, %80 : vector<2x32xf32>
    %146 = arith.addf %144, %145 : vector<2x32xf32>
    %147 = arith.index_cast %c1_i32 : i32 to index
    %c0_55 = arith.constant 0 : index
    %c0_56 = arith.constant 0 : index
    %148 = vector.load %arg17[%147, %c0_55, %c0_56] : memref<8x2x32xf32, #tpu.memory_space<vmem>>, vector<1x2x32xf32>
    %149 = vector.shape_cast %148 : vector<1x2x32xf32> to vector<2x32xf32>
    %150 = vector.shape_cast %146 : vector<2x32xf32> to vector<1x2x32xf32>
    tpu.vector_store %arg17[%147, %c0_55, %c0_56], %150 {strides = array<i32>} : memref<8x2x32xf32, #tpu.memory_space<vmem>>, vector<1x2x32xf32>,
    %151 = arith.index_cast %c1_i32 : i32 to index
    %c0_57 = arith.constant 0 : index
    %c0_58 = arith.constant 0 : index
    %152 = vector.load %arg15[%151, %c0_57, %c0_58] : memref<8x2x10xf32, #tpu.memory_space<vmem>>, vector<1x2x10xf32>
    %153 = vector.shape_cast %152 : vector<1x2x10xf32> to vector<2x10xf32>
    %154 = vector.shape_cast %111 : vector<2x10xf32> to vector<1x2x10xf32>
    tpu.vector_store %arg15[%151, %c0_57, %c0_58], %154 {strides = array<i32>} : memref<8x2x10xf32, #tpu.memory_space<vmem>>, vector<1x2x10xf32>,
    %c2_i32 = arith.constant 2 : i32
    %cst_59 = arith.constant dense<0.000000e+00> : vector<2x128xf32>
    %155 = tpu.matmul %146, %17, %cst_59 {dimension_numbers = #tpu.dot_dimension_numbers<[1], [0], [0], [1], [0, 0, 1, 1], [], []>} : vector<2x32xf32>, vector<32x128xf32>, vector<2x128xf32> -> vector<2x128xf32>
    %156 = vector.broadcast %18 : vector<1x128xf32> to vector<2x128xf32>
    %157 = arith.addf %155, %156 : vector<2x128xf32>
    %158 = vector.extract_strided_slice %157 {offsets = [0, 0], sizes = [2, 32], strides = [1, 1]} : vector<2x128xf32> to vector<2x32xf32>
    %159 = vector.shape_cast %158 : vector<2x32xf32> to vector<2x1x32xf32>
    %160 = vector.broadcast %159 : vector<2x1x32xf32> to vector<2x10x32xf32>
    %161 = arith.addf %160, %7 : vector<2x10x32xf32>
    %162 = math.tanh %161 : vector<2x10x32xf32>
    %163 = vector.shape_cast %20 : vector<1x32xf32> to vector<1x1x32xf32>
    %164 = vector.broadcast %163 : vector<1x1x32xf32> to vector<2x10x32xf32>
    %165 = arith.mulf %162, %164 : vector<2x10x32xf32>
    %cst_60 = arith.constant dense<0.000000e+00> : vector<2x10xf32>
    %166 = vector.multi_reduction <add>, %165, %cst_60 [2] : vector<2x10x32xf32> to vector<2x10xf32>
    %167 = vector.broadcast %21 : vector<1x1xf32> to vector<2x10xf32>
    %168 = arith.addf %166, %167 : vector<2x10xf32>
    %cst_61 = arith.constant dense<0xFF800000> : vector<2xf32>
    %169 = vector.multi_reduction <maximumf>, %168, %cst_61 [1] : vector<2x10xf32> to vector<2xf32>
    %170 = vector.shape_cast %169 : vector<2xf32> to vector<2x1xf32>
    %171 = vector.broadcast %170 : vector<2x1xf32> to vector<2x10xf32>
    %172 = arith.subf %168, %171 : vector<2x10xf32>
    %173 = math.exp %172 : vector<2x10xf32>
    %cst_62 = arith.constant dense<0.000000e+00> : vector<2xf32>
    %174 = vector.multi_reduction <add>, %173, %cst_62 [1] : vector<2x10xf32> to vector<2xf32>
    %175 = vector.shape_cast %174 : vector<2xf32> to vector<2x1xf32>
    %176 = vector.broadcast %175 : vector<2x1xf32> to vector<2x10xf32>
    %177 = arith.divf %173, %176 : vector<2x10xf32>
    %178 = vector.shape_cast %177 : vector<2x10xf32> to vector<2x10x1xf32>
    %179 = vector.broadcast %178 : vector<2x10x1xf32> to vector<2x10x32xf32>
    %180 = arith.mulf %179, %0 : vector<2x10x32xf32>
    %cst_63 = arith.constant dense<0.000000e+00> : vector<2x32xf32>
    %181 = vector.multi_reduction <add>, %180, %cst_63 [1] : vector<2x10x32xf32> to vector<2x32xf32>
    %182 = arith.index_cast %c2_i32 : i32 to index
    %c0_64 = arith.constant 0 : index
    %c0_65 = arith.constant 0 : index
    %183 = vector.load %arg18[%182, %c0_64, %c0_65] : memref<8x2x96xf32, #tpu.memory_space<vmem>>, vector<1x2x96xf32>
    %184 = vector.shape_cast %183 : vector<1x2x96xf32> to vector<2x96xf32>
    %cst_66 = arith.constant dense<0.000000e+00> : vector<2x96xf32>
    %185 = tpu.matmul %181, %19, %cst_66 {dimension_numbers = #tpu.dot_dimension_numbers<[1], [0], [0], [1], [0, 0, 1, 1], [], []>} : vector<2x32xf32>, vector<32x96xf32>, vector<2x96xf32> -> vector<2x96xf32>
    %186 = arith.addf %184, %185 : vector<2x96xf32>
    %187 = vector.extract_strided_slice %186 {offsets = [0, 0], sizes = [2, 32], strides = [1, 1]} : vector<2x96xf32> to vector<2x32xf32>
    %188 = vector.extract_strided_slice %157 {offsets = [0, 32], sizes = [2, 32], strides = [1, 1]} : vector<2x128xf32> to vector<2x32xf32>
    %189 = arith.addf %187, %188 : vector<2x32xf32>
    %190 = arith.negf %189 : vector<2x32xf32>
    %191 = math.exp %190 : vector<2x32xf32>
    %cst_67 = arith.constant 1.000000e+00 : f32
    %192 = vector.broadcast %cst_67 : f32 to vector<2x32xf32>
    %193 = arith.addf %192, %191 : vector<2x32xf32>
    %194 = arith.divf %192, %193 : vector<2x32xf32>
    %195 = vector.extract_strided_slice %186 {offsets = [0, 32], sizes = [2, 32], strides = [1, 1]} : vector<2x96xf32> to vector<2x32xf32>
    %196 = vector.extract_strided_slice %157 {offsets = [0, 64], sizes = [2, 32], strides = [1, 1]} : vector<2x128xf32> to vector<2x32xf32>
    %197 = arith.addf %195, %196 : vector<2x32xf32>
    %198 = arith.negf %197 : vector<2x32xf32>
    %199 = math.exp %198 : vector<2x32xf32>
    %cst_68 = arith.constant 1.000000e+00 : f32
    %200 = vector.broadcast %cst_68 : f32 to vector<2x32xf32>
    %201 = arith.addf %200, %199 : vector<2x32xf32>
    %202 = arith.divf %200, %201 : vector<2x32xf32>
    %203 = vector.extract_strided_slice %186 {offsets = [0, 64], sizes = [2, 32], strides = [1, 1]} : vector<2x96xf32> to vector<2x32xf32>
    %204 = vector.extract_strided_slice %157 {offsets = [0, 96], sizes = [2, 32], strides = [1, 1]} : vector<2x128xf32> to vector<2x32xf32>
    %205 = arith.mulf %194, %204 : vector<2x32xf32>
    %206 = arith.addf %203, %205 : vector<2x32xf32>
    %207 = math.tanh %206 : vector<2x32xf32>
    %cst_69 = arith.constant 1.000000e+00 : f32
    %208 = vector.broadcast %cst_69 : f32 to vector<2x32xf32>
    %209 = arith.subf %208, %202 : vector<2x32xf32>
    %210 = arith.mulf %209, %207 : vector<2x32xf32>
    %211 = arith.mulf %202, %146 : vector<2x32xf32>
    %212 = arith.addf %210, %211 : vector<2x32xf32>
    %213 = arith.index_cast %c2_i32 : i32 to index
    %c0_70 = arith.constant 0 : index
    %c0_71 = arith.constant 0 : index
    %214 = vector.load %arg17[%213, %c0_70, %c0_71] : memref<8x2x32xf32, #tpu.memory_space<vmem>>, vector<1x2x32xf32>
    %215 = vector.shape_cast %214 : vector<1x2x32xf32> to vector<2x32xf32>
    %216 = vector.shape_cast %212 : vector<2x32xf32> to vector<1x2x32xf32>
    tpu.vector_store %arg17[%213, %c0_70, %c0_71], %216 {strides = array<i32>} : memref<8x2x32xf32, #tpu.memory_space<vmem>>, vector<1x2x32xf32>,
    %217 = arith.index_cast %c2_i32 : i32 to index
    %c0_72 = arith.constant 0 : index
    %c0_73 = arith.constant 0 : index
    %218 = vector.load %arg15[%217, %c0_72, %c0_73] : memref<8x2x10xf32, #tpu.memory_space<vmem>>, vector<1x2x10xf32>
    %219 = vector.shape_cast %218 : vector<1x2x10xf32> to vector<2x10xf32>
    %220 = vector.shape_cast %177 : vector<2x10xf32> to vector<1x2x10xf32>
    tpu.vector_store %arg15[%217, %c0_72, %c0_73], %220 {strides = array<i32>} : memref<8x2x10xf32, #tpu.memory_space<vmem>>, vector<1x2x10xf32>,
    %c3_i32 = arith.constant 3 : i32
    %cst_74 = arith.constant dense<0.000000e+00> : vector<2x128xf32>
    %221 = tpu.matmul %212, %17, %cst_74 {dimension_numbers = #tpu.dot_dimension_numbers<[1], [0], [0], [1], [0, 0, 1, 1], [], []>} : vector<2x32xf32>, vector<32x128xf32>, vector<2x128xf32> -> vector<2x128xf32>
    %222 = vector.broadcast %18 : vector<1x128xf32> to vector<2x128xf32>
    %223 = arith.addf %221, %222 : vector<2x128xf32>
    %224 = vector.extract_strided_slice %223 {offsets = [0, 0], sizes = [2, 32], strides = [1, 1]} : vector<2x128xf32> to vector<2x32xf32>
    %225 = vector.shape_cast %224 : vector<2x32xf32> to vector<2x1x32xf32>
    %226 = vector.broadcast %225 : vector<2x1x32xf32> to vector<2x10x32xf32>
    %227 = arith.addf %226, %7 : vector<2x10x32xf32>
    %228 = math.tanh %227 : vector<2x10x32xf32>
    %229 = vector.shape_cast %20 : vector<1x32xf32> to vector<1x1x32xf32>
    %230 = vector.broadcast %229 : vector<1x1x32xf32> to vector<2x10x32xf32>
    %231 = arith.mulf %228, %230 : vector<2x10x32xf32>
    %cst_75 = arith.constant dense<0.000000e+00> : vector<2x10xf32>
    %232 = vector.multi_reduction <add>, %231, %cst_75 [2] : vector<2x10x32xf32> to vector<2x10xf32>
    %233 = vector.broadcast %21 : vector<1x1xf32> to vector<2x10xf32>
    %234 = arith.addf %232, %233 : vector<2x10xf32>
    %cst_76 = arith.constant dense<0xFF800000> : vector<2xf32>
    %235 = vector.multi_reduction <maximumf>, %234, %cst_76 [1] : vector<2x10xf32> to vector<2xf32>
    %236 = vector.shape_cast %235 : vector<2xf32> to vector<2x1xf32>
    %237 = vector.broadcast %236 : vector<2x1xf32> to vector<2x10xf32>
    %238 = arith.subf %234, %237 : vector<2x10xf32>
    %239 = math.exp %238 : vector<2x10xf32>
    %cst_77 = arith.constant dense<0.000000e+00> : vector<2xf32>
    %240 = vector.multi_reduction <add>, %239, %cst_77 [1] : vector<2x10xf32> to vector<2xf32>
    %241 = vector.shape_cast %240 : vector<2xf32> to vector<2x1xf32>
    %242 = vector.broadcast %241 : vector<2x1xf32> to vector<2x10xf32>
    %243 = arith.divf %239, %242 : vector<2x10xf32>
    %244 = vector.shape_cast %243 : vector<2x10xf32> to vector<2x10x1xf32>
    %245 = vector.broadcast %244 : vector<2x10x1xf32> to vector<2x10x32xf32>
    %246 = arith.mulf %245, %0 : vector<2x10x32xf32>
    %cst_78 = arith.constant dense<0.000000e+00> : vector<2x32xf32>
    %247 = vector.multi_reduction <add>, %246, %cst_78 [1] : vector<2x10x32xf32> to vector<2x32xf32>
    %248 = arith.index_cast %c3_i32 : i32 to index
    %c0_79 = arith.constant 0 : index
    %c0_80 = arith.constant 0 : index
    %249 = vector.load %arg18[%248, %c0_79, %c0_80] : memref<8x2x96xf32, #tpu.memory_space<vmem>>, vector<1x2x96xf32>
    %250 = vector.shape_cast %249 : vector<1x2x96xf32> to vector<2x96xf32>
    %cst_81 = arith.constant dense<0.000000e+00> : vector<2x96xf32>
    %251 = tpu.matmul %247, %19, %cst_81 {dimension_numbers = #tpu.dot_dimension_numbers<[1], [0], [0], [1], [0, 0, 1, 1], [], []>} : vector<2x32xf32>, vector<32x96xf32>, vector<2x96xf32> -> vector<2x96xf32>
    %252 = arith.addf %250, %251 : vector<2x96xf32>
    %253 = vector.extract_strided_slice %252 {offsets = [0, 0], sizes = [2, 32], strides = [1, 1]} : vector<2x96xf32> to vector<2x32xf32>
    %254 = vector.extract_strided_slice %223 {offsets = [0, 32], sizes = [2, 32], strides = [1, 1]} : vector<2x128xf32> to vector<2x32xf32>
    %255 = arith.addf %253, %254 : vector<2x32xf32>
    %256 = arith.negf %255 : vector<2x32xf32>
    %257 = math.exp %256 : vector<2x32xf32>
    %cst_82 = arith.constant 1.000000e+00 : f32
    %258 = vector.broadcast %cst_82 : f32 to vector<2x32xf32>
    %259 = arith.addf %258, %257 : vector<2x32xf32>
    %260 = arith.divf %258, %259 : vector<2x32xf32>
    %261 = vector.extract_strided_slice %252 {offsets = [0, 32], sizes = [2, 32], strides = [1, 1]} : vector<2x96xf32> to vector<2x32xf32>
    %262 = vector.extract_strided_slice %223 {offsets = [0, 64], sizes = [2, 32], strides = [1, 1]} : vector<2x128xf32> to vector<2x32xf32>
    %263 = arith.addf %261, %262 : vector<2x32xf32>
    %264 = arith.negf %263 : vector<2x32xf32>
    %265 = math.exp %264 : vector<2x32xf32>
    %cst_83 = arith.constant 1.000000e+00 : f32
    %266 = vector.broadcast %cst_83 : f32 to vector<2x32xf32>
    %267 = arith.addf %266, %265 : vector<2x32xf32>
    %268 = arith.divf %266, %267 : vector<2x32xf32>
    %269 = vector.extract_strided_slice %252 {offsets = [0, 64], sizes = [2, 32], strides = [1, 1]} : vector<2x96xf32> to vector<2x32xf32>
    %270 = vector.extract_strided_slice %223 {offsets = [0, 96], sizes = [2, 32], strides = [1, 1]} : vector<2x128xf32> to vector<2x32xf32>
    %271 = arith.mulf %260, %270 : vector<2x32xf32>
    %272 = arith.addf %269, %271 : vector<2x32xf32>
    %273 = math.tanh %272 : vector<2x32xf32>
    %cst_84 = arith.constant 1.000000e+00 : f32
    %274 = vector.broadcast %cst_84 : f32 to vector<2x32xf32>
    %275 = arith.subf %274, %268 : vector<2x32xf32>
    %276 = arith.mulf %275, %273 : vector<2x32xf32>
    %277 = arith.mulf %268, %212 : vector<2x32xf32>
    %278 = arith.addf %276, %277 : vector<2x32xf32>
    %279 = arith.index_cast %c3_i32 : i32 to index
    %c0_85 = arith.constant 0 : index
    %c0_86 = arith.constant 0 : index
    %280 = vector.load %arg17[%279, %c0_85, %c0_86] : memref<8x2x32xf32, #tpu.memory_space<vmem>>, vector<1x2x32xf32>
    %281 = vector.shape_cast %280 : vector<1x2x32xf32> to vector<2x32xf32>
    %282 = vector.shape_cast %278 : vector<2x32xf32> to vector<1x2x32xf32>
    tpu.vector_store %arg17[%279, %c0_85, %c0_86], %282 {strides = array<i32>} : memref<8x2x32xf32, #tpu.memory_space<vmem>>, vector<1x2x32xf32>,
    %283 = arith.index_cast %c3_i32 : i32 to index
    %c0_87 = arith.constant 0 : index
    %c0_88 = arith.constant 0 : index
    %284 = vector.load %arg15[%283, %c0_87, %c0_88] : memref<8x2x10xf32, #tpu.memory_space<vmem>>, vector<1x2x10xf32>
    %285 = vector.shape_cast %284 : vector<1x2x10xf32> to vector<2x10xf32>
    %286 = vector.shape_cast %243 : vector<2x10xf32> to vector<1x2x10xf32>
    tpu.vector_store %arg15[%283, %c0_87, %c0_88], %286 {strides = array<i32>} : memref<8x2x10xf32, #tpu.memory_space<vmem>>, vector<1x2x10xf32>,
    %c4_i32 = arith.constant 4 : i32
    %cst_89 = arith.constant dense<0.000000e+00> : vector<2x128xf32>
    %287 = tpu.matmul %278, %17, %cst_89 {dimension_numbers = #tpu.dot_dimension_numbers<[1], [0], [0], [1], [0, 0, 1, 1], [], []>} : vector<2x32xf32>, vector<32x128xf32>, vector<2x128xf32> -> vector<2x128xf32>
    %288 = vector.broadcast %18 : vector<1x128xf32> to vector<2x128xf32>
    %289 = arith.addf %287, %288 : vector<2x128xf32>
    %290 = vector.extract_strided_slice %289 {offsets = [0, 0], sizes = [2, 32], strides = [1, 1]} : vector<2x128xf32> to vector<2x32xf32>
    %291 = vector.shape_cast %290 : vector<2x32xf32> to vector<2x1x32xf32>
    %292 = vector.broadcast %291 : vector<2x1x32xf32> to vector<2x10x32xf32>
    %293 = arith.addf %292, %7 : vector<2x10x32xf32>
    %294 = math.tanh %293 : vector<2x10x32xf32>
    %295 = vector.shape_cast %20 : vector<1x32xf32> to vector<1x1x32xf32>
    %296 = vector.broadcast %295 : vector<1x1x32xf32> to vector<2x10x32xf32>
    %297 = arith.mulf %294, %296 : vector<2x10x32xf32>
    %cst_90 = arith.constant dense<0.000000e+00> : vector<2x10xf32>
    %298 = vector.multi_reduction <add>, %297, %cst_90 [2] : vector<2x10x32xf32> to vector<2x10xf32>
    %299 = vector.broadcast %21 : vector<1x1xf32> to vector<2x10xf32>
    %300 = arith.addf %298, %299 : vector<2x10xf32>
    %cst_91 = arith.constant dense<0xFF800000> : vector<2xf32>
    %301 = vector.multi_reduction <maximumf>, %300, %cst_91 [1] : vector<2x10xf32> to vector<2xf32>
    %302 = vector.shape_cast %301 : vector<2xf32> to vector<2x1xf32>
    %303 = vector.broadcast %302 : vector<2x1xf32> to vector<2x10xf32>
    %304 = arith.subf %300, %303 : vector<2x10xf32>
    %305 = math.exp %304 : vector<2x10xf32>
    %cst_92 = arith.constant dense<0.000000e+00> : vector<2xf32>
    %306 = vector.multi_reduction <add>, %305, %cst_92 [1] : vector<2x10xf32> to vector<2xf32>
    %307 = vector.shape_cast %306 : vector<2xf32> to vector<2x1xf32>
    %308 = vector.broadcast %307 : vector<2x1xf32> to vector<2x10xf32>
    %309 = arith.divf %305, %308 : vector<2x10xf32>
    %310 = vector.shape_cast %309 : vector<2x10xf32> to vector<2x10x1xf32>
    %311 = vector.broadcast %310 : vector<2x10x1xf32> to vector<2x10x32xf32>
    %312 = arith.mulf %311, %0 : vector<2x10x32xf32>
    %cst_93 = arith.constant dense<0.000000e+00> : vector<2x32xf32>
    %313 = vector.multi_reduction <add>, %312, %cst_93 [1] : vector<2x10x32xf32> to vector<2x32xf32>
    %314 = arith.index_cast %c4_i32 : i32 to index
    %c0_94 = arith.constant 0 : index
    %c0_95 = arith.constant 0 : index
    %315 = vector.load %arg18[%314, %c0_94, %c0_95] : memref<8x2x96xf32, #tpu.memory_space<vmem>>, vector<1x2x96xf32>
    %316 = vector.shape_cast %315 : vector<1x2x96xf32> to vector<2x96xf32>
    %cst_96 = arith.constant dense<0.000000e+00> : vector<2x96xf32>
    %317 = tpu.matmul %313, %19, %cst_96 {dimension_numbers = #tpu.dot_dimension_numbers<[1], [0], [0], [1], [0, 0, 1, 1], [], []>} : vector<2x32xf32>, vector<32x96xf32>, vector<2x96xf32> -> vector<2x96xf32>
    %318 = arith.addf %316, %317 : vector<2x96xf32>
    %319 = vector.extract_strided_slice %318 {offsets = [0, 0], sizes = [2, 32], strides = [1, 1]} : vector<2x96xf32> to vector<2x32xf32>
    %320 = vector.extract_strided_slice %289 {offsets = [0, 32], sizes = [2, 32], strides = [1, 1]} : vector<2x128xf32> to vector<2x32xf32>
    %321 = arith.addf %319, %320 : vector<2x32xf32>
    %322 = arith.negf %321 : vector<2x32xf32>
    %323 = math.exp %322 : vector<2x32xf32>
    %cst_97 = arith.constant 1.000000e+00 : f32
    %324 = vector.broadcast %cst_97 : f32 to vector<2x32xf32>
    %325 = arith.addf %324, %323 : vector<2x32xf32>
    %326 = arith.divf %324, %325 : vector<2x32xf32>
    %327 = vector.extract_strided_slice %318 {offsets = [0, 32], sizes = [2, 32], strides = [1, 1]} : vector<2x96xf32> to vector<2x32xf32>
    %328 = vector.extract_strided_slice %289 {offsets = [0, 64], sizes = [2, 32], strides = [1, 1]} : vector<2x128xf32> to vector<2x32xf32>
    %329 = arith.addf %327, %328 : vector<2x32xf32>
    %330 = arith.negf %329 : vector<2x32xf32>
    %331 = math.exp %330 : vector<2x32xf32>
    %cst_98 = arith.constant 1.000000e+00 : f32
    %332 = vector.broadcast %cst_98 : f32 to vector<2x32xf32>
    %333 = arith.addf %332, %331 : vector<2x32xf32>
    %334 = arith.divf %332, %333 : vector<2x32xf32>
    %335 = vector.extract_strided_slice %318 {offsets = [0, 64], sizes = [2, 32], strides = [1, 1]} : vector<2x96xf32> to vector<2x32xf32>
    %336 = vector.extract_strided_slice %289 {offsets = [0, 96], sizes = [2, 32], strides = [1, 1]} : vector<2x128xf32> to vector<2x32xf32>
    %337 = arith.mulf %326, %336 : vector<2x32xf32>
    %338 = arith.addf %335, %337 : vector<2x32xf32>
    %339 = math.tanh %338 : vector<2x32xf32>
    %cst_99 = arith.constant 1.000000e+00 : f32
    %340 = vector.broadcast %cst_99 : f32 to vector<2x32xf32>
    %341 = arith.subf %340, %334 : vector<2x32xf32>
    %342 = arith.mulf %341, %339 : vector<2x32xf32>
    %343 = arith.mulf %334, %278 : vector<2x32xf32>
    %344 = arith.addf %342, %343 : vector<2x32xf32>
    %345 = arith.index_cast %c4_i32 : i32 to index
    %c0_100 = arith.constant 0 : index
    %c0_101 = arith.constant 0 : index
    %346 = vector.load %arg17[%345, %c0_100, %c0_101] : memref<8x2x32xf32, #tpu.memory_space<vmem>>, vector<1x2x32xf32>
    %347 = vector.shape_cast %346 : vector<1x2x32xf32> to vector<2x32xf32>
    %348 = vector.shape_cast %344 : vector<2x32xf32> to vector<1x2x32xf32>
    tpu.vector_store %arg17[%345, %c0_100, %c0_101], %348 {strides = array<i32>} : memref<8x2x32xf32, #tpu.memory_space<vmem>>, vector<1x2x32xf32>,
    %349 = arith.index_cast %c4_i32 : i32 to index
    %c0_102 = arith.constant 0 : index
    %c0_103 = arith.constant 0 : index
    %350 = vector.load %arg15[%349, %c0_102, %c0_103] : memref<8x2x10xf32, #tpu.memory_space<vmem>>, vector<1x2x10xf32>
    %351 = vector.shape_cast %350 : vector<1x2x10xf32> to vector<2x10xf32>
    %352 = vector.shape_cast %309 : vector<2x10xf32> to vector<1x2x10xf32>
    tpu.vector_store %arg15[%349, %c0_102, %c0_103], %352 {strides = array<i32>} : memref<8x2x10xf32, #tpu.memory_space<vmem>>, vector<1x2x10xf32>,
    %c5_i32 = arith.constant 5 : i32
    %cst_104 = arith.constant dense<0.000000e+00> : vector<2x128xf32>
    %353 = tpu.matmul %344, %17, %cst_104 {dimension_numbers = #tpu.dot_dimension_numbers<[1], [0], [0], [1], [0, 0, 1, 1], [], []>} : vector<2x32xf32>, vector<32x128xf32>, vector<2x128xf32> -> vector<2x128xf32>
    %354 = vector.broadcast %18 : vector<1x128xf32> to vector<2x128xf32>
    %355 = arith.addf %353, %354 : vector<2x128xf32>
    %356 = vector.extract_strided_slice %355 {offsets = [0, 0], sizes = [2, 32], strides = [1, 1]} : vector<2x128xf32> to vector<2x32xf32>
    %357 = vector.shape_cast %356 : vector<2x32xf32> to vector<2x1x32xf32>
    %358 = vector.broadcast %357 : vector<2x1x32xf32> to vector<2x10x32xf32>
    %359 = arith.addf %358, %7 : vector<2x10x32xf32>
    %360 = math.tanh %359 : vector<2x10x32xf32>
    %361 = vector.shape_cast %20 : vector<1x32xf32> to vector<1x1x32xf32>
    %362 = vector.broadcast %361 : vector<1x1x32xf32> to vector<2x10x32xf32>
    %363 = arith.mulf %360, %362 : vector<2x10x32xf32>
    %cst_105 = arith.constant dense<0.000000e+00> : vector<2x10xf32>
    %364 = vector.multi_reduction <add>, %363, %cst_105 [2] : vector<2x10x32xf32> to vector<2x10xf32>
    %365 = vector.broadcast %21 : vector<1x1xf32> to vector<2x10xf32>
    %366 = arith.addf %364, %365 : vector<2x10xf32>
    %cst_106 = arith.constant dense<0xFF800000> : vector<2xf32>
    %367 = vector.multi_reduction <maximumf>, %366, %cst_106 [1] : vector<2x10xf32> to vector<2xf32>
    %368 = vector.shape_cast %367 : vector<2xf32> to vector<2x1xf32>
    %369 = vector.broadcast %368 : vector<2x1xf32> to vector<2x10xf32>
    %370 = arith.subf %366, %369 : vector<2x10xf32>
    %371 = math.exp %370 : vector<2x10xf32>
    %cst_107 = arith.constant dense<0.000000e+00> : vector<2xf32>
    %372 = vector.multi_reduction <add>, %371, %cst_107 [1] : vector<2x10xf32> to vector<2xf32>
    %373 = vector.shape_cast %372 : vector<2xf32> to vector<2x1xf32>
    %374 = vector.broadcast %373 : vector<2x1xf32> to vector<2x10xf32>
    %375 = arith.divf %371, %374 : vector<2x10xf32>
    %376 = vector.shape_cast %375 : vector<2x10xf32> to vector<2x10x1xf32>
    %377 = vector.broadcast %376 : vector<2x10x1xf32> to vector<2x10x32xf32>
    %378 = arith.mulf %377, %0 : vector<2x10x32xf32>
    %cst_108 = arith.constant dense<0.000000e+00> : vector<2x32xf32>
    %379 = vector.multi_reduction <add>, %378, %cst_108 [1] : vector<2x10x32xf32> to vector<2x32xf32>
    %380 = arith.index_cast %c5_i32 : i32 to index
    %c0_109 = arith.constant 0 : index
    %c0_110 = arith.constant 0 : index
    %381 = vector.load %arg18[%380, %c0_109, %c0_110] : memref<8x2x96xf32, #tpu.memory_space<vmem>>, vector<1x2x96xf32>
    %382 = vector.shape_cast %381 : vector<1x2x96xf32> to vector<2x96xf32>
    %cst_111 = arith.constant dense<0.000000e+00> : vector<2x96xf32>
    %383 = tpu.matmul %379, %19, %cst_111 {dimension_numbers = #tpu.dot_dimension_numbers<[1], [0], [0], [1], [0, 0, 1, 1], [], []>} : vector<2x32xf32>, vector<32x96xf32>, vector<2x96xf32> -> vector<2x96xf32>
    %384 = arith.addf %382, %383 : vector<2x96xf32>
    %385 = vector.extract_strided_slice %384 {offsets = [0, 0], sizes = [2, 32], strides = [1, 1]} : vector<2x96xf32> to vector<2x32xf32>
    %386 = vector.extract_strided_slice %355 {offsets = [0, 32], sizes = [2, 32], strides = [1, 1]} : vector<2x128xf32> to vector<2x32xf32>
    %387 = arith.addf %385, %386 : vector<2x32xf32>
    %388 = arith.negf %387 : vector<2x32xf32>
    %389 = math.exp %388 : vector<2x32xf32>
    %cst_112 = arith.constant 1.000000e+00 : f32
    %390 = vector.broadcast %cst_112 : f32 to vector<2x32xf32>
    %391 = arith.addf %390, %389 : vector<2x32xf32>
    %392 = arith.divf %390, %391 : vector<2x32xf32>
    %393 = vector.extract_strided_slice %384 {offsets = [0, 32], sizes = [2, 32], strides = [1, 1]} : vector<2x96xf32> to vector<2x32xf32>
    %394 = vector.extract_strided_slice %355 {offsets = [0, 64], sizes = [2, 32], strides = [1, 1]} : vector<2x128xf32> to vector<2x32xf32>
    %395 = arith.addf %393, %394 : vector<2x32xf32>
    %396 = arith.negf %395 : vector<2x32xf32>
    %397 = math.exp %396 : vector<2x32xf32>
    %cst_113 = arith.constant 1.000000e+00 : f32
    %398 = vector.broadcast %cst_113 : f32 to vector<2x32xf32>
    %399 = arith.addf %398, %397 : vector<2x32xf32>
    %400 = arith.divf %398, %399 : vector<2x32xf32>
    %401 = vector.extract_strided_slice %384 {offsets = [0, 64], sizes = [2, 32], strides = [1, 1]} : vector<2x96xf32> to vector<2x32xf32>
    %402 = vector.extract_strided_slice %355 {offsets = [0, 96], sizes = [2, 32], strides = [1, 1]} : vector<2x128xf32> to vector<2x32xf32>
    %403 = arith.mulf %392, %402 : vector<2x32xf32>
    %404 = arith.addf %401, %403 : vector<2x32xf32>
    %405 = math.tanh %404 : vector<2x32xf32>
    %cst_114 = arith.constant 1.000000e+00 : f32
    %406 = vector.broadcast %cst_114 : f32 to vector<2x32xf32>
    %407 = arith.subf %406, %400 : vector<2x32xf32>
    %408 = arith.mulf %407, %405 : vector<2x32xf32>
    %409 = arith.mulf %400, %344 : vector<2x32xf32>
    %410 = arith.addf %408, %409 : vector<2x32xf32>
    %411 = arith.index_cast %c5_i32 : i32 to index
    %c0_115 = arith.constant 0 : index
    %c0_116 = arith.constant 0 : index
    %412 = vector.load %arg17[%411, %c0_115, %c0_116] : memref<8x2x32xf32, #tpu.memory_space<vmem>>, vector<1x2x32xf32>
    %413 = vector.shape_cast %412 : vector<1x2x32xf32> to vector<2x32xf32>
    %414 = vector.shape_cast %410 : vector<2x32xf32> to vector<1x2x32xf32>
    tpu.vector_store %arg17[%411, %c0_115, %c0_116], %414 {strides = array<i32>} : memref<8x2x32xf32, #tpu.memory_space<vmem>>, vector<1x2x32xf32>,
    %415 = arith.index_cast %c5_i32 : i32 to index
    %c0_117 = arith.constant 0 : index
    %c0_118 = arith.constant 0 : index
    %416 = vector.load %arg15[%415, %c0_117, %c0_118] : memref<8x2x10xf32, #tpu.memory_space<vmem>>, vector<1x2x10xf32>
    %417 = vector.shape_cast %416 : vector<1x2x10xf32> to vector<2x10xf32>
    %418 = vector.shape_cast %375 : vector<2x10xf32> to vector<1x2x10xf32>
    tpu.vector_store %arg15[%415, %c0_117, %c0_118], %418 {strides = array<i32>} : memref<8x2x10xf32, #tpu.memory_space<vmem>>, vector<1x2x10xf32>,
    %c6_i32 = arith.constant 6 : i32
    %cst_119 = arith.constant dense<0.000000e+00> : vector<2x128xf32>
    %419 = tpu.matmul %410, %17, %cst_119 {dimension_numbers = #tpu.dot_dimension_numbers<[1], [0], [0], [1], [0, 0, 1, 1], [], []>} : vector<2x32xf32>, vector<32x128xf32>, vector<2x128xf32> -> vector<2x128xf32>
    %420 = vector.broadcast %18 : vector<1x128xf32> to vector<2x128xf32>
    %421 = arith.addf %419, %420 : vector<2x128xf32>
    %422 = vector.extract_strided_slice %421 {offsets = [0, 0], sizes = [2, 32], strides = [1, 1]} : vector<2x128xf32> to vector<2x32xf32>
    %423 = vector.shape_cast %422 : vector<2x32xf32> to vector<2x1x32xf32>
    %424 = vector.broadcast %423 : vector<2x1x32xf32> to vector<2x10x32xf32>
    %425 = arith.addf %424, %7 : vector<2x10x32xf32>
    %426 = math.tanh %425 : vector<2x10x32xf32>
    %427 = vector.shape_cast %20 : vector<1x32xf32> to vector<1x1x32xf32>
    %428 = vector.broadcast %427 : vector<1x1x32xf32> to vector<2x10x32xf32>
    %429 = arith.mulf %426, %428 : vector<2x10x32xf32>
    %cst_120 = arith.constant dense<0.000000e+00> : vector<2x10xf32>
    %430 = vector.multi_reduction <add>, %429, %cst_120 [2] : vector<2x10x32xf32> to vector<2x10xf32>
    %431 = vector.broadcast %21 : vector<1x1xf32> to vector<2x10xf32>
    %432 = arith.addf %430, %431 : vector<2x10xf32>
    %cst_121 = arith.constant dense<0xFF800000> : vector<2xf32>
    %433 = vector.multi_reduction <maximumf>, %432, %cst_121 [1] : vector<2x10xf32> to vector<2xf32>
    %434 = vector.shape_cast %433 : vector<2xf32> to vector<2x1xf32>
    %435 = vector.broadcast %434 : vector<2x1xf32> to vector<2x10xf32>
    %436 = arith.subf %432, %435 : vector<2x10xf32>
    %437 = math.exp %436 : vector<2x10xf32>
    %cst_122 = arith.constant dense<0.000000e+00> : vector<2xf32>
    %438 = vector.multi_reduction <add>, %437, %cst_122 [1] : vector<2x10xf32> to vector<2xf32>
    %439 = vector.shape_cast %438 : vector<2xf32> to vector<2x1xf32>
    %440 = vector.broadcast %439 : vector<2x1xf32> to vector<2x10xf32>
    %441 = arith.divf %437, %440 : vector<2x10xf32>
    %442 = vector.shape_cast %441 : vector<2x10xf32> to vector<2x10x1xf32>
    %443 = vector.broadcast %442 : vector<2x10x1xf32> to vector<2x10x32xf32>
    %444 = arith.mulf %443, %0 : vector<2x10x32xf32>
    %cst_123 = arith.constant dense<0.000000e+00> : vector<2x32xf32>
    %445 = vector.multi_reduction <add>, %444, %cst_123 [1] : vector<2x10x32xf32> to vector<2x32xf32>
    %446 = arith.index_cast %c6_i32 : i32 to index
    %c0_124 = arith.constant 0 : index
    %c0_125 = arith.constant 0 : index
    %447 = vector.load %arg18[%446, %c0_124, %c0_125] : memref<8x2x96xf32, #tpu.memory_space<vmem>>, vector<1x2x96xf32>
    %448 = vector.shape_cast %447 : vector<1x2x96xf32> to vector<2x96xf32>
    %cst_126 = arith.constant dense<0.000000e+00> : vector<2x96xf32>
    %449 = tpu.matmul %445, %19, %cst_126 {dimension_numbers = #tpu.dot_dimension_numbers<[1], [0], [0], [1], [0, 0, 1, 1], [], []>} : vector<2x32xf32>, vector<32x96xf32>, vector<2x96xf32> -> vector<2x96xf32>
    %450 = arith.addf %448, %449 : vector<2x96xf32>
    %451 = vector.extract_strided_slice %450 {offsets = [0, 0], sizes = [2, 32], strides = [1, 1]} : vector<2x96xf32> to vector<2x32xf32>
    %452 = vector.extract_strided_slice %421 {offsets = [0, 32], sizes = [2, 32], strides = [1, 1]} : vector<2x128xf32> to vector<2x32xf32>
    %453 = arith.addf %451, %452 : vector<2x32xf32>
    %454 = arith.negf %453 : vector<2x32xf32>
    %455 = math.exp %454 : vector<2x32xf32>
    %cst_127 = arith.constant 1.000000e+00 : f32
    %456 = vector.broadcast %cst_127 : f32 to vector<2x32xf32>
    %457 = arith.addf %456, %455 : vector<2x32xf32>
    %458 = arith.divf %456, %457 : vector<2x32xf32>
    %459 = vector.extract_strided_slice %450 {offsets = [0, 32], sizes = [2, 32], strides = [1, 1]} : vector<2x96xf32> to vector<2x32xf32>
    %460 = vector.extract_strided_slice %421 {offsets = [0, 64], sizes = [2, 32], strides = [1, 1]} : vector<2x128xf32> to vector<2x32xf32>
    %461 = arith.addf %459, %460 : vector<2x32xf32>
    %462 = arith.negf %461 : vector<2x32xf32>
    %463 = math.exp %462 : vector<2x32xf32>
    %cst_128 = arith.constant 1.000000e+00 : f32
    %464 = vector.broadcast %cst_128 : f32 to vector<2x32xf32>
    %465 = arith.addf %464, %463 : vector<2x32xf32>
    %466 = arith.divf %464, %465 : vector<2x32xf32>
    %467 = vector.extract_strided_slice %450 {offsets = [0, 64], sizes = [2, 32], strides = [1, 1]} : vector<2x96xf32> to vector<2x32xf32>
    %468 = vector.extract_strided_slice %421 {offsets = [0, 96], sizes = [2, 32], strides = [1, 1]} : vector<2x128xf32> to vector<2x32xf32>
    %469 = arith.mulf %458, %468 : vector<2x32xf32>
    %470 = arith.addf %467, %469 : vector<2x32xf32>
    %471 = math.tanh %470 : vector<2x32xf32>
    %cst_129 = arith.constant 1.000000e+00 : f32
    %472 = vector.broadcast %cst_129 : f32 to vector<2x32xf32>
    %473 = arith.subf %472, %466 : vector<2x32xf32>
    %474 = arith.mulf %473, %471 : vector<2x32xf32>
    %475 = arith.mulf %466, %410 : vector<2x32xf32>
    %476 = arith.addf %474, %475 : vector<2x32xf32>
    %477 = arith.index_cast %c6_i32 : i32 to index
    %c0_130 = arith.constant 0 : index
    %c0_131 = arith.constant 0 : index
    %478 = vector.load %arg17[%477, %c0_130, %c0_131] : memref<8x2x32xf32, #tpu.memory_space<vmem>>, vector<1x2x32xf32>
    %479 = vector.shape_cast %478 : vector<1x2x32xf32> to vector<2x32xf32>
    %480 = vector.shape_cast %476 : vector<2x32xf32> to vector<1x2x32xf32>
    tpu.vector_store %arg17[%477, %c0_130, %c0_131], %480 {strides = array<i32>} : memref<8x2x32xf32, #tpu.memory_space<vmem>>, vector<1x2x32xf32>,
    %481 = arith.index_cast %c6_i32 : i32 to index
    %c0_132 = arith.constant 0 : index
    %c0_133 = arith.constant 0 : index
    %482 = vector.load %arg15[%481, %c0_132, %c0_133] : memref<8x2x10xf32, #tpu.memory_space<vmem>>, vector<1x2x10xf32>
    %483 = vector.shape_cast %482 : vector<1x2x10xf32> to vector<2x10xf32>
    %484 = vector.shape_cast %441 : vector<2x10xf32> to vector<1x2x10xf32>
    tpu.vector_store %arg15[%481, %c0_132, %c0_133], %484 {strides = array<i32>} : memref<8x2x10xf32, #tpu.memory_space<vmem>>, vector<1x2x10xf32>,
    %c7_i32 = arith.constant 7 : i32
    %cst_134 = arith.constant dense<0.000000e+00> : vector<2x128xf32>
    %485 = tpu.matmul %476, %17, %cst_134 {dimension_numbers = #tpu.dot_dimension_numbers<[1], [0], [0], [1], [0, 0, 1, 1], [], []>} : vector<2x32xf32>, vector<32x128xf32>, vector<2x128xf32> -> vector<2x128xf32>
    %486 = vector.broadcast %18 : vector<1x128xf32> to vector<2x128xf32>
    %487 = arith.addf %485, %486 : vector<2x128xf32>
    %488 = vector.extract_strided_slice %487 {offsets = [0, 0], sizes = [2, 32], strides = [1, 1]} : vector<2x128xf32> to vector<2x32xf32>
    %489 = vector.shape_cast %488 : vector<2x32xf32> to vector<2x1x32xf32>
    %490 = vector.broadcast %489 : vector<2x1x32xf32> to vector<2x10x32xf32>
    %491 = arith.addf %490, %7 : vector<2x10x32xf32>
    %492 = math.tanh %491 : vector<2x10x32xf32>
    %493 = vector.shape_cast %20 : vector<1x32xf32> to vector<1x1x32xf32>
    %494 = vector.broadcast %493 : vector<1x1x32xf32> to vector<2x10x32xf32>
    %495 = arith.mulf %492, %494 : vector<2x10x32xf32>
    %cst_135 = arith.constant dense<0.000000e+00> : vector<2x10xf32>
    %496 = vector.multi_reduction <add>, %495, %cst_135 [2] : vector<2x10x32xf32> to vector<2x10xf32>
    %497 = vector.broadcast %21 : vector<1x1xf32> to vector<2x10xf32>
    %498 = arith.addf %496, %497 : vector<2x10xf32>
    %cst_136 = arith.constant dense<0xFF800000> : vector<2xf32>
    %499 = vector.multi_reduction <maximumf>, %498, %cst_136 [1] : vector<2x10xf32> to vector<2xf32>
    %500 = vector.shape_cast %499 : vector<2xf32> to vector<2x1xf32>
    %501 = vector.broadcast %500 : vector<2x1xf32> to vector<2x10xf32>
    %502 = arith.subf %498, %501 : vector<2x10xf32>
    %503 = math.exp %502 : vector<2x10xf32>
    %cst_137 = arith.constant dense<0.000000e+00> : vector<2xf32>
    %504 = vector.multi_reduction <add>, %503, %cst_137 [1] : vector<2x10xf32> to vector<2xf32>
    %505 = vector.shape_cast %504 : vector<2xf32> to vector<2x1xf32>
    %506 = vector.broadcast %505 : vector<2x1xf32> to vector<2x10xf32>
    %507 = arith.divf %503, %506 : vector<2x10xf32>
    %508 = vector.shape_cast %507 : vector<2x10xf32> to vector<2x10x1xf32>
    %509 = vector.broadcast %508 : vector<2x10x1xf32> to vector<2x10x32xf32>
    %510 = arith.mulf %509, %0 : vector<2x10x32xf32>
    %cst_138 = arith.constant dense<0.000000e+00> : vector<2x32xf32>
    %511 = vector.multi_reduction <add>, %510, %cst_138 [1] : vector<2x10x32xf32> to vector<2x32xf32>
    %512 = arith.index_cast %c7_i32 : i32 to index
    %c0_139 = arith.constant 0 : index
    %c0_140 = arith.constant 0 : index
    %513 = vector.load %arg18[%512, %c0_139, %c0_140] : memref<8x2x96xf32, #tpu.memory_space<vmem>>, vector<1x2x96xf32>
    %514 = vector.shape_cast %513 : vector<1x2x96xf32> to vector<2x96xf32>
    %cst_141 = arith.constant dense<0.000000e+00> : vector<2x96xf32>
    %515 = tpu.matmul %511, %19, %cst_141 {dimension_numbers = #tpu.dot_dimension_numbers<[1], [0], [0], [1], [0, 0, 1, 1], [], []>} : vector<2x32xf32>, vector<32x96xf32>, vector<2x96xf32> -> vector<2x96xf32>
    %516 = arith.addf %514, %515 : vector<2x96xf32>
    %517 = vector.extract_strided_slice %516 {offsets = [0, 0], sizes = [2, 32], strides = [1, 1]} : vector<2x96xf32> to vector<2x32xf32>
    %518 = vector.extract_strided_slice %487 {offsets = [0, 32], sizes = [2, 32], strides = [1, 1]} : vector<2x128xf32> to vector<2x32xf32>
    %519 = arith.addf %517, %518 : vector<2x32xf32>
    %520 = arith.negf %519 : vector<2x32xf32>
    %521 = math.exp %520 : vector<2x32xf32>
    %cst_142 = arith.constant 1.000000e+00 : f32
    %522 = vector.broadcast %cst_142 : f32 to vector<2x32xf32>
    %523 = arith.addf %522, %521 : vector<2x32xf32>
    %524 = arith.divf %522, %523 : vector<2x32xf32>
    %525 = vector.extract_strided_slice %516 {offsets = [0, 32], sizes = [2, 32], strides = [1, 1]} : vector<2x96xf32> to vector<2x32xf32>
    %526 = vector.extract_strided_slice %487 {offsets = [0, 64], sizes = [2, 32], strides = [1, 1]} : vector<2x128xf32> to vector<2x32xf32>
    %527 = arith.addf %525, %526 : vector<2x32xf32>
    %528 = arith.negf %527 : vector<2x32xf32>
    %529 = math.exp %528 : vector<2x32xf32>
    %cst_143 = arith.constant 1.000000e+00 : f32
    %530 = vector.broadcast %cst_143 : f32 to vector<2x32xf32>
    %531 = arith.addf %530, %529 : vector<2x32xf32>
    %532 = arith.divf %530, %531 : vector<2x32xf32>
    %533 = vector.extract_strided_slice %516 {offsets = [0, 64], sizes = [2, 32], strides = [1, 1]} : vector<2x96xf32> to vector<2x32xf32>
    %534 = vector.extract_strided_slice %487 {offsets = [0, 96], sizes = [2, 32], strides = [1, 1]} : vector<2x128xf32> to vector<2x32xf32>
    %535 = arith.mulf %524, %534 : vector<2x32xf32>
    %536 = arith.addf %533, %535 : vector<2x32xf32>
    %537 = math.tanh %536 : vector<2x32xf32>
    %cst_144 = arith.constant 1.000000e+00 : f32
    %538 = vector.broadcast %cst_144 : f32 to vector<2x32xf32>
    %539 = arith.subf %538, %532 : vector<2x32xf32>
    %540 = arith.mulf %539, %537 : vector<2x32xf32>
    %541 = arith.mulf %532, %476 : vector<2x32xf32>
    %542 = arith.addf %540, %541 : vector<2x32xf32>
    %543 = arith.index_cast %c7_i32 : i32 to index
    %c0_145 = arith.constant 0 : index
    %c0_146 = arith.constant 0 : index
    %544 = vector.load %arg17[%543, %c0_145, %c0_146] : memref<8x2x32xf32, #tpu.memory_space<vmem>>, vector<1x2x32xf32>
    %545 = vector.shape_cast %544 : vector<1x2x32xf32> to vector<2x32xf32>
    %546 = vector.shape_cast %542 : vector<2x32xf32> to vector<1x2x32xf32>
    tpu.vector_store %arg17[%543, %c0_145, %c0_146], %546 {strides = array<i32>} : memref<8x2x32xf32, #tpu.memory_space<vmem>>, vector<1x2x32xf32>,
    %547 = arith.index_cast %c7_i32 : i32 to index
    %c0_147 = arith.constant 0 : index
    %c0_148 = arith.constant 0 : index
    %548 = vector.load %arg15[%547, %c0_147, %c0_148] : memref<8x2x10xf32, #tpu.memory_space<vmem>>, vector<1x2x10xf32>
    %549 = vector.shape_cast %548 : vector<1x2x10xf32> to vector<2x10xf32>
    %550 = vector.shape_cast %507 : vector<2x10xf32> to vector<1x2x10xf32>
    tpu.vector_store %arg15[%547, %c0_147, %c0_148], %550 {strides = array<i32>} : memref<8x2x10xf32, #tpu.memory_space<vmem>>, vector<1x2x10xf32>,
    %c8_i32 = arith.constant 8 : i32
    %c0_149 = arith.constant 0 : index
    %c0_150 = arith.constant 0 : index
    %551 = vector.load %arg16[%c0_149, %c0_150] : memref<2x32xf32, #tpu.memory_space<vmem>>, vector<2x32xf32>
    tpu.vector_store %arg16[%c0_149, %c0_150], %542 {strides = array<i32>} : memref<2x32xf32, #tpu.memory_space<vmem>>, vector<2x32xf32>,
    %c0_151 = arith.constant 0 : index
    %c0_152 = arith.constant 0 : index
    %c0_153 = arith.constant 0 : index
    %552 = vector.load %arg17[%c0_151, %c0_152, %c0_153] : memref<8x2x32xf32, #tpu.memory_space<vmem>>, vector<8x2x32xf32>
    %553 = vector.shape_cast %552 : vector<8x2x32xf32> to vector<16x32xf32>
    %c0_154 = arith.constant 0 : index
    %c0_155 = arith.constant 0 : index
    %554 = vector.load %arg12[%c0_154, %c0_155] : memref<32x24xf32, #tpu.memory_space<vmem>>, vector<32x24xf32>
    %cst_156 = arith.constant dense<0.000000e+00> : vector<16x24xf32>
    %555 = tpu.matmul %553, %554, %cst_156 {dimension_numbers = #tpu.dot_dimension_numbers<[1], [0], [0], [1], [0, 0, 1, 1], [], []>} : vector<16x32xf32>, vector<32x24xf32>, vector<16x24xf32> -> vector<16x24xf32>
    %c0_157 = arith.constant 0 : index
    %c0_158 = arith.constant 0 : index
    %556 = vector.load %arg13[%c0_157, %c0_158] : memref<1x24xf32, #tpu.memory_space<vmem>>, vector<1x24xf32>
    %557 = vector.broadcast %556 : vector<1x24xf32> to vector<16x24xf32>
    %558 = arith.addf %555, %557 : vector<16x24xf32>
    %559 = vector.shape_cast %558 : vector<16x24xf32> to vector<8x2x24xf32>
    %c0_159 = arith.constant 0 : index
    %c0_160 = arith.constant 0 : index
    %c0_161 = arith.constant 0 : index
    %560 = vector.load %arg14[%c0_159, %c0_160, %c0_161] : memref<8x2x24xf32, #tpu.memory_space<vmem>>, vector<8x2x24xf32>
    tpu.vector_store %arg14[%c0_159, %c0_160, %c0_161], %559 {strides = array<i32>} : memref<8x2x24xf32, #tpu.memory_space<vmem>>, vector<8x2x24xf32>,
    return
  }
}

</mosaic_0001>

<llo_original>
// kernel: tpu_custom_call.1
$region0: #{tpu_custom_call.1}
  #allocation0 [shape = 'u32[]', space=smem, size = 0x4, offset = 0x4, fixed_abs, tag = 'smem constant byte address 0x4 - core index']
  #allocation1 [shape = 'u32[144,128]{1,0:T(1,128)}', space=vmem, size = 0x12000, scoped, tag = 'internal scratch']
  #allocation2 [shape = 'f32[8,2,32]{2,1,0:T(2,128)}', space=vmem, size = 0x2000, scoped, tag = 'scratch operand']
  #allocation3 [shape = 'f32[8,2,96]{2,1,0:T(2,128)}', space=vmem, size = 0x2000, scoped, tag = 'scratch operand']
  #allocation4 [shape = 'f32[1,1]{1,0:T(1,128)S(1)}', space=vmem, size = 0x200, scoped, tag = 'scoped memory for tpu_custom_call.1']
  %s0 = inlined_call_operand.vmem [shape: f32[2,10,32], index: 0, kind: input, shape index: {}]
  %s1 = inlined_call_operand.hbm [shape: f32[2,32], index: 1, kind: input, shape index: {}]
  %s2 = inlined_call_operand.hbm [shape: f32[8,2,32], index: 2, kind: input, shape index: {}]
  %s3 = inlined_call_operand.vmem [shape: f32[32,32], index: 3, kind: input, shape index: {}]
  %s4 = inlined_call_operand.vmem [shape: f32[1,32], index: 4, kind: input, shape index: {}]
  %s5 = inlined_call_operand.hbm [shape: f32[1,32], index: 5, kind: input, shape index: {}]
  %s6 = inlined_call_operand.<no memory space> [shape: f32[1,1], index: 6, kind: input, shape index: {}]
  %s7 = inlined_call_operand.vmem [shape: f32[32,128], index: 7, kind: input, shape index: {}]
  %s8 = inlined_call_operand.hbm [shape: f32[1,128], index: 8, kind: input, shape index: {}]
  %s9 = inlined_call_operand.vmem [shape: f32[32,96], index: 9, kind: input, shape index: {}]
  %s10 = inlined_call_operand.vmem [shape: f32[32,96], index: 10, kind: input, shape index: {}]
  %s11 = inlined_call_operand.hbm [shape: f32[1,96], index: 11, kind: input, shape index: {}]
  %s12 = inlined_call_operand.vmem [shape: f32[32,24], index: 12, kind: input, shape index: {}]
  %s13 = inlined_call_operand.vmem [shape: f32[1,24], index: 13, kind: input, shape index: {}]
  %s14 = inlined_call_operand.hbm [shape: f32[8,2,24], index: 14, kind: output, shape index: {0}]
  %s15 = inlined_call_operand.hbm [shape: f32[8,2,10], index: 15, kind: output, shape index: {1}]
  %s16 = inlined_call_operand.hbm [shape: f32[2,32], index: 16, kind: output, shape index: {2}]
  %17 = xla_tuple %s14, %s15, %s16
  %s18 = sld [smem:[#allocation0]]
  $region102: #{tpu_custom_call.1} parent=0
    _
  %s20 = ssub.s32 1, %s18
  %s21 = scalar_select 0, %s20, %s18
  %v22 = vstv %s6
  %23 = vst [vmem:[#allocation4] sm:$0x1] %v22
  $region1: #{tpu_custom_call.1} parent=0
    #allocation5 [shape = 'u8[1024]{0}', space=vmem, size = 0x400, scoped, tag = 'input window, operand 1, single buffered']
    #allocation6 [shape = 's32[1]{0}', space=sflag, size = 0x4, scoped, tag = 'scoped memory for tpu_custom_call.1']
    #allocation7 [shape = 's32[1]{0}', space=sflag, size = 0x4, scoped, tag = 'scoped memory for tpu_custom_call.1']
    #allocation8 [shape = 'u8[8192]{0}', space=vmem, size = 0x2000, scoped, tag = 'input window, operand 2, single buffered']
    #allocation9 [shape = 's32[1]{0}', space=sflag, size = 0x4, scoped, tag = 'scoped memory for tpu_custom_call.1']
    #allocation10 [shape = 'u8[512]{0}', space=vmem, size = 0x400, scoped, tag = 'input window, operand 5, single buffered']
    #allocation11 [shape = 'u8[512]{0}', space=vmem, size = 0x400, scoped, tag = 'input window, operand 8, single buffered']
    #allocation12 [shape = 's32[1]{0}', space=sflag, size = 0x4, scoped, tag = 'scoped memory for tpu_custom_call.1']
    #allocation13 [shape = 'u8[512]{0}', space=vmem, size = 0x400, scoped, tag = 'input window, operand 11, single buffered']
    #allocation14 [shape = 'u8[8192]{0}', space=vmem, size = 0x2000, scoped, tag = 'output window, operand 0, single buffered']
    #allocation15 [shape = 'u8[8192]{0}', space=vmem, size = 0x2000, scoped, tag = 'output window, operand 1, single buffered']
    #allocation16 [shape = 's32[1]{0}', space=sflag, size = 0x4, scoped, tag = 'scoped memory for tpu_custom_call.1']
    #allocation17 [shape = 'u8[1024]{0}', space=vmem, size = 0x400, scoped, tag = 'output window, operand 2, single buffered']
    %24 = vsyncpa [#allocation6], 0
    %25 = vsyncpa [#allocation9], 0
    %26 = vsyncpa [#allocation12], 0
    %27 = vsyncpa [#allocation7], 0
    %28 = vsyncpa [#allocation16], 0
    // Predicated region
    $region2: #{tpu_custom_call.1} parent=1 // pred_check
      _
    $region3: #{tpu_custom_call.1} parent=1 // pred_check_branch
      %30 = sbr.rel (0) target = $region5
    $region4: #{tpu_custom_call.1} parent=1 // pred_region
      _
    $region5: #{tpu_custom_call.1} parent=1 // pred_fallthru
      _
    // Predicated region
    $region6: #{tpu_custom_call.1} parent=1 // pred_check
      _
    $region7: #{tpu_custom_call.1} parent=1 // pred_check_branch
      %32 = sbr.rel (0) target = $region9
    $region8: #{tpu_custom_call.1} parent=1 // pred_region
      %s34 = ssub.s32 32, 32
      %35 = vsyncadd [#allocation6], %s34
      %s37 = sshll.u32 [#allocation5], 4
      %s38 = int_to_ptr.vmem [resolvable:$true] %s37
      %40 = dma.hbm_to_vmem [thread:$0]  %s1, 32, %s38, [#allocation6]
    $region9: #{tpu_custom_call.1} parent=1 // pred_fallthru
      _
    // Predicated region
    $region10: #{tpu_custom_call.1} parent=1 // pred_check
      _
    $region11: #{tpu_custom_call.1} parent=1 // pred_check_branch
      %42 = sbr.rel (0) target = $region13
    $region12: #{tpu_custom_call.1} parent=1 // pred_region
      %s44 = ssub.s32 256, 256
      %45 = vsyncadd [#allocation9], %s44
      %s46 = sshll.u32 [#allocation8], 4
      %s47 = int_to_ptr.vmem [resolvable:$true] %s46
      %52 = dma.hbm_to_vmem [thread:$0]  %s2, 256, %s47, [#allocation9], 32, 32, 2
    $region13: #{tpu_custom_call.1} parent=1 // pred_fallthru
      _
    // Predicated region
    $region14: #{tpu_custom_call.1} parent=1 // pred_check
      _
    $region15: #{tpu_custom_call.1} parent=1 // pred_check_branch
      %54 = sbr.rel (0) target = $region17
    $region16: #{tpu_custom_call.1} parent=1 // pred_region
      _
    $region17: #{tpu_custom_call.1} parent=1 // pred_fallthru
      _
    // Predicated region
    $region18: #{tpu_custom_call.1} parent=1 // pred_check
      _
    $region19: #{tpu_custom_call.1} parent=1 // pred_check_branch
      %56 = sbr.rel (0) target = $region21
    $region20: #{tpu_custom_call.1} parent=1 // pred_region
      _
    $region21: #{tpu_custom_call.1} parent=1 // pred_fallthru
      _
    // Predicated region
    $region22: #{tpu_custom_call.1} parent=1 // pred_check
      _
    $region23: #{tpu_custom_call.1} parent=1 // pred_check_branch
      %58 = sbr.rel (0) target = $region25
    $region24: #{tpu_custom_call.1} parent=1 // pred_region
      %s60 = ssub.s32 16, 16
      %61 = vsyncadd [#allocation9], %s60
      %s63 = sshll.u32 [#allocation10], 4
      %s64 = int_to_ptr.vmem [resolvable:$true] %s63
      %66 = dma.hbm_to_vmem [thread:$0]  %s5, 16, %s64, [#allocation9]
    $region25: #{tpu_custom_call.1} parent=1 // pred_fallthru
      _
    // Predicated region
    $region26: #{tpu_custom_call.1} parent=1 // pred_check
      _
    $region27: #{tpu_custom_call.1} parent=1 // pred_check_branch
      %68 = sbr.rel (0) target = $region29
    $region28: #{tpu_custom_call.1} parent=1 // pred_region
      _
    $region29: #{tpu_custom_call.1} parent=1 // pred_fallthru
      _
    // Predicated region
    $region30: #{tpu_custom_call.1} parent=1 // pred_check
      _
    $region31: #{tpu_custom_call.1} parent=1 // pred_check_branch
      %70 = sbr.rel (0) target = $region33
    $region32: #{tpu_custom_call.1} parent=1 // pred_region
      _
    $region33: #{tpu_custom_call.1} parent=1 // pred_fallthru
      _
    // Predicated region
    $region34: #{tpu_custom_call.1} parent=1 // pred_check
      _
    $region35: #{tpu_custom_call.1} parent=1 // pred_check_branch
      %72 = sbr.rel (0) target = $region37
    $region36: #{tpu_custom_call.1} parent=1 // pred_region
      %s74 = ssub.s32 16, 16
      %75 = vsyncadd [#allocation12], %s74
      %s77 = sshll.u32 [#allocation11], 4
      %s78 = int_to_ptr.vmem [resolvable:$true] %s77
      %80 = dma.hbm_to_vmem [thread:$0]  %s8, 16, %s78, [#allocation12]
    $region37: #{tpu_custom_call.1} parent=1 // pred_fallthru
      _
    // Predicated region
    $region38: #{tpu_custom_call.1} parent=1 // pred_check
      _
    $region39: #{tpu_custom_call.1} parent=1 // pred_check_branch
      %82 = sbr.rel (0) target = $region41
    $region40: #{tpu_custom_call.1} parent=1 // pred_region
      _
    $region41: #{tpu_custom_call.1} parent=1 // pred_fallthru
      _
    // Predicated region
    $region42: #{tpu_custom_call.1} parent=1 // pred_check
      _
    $region43: #{tpu_custom_call.1} parent=1 // pred_check_branch
      %84 = sbr.rel (0) target = $region45
    $region44: #{tpu_custom_call.1} parent=1 // pred_region
      _
    $region45: #{tpu_custom_call.1} parent=1 // pred_fallthru
      _
    // Predicated region
    $region46: #{tpu_custom_call.1} parent=1 // pred_check
      _
    $region47: #{tpu_custom_call.1} parent=1 // pred_check_branch
      %86 = sbr.rel (0) target = $region49
    $region48: #{tpu_custom_call.1} parent=1 // pred_region
      %s88 = ssub.s32 16, 16
      %89 = vsyncadd [#allocation12], %s88
      %s91 = sshll.u32 [#allocation13], 4
      %s92 = int_to_ptr.vmem [resolvable:$true] %s91
      %94 = dma.hbm_to_vmem [thread:$0]  %s11, 16, %s92, [#allocation12]
    $region49: #{tpu_custom_call.1} parent=1 // pred_fallthru
      _
    // Predicated region
    $region50: #{tpu_custom_call.1} parent=1 // pred_check
      _
    $region51: #{tpu_custom_call.1} parent=1 // pred_check_branch
      %96 = sbr.rel (0) target = $region53
    $region52: #{tpu_custom_call.1} parent=1 // pred_region
      _
    $region53: #{tpu_custom_call.1} parent=1 // pred_fallthru
      _
    // Predicated region
    $region54: #{tpu_custom_call.1} parent=1 // pred_check
      _
    $region55: #{tpu_custom_call.1} parent=1 // pred_check_branch
      %98 = sbr.rel (0) target = $region57
    $region56: #{tpu_custom_call.1} parent=1 // pred_region
      _
    $region57: #{tpu_custom_call.1} parent=1 // pred_fallthru
      _
    // Predicated region
    $region58: #{tpu_custom_call.1} parent=1 // pred_check
      _
    $region59: #{tpu_custom_call.1} parent=1 // pred_check_branch
      %100 = sbr.rel (0) target = $region61
    $region60: #{tpu_custom_call.1} parent=1 // pred_region
      %101 = dma.done [#allocation6], 32
    $region61: #{tpu_custom_call.1} parent=1 // pred_fallthru
      _
    // Predicated region
    $region62: #{tpu_custom_call.1} parent=1 // pred_check
      _
    $region63: #{tpu_custom_call.1} parent=1 // pred_check_branch
      %103 = sbr.rel (0) target = $region65
    $region64: #{tpu_custom_call.1} parent=1 // pred_region
      %104 = dma.done [#allocation9], 256
    $region65: #{tpu_custom_call.1} parent=1 // pred_fallthru
      _
    // Predicated region
    $region66: #{tpu_custom_call.1} parent=1 // pred_check
      _
    $region67: #{tpu_custom_call.1} parent=1 // pred_check_branch
      %106 = sbr.rel (0) target = $region69
    $region68: #{tpu_custom_call.1} parent=1 // pred_region
      %107 = dma.done [#allocation9], 16
    $region69: #{tpu_custom_call.1} parent=1 // pred_fallthru
      _
    // Predicated region
    $region70: #{tpu_custom_call.1} parent=1 // pred_check
      _
    $region71: #{tpu_custom_call.1} parent=1 // pred_check_branch
      %109 = sbr.rel (0) target = $region73
    $region72: #{tpu_custom_call.1} parent=1 // pred_region
      %110 = dma.done [#allocation12], 16
    $region73: #{tpu_custom_call.1} parent=1 // pred_fallthru
      _
    // Predicated region
    $region74: #{tpu_custom_call.1} parent=1 // pred_check
      _
    $region75: #{tpu_custom_call.1} parent=1 // pred_check_branch
      %112 = sbr.rel (0) target = $region77
    $region76: #{tpu_custom_call.1} parent=1 // pred_region
      %113 = dma.done [#allocation12], 16
    $region77: #{tpu_custom_call.1} parent=1 // pred_fallthru
      _
    %v114 = vld [vmem:[%s0] sm:$0xff]
    %v115 = vld [vmem:[%s0 + $0x8] sm:$0x3]
    %v116 = vld [vmem:[%s0 + $0x10] sm:$0xff]
    %v117 = vld [vmem:[%s0 + $0x18] sm:$0x3]
    %v122 = vcombine.high %v114, %v114
    %v124 = vunpack.c.l.s4 1983009808
    %v125 = vunpack.c.0.s8 %v124
    %v126 = vlaneseq
    %v127 = vshrl.u32 %v126, 7
    %v128 = vsub.s32 %v125, %v127
    %v129 = vrot.slane %v114, %v128
    %v131 = vunpack.c.l.s4 1983009808
    %v132 = vunpack.c.0.s8 %v131
    %v133 = vlaneseq
    %v134 = vshrl.u32 %v133, 7
    %v135 = vsub.s32 %v132, %v134
    %v136 = vrot.slane %v122, %v135
    %v137 = vcombine.high %v129, %v129
    %v138 = vcombine.high %v136, %v136
    %v140 = vunpack.c.l.s4 1983009808
    %v141 = vunpack.c.0.s8 %v140
    %v142 = vlaneseq
    %v143 = vshrl.u32 %v142, 7
    %v144 = vsub.s32 %v141, %v143
    %v145 = vrot.slane %v115, %v144
    %v146 = vcombine.high %v116, %v116
    %v148 = vunpack.c.l.s4 1983009808
    %v149 = vunpack.c.0.s8 %v148
    %v150 = vlaneseq
    %v151 = vshrl.u32 %v150, 7
    %v152 = vsub.s32 %v149, %v151
    %v153 = vrot.slane %v116, %v152
    %v155 = vunpack.c.l.s4 1983009808
    %v156 = vunpack.c.0.s8 %v155
    %v157 = vlaneseq
    %v158 = vshrl.u32 %v157, 7
    %v159 = vsub.s32 %v156, %v158
    %v160 = vrot.slane %v146, %v159
    %v161 = vcombine.high %v153, %v153
    %v162 = vcombine.high %v160, %v160
    %v164 = vunpack.c.l.s4 1983009808
    %v165 = vunpack.c.0.s8 %v164
    %v166 = vlaneseq
    %v167 = vshrl.u32 %v166, 7
    %v168 = vsub.s32 %v165, %v167
    %v169 = vrot.slane %v117, %v168
    %v170 = vld [vmem:[%s3] sm:$0xff]
    %v171 = vld [vmem:[%s3 + $0x8] sm:$0xff]
    %v172 = vld [vmem:[%s3 + $0x10] sm:$0xff]
    %v173 = vld [vmem:[%s3 + $0x18] sm:$0xff]
    %v174 = vld [vmem:[%s4] sm:$0x1]
    %v176 = vlaneseq
    %v177 = vshrl.u32 %v176, 7
    %v178 = vsub.s32 0, %v177
    %v179 = vrot.slane %v174, %v178
    %v181 = vcombine.low %v129, %v137
    %v182 = vcombine.low %v136, %v138
    %v184 = vunpack.c.l.s4 1983009808
    %v185 = vunpack.c.0.s8 %v184
    %v186 = vlaneseq
    %v187 = vshrl.u32 %v186, 7
    %v188 = vsub.s32 %v185, %v187
    %v189 = vrot.slane %v181, %v188
    %v191 = vunpack.c.l.s4 1983009808
    %v192 = vunpack.c.0.s8 %v191
    %v193 = vlaneseq
    %v194 = vshrl.u32 %v193, 7
    %v195 = vsub.s32 %v192, %v194
    %v196 = vrot.slane %v182, %v195
    %v197 = vcombine.low %v189, %v196
    %v198 = vcombine.low %v145, %v153
    %v199 = vcombine.low %v161, %v160
    %v201 = vunpack.c.l.s4 1983009808
    %v202 = vunpack.c.0.s8 %v201
    %v203 = vlaneseq
    %v204 = vshrl.u32 %v203, 7
    %v205 = vsub.s32 %v202, %v204
    %v206 = vrot.slane %v198, %v205
    %v208 = vunpack.c.l.s4 1983009808
    %v209 = vunpack.c.0.s8 %v208
    %v210 = vlaneseq
    %v211 = vshrl.u32 %v210, 7
    %v212 = vsub.s32 %v209, %v211
    %v213 = vrot.slane %v199, %v212
    %v214 = vcombine.low %v206, %v213
    %v215 = vcombine.low %v162, %v169
    %v217 = vunpack.c.l.s4 1983009808
    %v218 = vunpack.c.0.s8 %v217
    %v219 = vlaneseq
    %v220 = vshrl.u32 %v219, 7
    %v221 = vsub.s32 %v218, %v220
    %v222 = vrot.slane %v215, %v221
    %vm223 = vcmask 261120
    %v224 = vsel %vm223, %v197, 0
    %v226 = vsel %vm223, %v214, 0
    %v228 = vsel %vm223, %v222, 0
    %230 = vmatprep.subr.mxu0 0.0
    %231 = vmatpush1.msra.mxu0 %v170
    %232 = vmatprep.subr.mxu0 0.0
    %233 = vmatpush1.msra.mxu0 %v171
    %234 = vmatprep.subr.mxu0 0.0
    %235 = vmatpush1.msra.mxu0 %v172
    %236 = vmatprep.subr.mxu0 0.0
    %237 = vmatpush1.msra.mxu0 %v173
    %238 = vmatprep.subr.mxu0 0.0
    %239 = vmatpush1.msra.mxu0 0.0
    %240 = vmatprep.subr.mxu0 0.0
    %241 = vmatpush1.msra.mxu0 0.0
    %242 = vmatprep.subr.mxu0 0.0
    %243 = vmatpush1.msra.mxu0 0.0
    %244 = vmatprep.subr.mxu0 0.0
    %245 = vmatpush1.msra.mxu0 0.0
    %246 = vmatprep.subr.mxu0 0.0
    %247 = vmatpush1.msra.mxu0 0.0
    %248 = vmatprep.subr.mxu0 0.0
    %249 = vmatpush1.msra.mxu0 0.0
    %250 = vmatprep.subr.mxu0 0.0
    %251 = vmatpush1.msra.mxu0 0.0
    %252 = vmatprep.subr.mxu0 0.0
    %253 = vmatpush1.msra.mxu0 0.0
    %254 = vmatprep.subr.mxu0 0.0
    %255 = vmatpush1.msra.mxu0 0.0
    %256 = vmatprep.subr.mxu0 0.0
    %257 = vmatpush1.msra.mxu0 0.0
    %258 = vmatprep.subr.mxu0 0.0
    %259 = vmatpush1.msra.mxu0 0.0
    %260 = vmatprep.subr.mxu0 0.0
    %261 = vmatpush1.msra.mxu0 0.0
    %262 = vmatprep.subr.mxu0 0.0
    %263 = vmatpush1.msra.mxu0 0.0
    %264 = vmatprep.subr.mxu0 0.0
    %265 = vmatpush1.msra.mxu0 0.0
    %266 = vmatprep.subr.mxu0 0.0
    %267 = vmatpush1.msra.mxu0 0.0
    %268 = vmatprep.subr.mxu0 0.0
    %269 = vmatpush1.msra.mxu0 0.0
    %270 = vmatprep.subr.mxu0 0.0
    %271 = vmatpush1.msra.mxu0 0.0
    %272 = vmatprep.subr.mxu0 0.0
    %273 = vmatpush1.msra.mxu0 0.0
    %274 = vmatprep.subr.mxu0 0.0
    %275 = vmatpush1.msra.mxu0 0.0
    %276 = vmatprep.subr.mxu0 0.0
    %277 = vmatpush1.msra.mxu0 0.0
    %278 = vmatprep.subr.mxu0 0.0
    %279 = vmatpush1.msra.mxu0 0.0
    %280 = vmatprep.subr.mxu0 0.0
    %281 = vmatpush1.msra.mxu0 0.0
    %282 = vmatprep.subr.mxu0 0.0
    %283 = vmatpush1.msra.mxu0 0.0
    %284 = vmatprep.subr.mxu0 0.0
    %285 = vmatpush1.msra.mxu0 0.0
    %286 = vmatprep.subr.mxu0 0.0
    %287 = vmatpush1.msra.mxu0 0.0
    %288 = vmatprep.subr.mxu0 0.0
    %289 = vmatpush1.msra.mxu0 0.0
    %290 = vmatprep.subr.mxu0 0.0
    %291 = vmatpush1.msra.mxu0 0.0
    %292 = vmatprep.subr.mxu0 0.0
    %293 = vmatpush1.msra.mxu0 0.0
    %294 = vmatprep.mubr.f32.mxu0 0.0
    %295 = vmatmul.mubr.f32.gmra.mrb[0].mxu0 %v224
    %v296 = vpop.f32.mrb[0].mxu0
    %v297 = vadd.f32 %v179, %v296
    %v298 = vpop.f32.mrb[0].mxu0
    %299 = vmatprep.mubr.f32.mxu0 0.0
    %300 = vmatmul.mubr.f32.gmra.mrb[0].mxu0 %v226
    %v301 = vpop.f32.mrb[0].mxu0
    %v302 = vadd.f32 %v179, %v301
    %v303 = vpop.f32.mrb[0].mxu0
    %304 = vmatprep.mubr.f32.mxu0 0.0
    %305 = vmatmul.mubr.f32.gmra.mrb[0].mxu0 %v228
    %v306 = vpop.f32.mrb[0].mxu0
    %v307 = vadd.f32 %v179, %v306
    %v308 = vpop.f32.mrb[0].mxu0
    %309 = vdwg.mxu0
    %v313 = vcombine.high %v297, %v297
    %v315 = vunpack.c.l.s4 1983009808
    %v316 = vunpack.c.0.s8 %v315
    %v317 = vlaneseq
    %v318 = vshrl.u32 %v317, 7
    %v319 = vsub.s32 %v316, %v318
    %v320 = vrot.slane %v297, %v319
    %v322 = vunpack.c.l.s4 1983009808
    %v323 = vunpack.c.0.s8 %v322
    %v324 = vlaneseq
    %v325 = vshrl.u32 %v324, 7
    %v326 = vsub.s32 %v323, %v325
    %v327 = vrot.slane %v313, %v326
    %v328 = vcombine.high %v320, %v320
    %v329 = vcombine.high %v327, %v327
    %v330 = vcombine.high %v302, %v302
    %v332 = vunpack.c.l.s4 1983009808
    %v333 = vunpack.c.0.s8 %v332
    %v334 = vlaneseq
    %v335 = vshrl.u32 %v334, 7
    %v336 = vsub.s32 %v333, %v335
    %v337 = vrot.slane %v302, %v336
    %v339 = vunpack.c.l.s4 1983009808
    %v340 = vunpack.c.0.s8 %v339
    %v341 = vlaneseq
    %v342 = vshrl.u32 %v341, 7
    %v343 = vsub.s32 %v340, %v342
    %v344 = vrot.slane %v330, %v343
    %v345 = vcombine.high %v337, %v337
    %v346 = vcombine.high %v344, %v344
    %v348 = vunpack.c.l.s4 1983009808
    %v349 = vunpack.c.0.s8 %v348
    %v350 = vlaneseq
    %v351 = vshrl.u32 %v350, 7
    %v352 = vsub.s32 %v349, %v351
    %v353 = vrot.slane %v307, %v352
    %v354 = vcombine.high %v353, %v353
    %v355 = vld [vmem:[#allocation8] sm:$0x3]
    %v356 = vld [vmem:[#allocation8 + $0x2] sm:$0x3]
    %v357 = vld [vmem:[#allocation8 + $0x4] sm:$0x3]
    %v358 = vld [vmem:[#allocation8 + $0x6] sm:$0x3]
    %v359 = vld [vmem:[#allocation8 + $0x8] sm:$0x3]
    %v360 = vld [vmem:[#allocation8 + $0xa] sm:$0x3]
    %v361 = vld [vmem:[#allocation8 + $0xc] sm:$0x3]
    %v362 = vld [vmem:[#allocation8 + $0xe] sm:$0x3]
    %v363 = vld [vmem:[%s9] sm:$0xff]
    %v364 = vld [vmem:[%s9 + $0x8] sm:$0xff]
    %v365 = vld [vmem:[%s9 + $0x10] sm:$0xff]
    %v366 = vld [vmem:[%s9 + $0x18] sm:$0xff]
    %v367 = vld [vmem:[#allocation13] sm:$0x1]
    %v369 = vlaneseq
    %v370 = vshrl.u32 %v369, 7
    %v371 = vsub.s32 0, %v370
    %v372 = vrot.slane %v367, %v371
    %v382 = vcombine.low %v355, %v356
    %v383 = vcombine.low %v357, %v358
    %v385 = vunpack.c.l.s4 1983009808
    %v386 = vunpack.c.0.s8 %v385
    %v387 = vlaneseq
    %v388 = vshrl.u32 %v387, 7
    %v389 = vsub.s32 %v386, %v388
    %v390 = vrot.slane %v382, %v389
    %v392 = vunpack.c.l.s4 1983009808
    %v393 = vunpack.c.0.s8 %v392
    %v394 = vlaneseq
    %v395 = vshrl.u32 %v394, 7
    %v396 = vsub.s32 %v393, %v395
    %v397 = vrot.slane %v383, %v396
    %v398 = vcombine.low %v390, %v397
    %v399 = vcombine.low %v359, %v360
    %v400 = vcombine.low %v361, %v362
    %v402 = vunpack.c.l.s4 1983009808
    %v403 = vunpack.c.0.s8 %v402
    %v404 = vlaneseq
    %v405 = vshrl.u32 %v404, 7
    %v406 = vsub.s32 %v403, %v405
    %v407 = vrot.slane %v399, %v406
    %v409 = vunpack.c.l.s4 1983009808
    %v410 = vunpack.c.0.s8 %v409
    %v411 = vlaneseq
    %v412 = vshrl.u32 %v411, 7
    %v413 = vsub.s32 %v410, %v412
    %v414 = vrot.slane %v400, %v413
    %v415 = vcombine.low %v407, %v414
    %v416 = vsel %vm223, %v398, 0
    %v418 = vsel %vm223, %v415, 0
    %420 = vmatprep.subr.mxu0 0.0
    %421 = vmatpush1.msra.mxu0 %v363
    %422 = vmatprep.subr.mxu0 0.0
    %423 = vmatpush1.msra.mxu0 %v364
    %424 = vmatprep.subr.mxu0 0.0
    %425 = vmatpush1.msra.mxu0 %v365
    %426 = vmatprep.subr.mxu0 0.0
    %427 = vmatpush1.msra.mxu0 %v366
    %428 = vmatprep.subr.mxu0 0.0
    %429 = vmatpush1.msra.mxu0 0.0
    %430 = vmatprep.subr.mxu0 0.0
    %431 = vmatpush1.msra.mxu0 0.0
    %432 = vmatprep.subr.mxu0 0.0
    %433 = vmatpush1.msra.mxu0 0.0
    %434 = vmatprep.subr.mxu0 0.0
    %435 = vmatpush1.msra.mxu0 0.0
    %436 = vmatprep.subr.mxu0 0.0
    %437 = vmatpush1.msra.mxu0 0.0
    %438 = vmatprep.subr.mxu0 0.0
    %439 = vmatpush1.msra.mxu0 0.0
    %440 = vmatprep.subr.mxu0 0.0
    %441 = vmatpush1.msra.mxu0 0.0
    %442 = vmatprep.subr.mxu0 0.0
    %443 = vmatpush1.msra.mxu0 0.0
    %444 = vmatprep.subr.mxu0 0.0
    %445 = vmatpush1.msra.mxu0 0.0
    %446 = vmatprep.subr.mxu0 0.0
    %447 = vmatpush1.msra.mxu0 0.0
    %448 = vmatprep.subr.mxu0 0.0
    %449 = vmatpush1.msra.mxu0 0.0
    %450 = vmatprep.subr.mxu0 0.0
    %451 = vmatpush1.msra.mxu0 0.0
    %452 = vmatprep.subr.mxu0 0.0
    %453 = vmatpush1.msra.mxu0 0.0
    %454 = vmatprep.subr.mxu0 0.0
    %455 = vmatpush1.msra.mxu0 0.0
    %456 = vmatprep.subr.mxu0 0.0
    %457 = vmatpush1.msra.mxu0 0.0
    %458 = vmatprep.subr.mxu0 0.0
    %459 = vmatpush1.msra.mxu0 0.0
    %460 = vmatprep.subr.mxu0 0.0
    %461 = vmatpush1.msra.mxu0 0.0
    %462 = vmatprep.subr.mxu0 0.0
    %463 = vmatpush1.msra.mxu0 0.0
    %464 = vmatprep.subr.mxu0 0.0
    %465 = vmatpush1.msra.mxu0 0.0
    %466 = vmatprep.subr.mxu0 0.0
    %467 = vmatpush1.msra.mxu0 0.0
    %468 = vmatprep.subr.mxu0 0.0
    %469 = vmatpush1.msra.mxu0 0.0
    %470 = vmatprep.subr.mxu0 0.0
    %471 = vmatpush1.msra.mxu0 0.0
    %472 = vmatprep.subr.mxu0 0.0
    %473 = vmatpush1.msra.mxu0 0.0
    %474 = vmatprep.subr.mxu0 0.0
    %475 = vmatpush1.msra.mxu0 0.0
    %476 = vmatprep.subr.mxu0 0.0
    %477 = vmatpush1.msra.mxu0 0.0
    %478 = vmatprep.subr.mxu0 0.0
    %479 = vmatpush1.msra.mxu0 0.0
    %480 = vmatprep.subr.mxu0 0.0
    %481 = vmatpush1.msra.mxu0 0.0
    %482 = vmatprep.subr.mxu0 0.0
    %483 = vmatpush1.msra.mxu0 0.0
    %484 = vmatprep.mubr.f32.mxu0 0.0
    %485 = vmatmul.mubr.f32.gmra.mrb[0].mxu0 %v416
    %v486 = vpop.f32.mrb[0].mxu0
    %v487 = vadd.f32 %v372, %v486
    %v488 = vpop.f32.mrb[0].mxu0
    %489 = vmatprep.mubr.f32.mxu0 0.0
    %490 = vmatmul.mubr.f32.gmra.mrb[0].mxu0 %v418
    %v491 = vpop.f32.mrb[0].mxu0
    %v492 = vadd.f32 %v372, %v491
    %v493 = vpop.f32.mrb[0].mxu0
    %494 = vdwg.mxu0
    %v497 = vcombine.high %v487, %v487
    %v499 = vunpack.c.l.s4 1983009808
    %v500 = vunpack.c.0.s8 %v499
    %v501 = vlaneseq
    %v502 = vshrl.u32 %v501, 7
    %v503 = vsub.s32 %v500, %v502
    %v504 = vrot.slane %v487, %v503
    %v506 = vunpack.c.l.s4 1983009808
    %v507 = vunpack.c.0.s8 %v506
    %v508 = vlaneseq
    %v509 = vshrl.u32 %v508, 7
    %v510 = vsub.s32 %v507, %v509
    %v511 = vrot.slane %v497, %v510
    %v512 = vcombine.high %v504, %v504
    %v513 = vcombine.high %v511, %v511
    %v514 = vcombine.high %v492, %v492
    %v516 = vunpack.c.l.s4 1983009808
    %v517 = vunpack.c.0.s8 %v516
    %v518 = vlaneseq
    %v519 = vshrl.u32 %v518, 7
    %v520 = vsub.s32 %v517, %v519
    %v521 = vrot.slane %v492, %v520
    %v523 = vunpack.c.l.s4 1983009808
    %v524 = vunpack.c.0.s8 %v523
    %v525 = vlaneseq
    %v526 = vshrl.u32 %v525, 7
    %v527 = vsub.s32 %v524, %v526
    %v528 = vrot.slane %v514, %v527
    %v529 = vcombine.high %v521, %v521
    %v530 = vcombine.high %v528, %v528
    %vm539 = vcmask 779264
    %540 = vst.msk [vmem:[#allocation3] sm:$0x3] %vm539, %v504
    %541 = vst.msk [vmem:[#allocation3 + $0x2] sm:$0x3] %vm539, %v512
    %542 = vst.msk [vmem:[#allocation3 + $0x4] sm:$0x3] %vm539, %v511
    %543 = vst.msk [vmem:[#allocation3 + $0x6] sm:$0x3] %vm539, %v513
    %544 = vst.msk [vmem:[#allocation3 + $0x8] sm:$0x3] %vm539, %v521
    %545 = vst.msk [vmem:[#allocation3 + $0xa] sm:$0x3] %vm539, %v529
    %546 = vst.msk [vmem:[#allocation3 + $0xc] sm:$0x3] %vm539, %v528
    %547 = vst.msk [vmem:[#allocation3 + $0xe] sm:$0x3] %vm539, %v530
    %v548 = vld [vmem:[%s7] sm:$0xff]
    %v549 = vld [vmem:[%s7 + $0x8] sm:$0xff]
    %v550 = vld [vmem:[%s7 + $0x10] sm:$0xff]
    %v551 = vld [vmem:[%s7 + $0x18] sm:$0xff]
    %v552 = vld [vmem:[#allocation11] sm:$0x1]
    %v553 = vld [vmem:[%s10] sm:$0xff]
    %v554 = vld [vmem:[%s10 + $0x8] sm:$0xff]
    %v555 = vld [vmem:[%s10 + $0x10] sm:$0xff]
    %v556 = vld [vmem:[%s10 + $0x18] sm:$0xff]
    %v557 = vld [vmem:[#allocation10] sm:$0x1]
    %v558 = vld [vmem:[#allocation4] sm:$0x1]
    %v559 = vld [vmem:[#allocation5] sm:$0x3]
    %v561 = vlaneseq
    %v562 = vshrl.u32 %v561, 7
    %v563 = vsub.s32 0, %v562
    %v564 = vrot.slane %v552, %v563
    %v567 = vsel %vm223, %v559, 0
    %569 = vmatprep.subr.mxu0 0.0
    %570 = vmatpush1.msra.mxu0 %v548
    %571 = vmatprep.subr.mxu0 0.0
    %572 = vmatpush1.msra.mxu0 %v549
    %573 = vmatprep.subr.mxu0 0.0
    %574 = vmatpush1.msra.mxu0 %v550
    %575 = vmatprep.subr.mxu0 0.0
    %576 = vmatpush1.msra.mxu0 %v551
    %577 = vmatprep.subr.mxu0 0.0
    %578 = vmatpush1.msra.mxu0 0.0
    %579 = vmatprep.subr.mxu0 0.0
    %580 = vmatpush1.msra.mxu0 0.0
    %581 = vmatprep.subr.mxu0 0.0
    %582 = vmatpush1.msra.mxu0 0.0
    %583 = vmatprep.subr.mxu0 0.0
    %584 = vmatpush1.msra.mxu0 0.0
    %585 = vmatprep.subr.mxu0 0.0
    %586 = vmatpush1.msra.mxu0 0.0
    %587 = vmatprep.subr.mxu0 0.0
    %588 = vmatpush1.msra.mxu0 0.0
    %589 = vmatprep.subr.mxu0 0.0
    %590 = vmatpush1.msra.mxu0 0.0
    %591 = vmatprep.subr.mxu0 0.0
    %592 = vmatpush1.msra.mxu0 0.0
    %593 = vmatprep.subr.mxu0 0.0
    %594 = vmatpush1.msra.mxu0 0.0
    %595 = vmatprep.subr.mxu0 0.0
    %596 = vmatpush1.msra.mxu0 0.0
    %597 = vmatprep.subr.mxu0 0.0
    %598 = vmatpush1.msra.mxu0 0.0
    %599 = vmatprep.subr.mxu0 0.0
    %600 = vmatpush1.msra.mxu0 0.0
    %601 = vmatprep.subr.mxu0 0.0
    %602 = vmatpush1.msra.mxu0 0.0
    %603 = vmatprep.subr.mxu0 0.0
    %604 = vmatpush1.msra.mxu0 0.0
    %605 = vmatprep.subr.mxu0 0.0
    %606 = vmatpush1.msra.mxu0 0.0
    %607 = vmatprep.subr.mxu0 0.0
    %608 = vmatpush1.msra.mxu0 0.0
    %609 = vmatprep.subr.mxu0 0.0
    %610 = vmatpush1.msra.mxu0 0.0
    %611 = vmatprep.subr.mxu0 0.0
    %612 = vmatpush1.msra.mxu0 0.0
    %613 = vmatprep.subr.mxu0 0.0
    %614 = vmatpush1.msra.mxu0 0.0
    %615 = vmatprep.subr.mxu0 0.0
    %616 = vmatpush1.msra.mxu0 0.0
    %617 = vmatprep.subr.mxu0 0.0
    %618 = vmatpush1.msra.mxu0 0.0
    %619 = vmatprep.subr.mxu0 0.0
    %620 = vmatpush1.msra.mxu0 0.0
    %621 = vmatprep.subr.mxu0 0.0
    %622 = vmatpush1.msra.mxu0 0.0
    %623 = vmatprep.subr.mxu0 0.0
    %624 = vmatpush1.msra.mxu0 0.0
    %625 = vmatprep.subr.mxu0 0.0
    %626 = vmatpush1.msra.mxu0 0.0
    %627 = vmatprep.subr.mxu0 0.0
    %628 = vmatpush1.msra.mxu0 0.0
    %629 = vmatprep.subr.mxu0 0.0
    %630 = vmatpush1.msra.mxu0 0.0
    %631 = vmatprep.subr.mxu0 0.0
    %632 = vmatpush1.msra.mxu0 0.0
    %633 = vmatprep.mubr.f32.mxu0 0.0
    %634 = vmatmul.mubr.f32.gmra.mrb[0].mxu0 %v567
    %v635 = vpop.f32.mrb[0].mxu0
    %v636 = vadd.f32 %v564, %v635
    %v637 = vpop.f32.mrb[0].mxu0
    %638 = vdwg.mxu0
    %v641 = vunpack.c.l.s4 1966171168
    %v642 = vunpack.c.0.s8 %v641
    %v643 = vlaneseq
    %v644 = vshrl.u32 %v643, 7
    %v645 = vsub.s32 %v642, %v644
    %v646 = vrot.slane %v636, %v645
    %v647 = vcombine.high %v646, %v646
    %v649 = vunpack.c.l.s4 1966171168
    %v650 = vunpack.c.0.s8 %v649
    %v651 = vlaneseq
    %v652 = vshrl.u32 %v651, 7
    %v653 = vsub.s32 %v650, %v652
    %v654 = vrot.slane %v646, %v653
    %v656 = vunpack.c.l.s4 1966171168
    %v657 = vunpack.c.0.s8 %v656
    %v658 = vlaneseq
    %v659 = vshrl.u32 %v658, 7
    %v660 = vsub.s32 %v657, %v659
    %v661 = vrot.slane %v647, %v660
    %v662 = vlaneseq
    %v663 = vshrl.u32 %v662, 7
    %v664 = vsub.s32 0, %v663
    %v665 = vrot.slane %v654, %v664
    %v666 = vlaneseq
    %v667 = vshrl.u32 %v666, 7
    %v668 = vsub.s32 0, %v667
    %v669 = vrot.slane %v661, %v668
    %v672 = vcombine.low %v320, %v328
    %v673 = vcombine.low %v327, %v329
    %v675 = vunpack.c.l.s4 1983009808
    %v676 = vunpack.c.0.s8 %v675
    %v677 = vlaneseq
    %v678 = vshrl.u32 %v677, 7
    %v679 = vsub.s32 %v676, %v678
    %v680 = vrot.slane %v672, %v679
    %v682 = vunpack.c.l.s4 1983009808
    %v683 = vunpack.c.0.s8 %v682
    %v684 = vlaneseq
    %v685 = vshrl.u32 %v684, 7
    %v686 = vsub.s32 %v683, %v685
    %v687 = vrot.slane %v673, %v686
    %v688 = vcombine.low %v680, %v687
    %v690 = vunpack.c.l.s4 1983009808
    %v691 = vunpack.c.0.s8 %v690
    %v692 = vlaneseq
    %v693 = vshrl.u32 %v692, 7
    %v694 = vsub.s32 %v691, %v693
    %v695 = vrot.slane %v337, %v694
    %v696 = vcombine.low %v345, %v344
    %v697 = vcombine.low %v346, %v353
    %v699 = vunpack.c.l.s4 1983009808
    %v700 = vunpack.c.0.s8 %v699
    %v701 = vlaneseq
    %v702 = vshrl.u32 %v701, 7
    %v703 = vsub.s32 %v700, %v702
    %v704 = vrot.slane %v696, %v703
    %v706 = vunpack.c.l.s4 1983009808
    %v707 = vunpack.c.0.s8 %v706
    %v708 = vlaneseq
    %v709 = vshrl.u32 %v708, 7
    %v710 = vsub.s32 %v707, %v709
    %v711 = vrot.slane %v697, %v710
    %v712 = vcombine.low %v704, %v711
    %v714 = vunpack.c.l.s4 1983009808
    %v715 = vunpack.c.0.s8 %v714
    %v716 = vlaneseq
    %v717 = vshrl.u32 %v716, 7
    %v718 = vsub.s32 %v715, %v717
    %v719 = vrot.slane %v354, %v718
    %v724 = vadd.f32 %v665, %v688
    %v725 = vadd.f32 %v665, %v695
    %v726 = vadd.f32 %v669, %v712
    %v727 = vadd.f32 %v669, %v719
    %v728 = vtanh.pop %v724
    %v729 = vtanh.pop %v725
    %v730 = vtanh.pop %v726
    %v731 = vtanh.pop %v727
    %v733 = vlaneseq
    %v734 = vshrl.u32 %v733, 7
    %v735 = vsub.s32 0, %v734
    %v736 = vrot.slane %v557, %v735
    %v738 = vmul.f32 %v728, %v736
    %v739 = vmul.f32 %v729, %v736
    %v740 = vmul.f32 %v730, %v736
    %v741 = vmul.f32 %v731, %v736
    %v742 = vsel %vm223, %v738, 0.0
    %743 = vadd.xlane.f32.xlu0 %v742
    %v744 = vpop.xlane.xlu0 %743
    %vm745 = vcmask 254976
    %v746 = vsel %vm745, %v739, 0.0
    %747 = vadd.xlane.f32.xlu0 %v746
    %v748 = vpop.xlane.xlu0 %747
    %v749 = vsel %vm223, %v740, 0.0
    %750 = vadd.xlane.f32.xlu0 %v749
    %v751 = vpop.xlane.xlu0 %750
    %v752 = vsel %vm745, %v741, 0.0
    %753 = vadd.xlane.f32.xlu0 %v752
    %v754 = vpop.xlane.xlu0 %753
    %v756 = vlaneseq
    %v757 = vshrl.u32 %v756, 7
    %v758 = vsub.s32 0, %v757
    %v759 = vrot.slane %v558, %v758
    %760 = vset.pattern.permute.xlu0 0
    %761 = vperm.xlu0 %760, %v759
    %v762 = vpop.permute.xlu0 %761
    %v764 = vadd.f32 %v744, %v762
    %v765 = vadd.f32 %v748, %v762
    %v766 = vadd.f32 %v751, %v762
    %v767 = vadd.f32 %v754, %v762
    %v772 = vlaneseq
    %v773 = vand.u32 %v772, 127
    %v774 = vlaneseq
    %v775 = vshrl.u32 %v774, 7
    %v776 = vsub.s32 %v773, %v775
    %v777 = vrot.slane %v764, %v776
    %v778 = vadd.s32 %v773, 4294967288
    %v779 = vlaneseq
    %v780 = vshrl.u32 %v779, 7
    %v781 = vsub.s32 %v778, %v780
    %v782 = vrot.slane %v765, %v781
    %vm783 = vcmask 130112
    %v784 = vsel %vm783, %v782, %v777
    %v785 = vlaneseq
    %v786 = vshrl.u32 %v785, 7
    %v787 = vsub.s32 %v773, %v786
    %v788 = vrot.slane %v766, %v787
    %v789 = vlaneseq
    %v790 = vshrl.u32 %v789, 7
    %v791 = vsub.s32 %v778, %v790
    %v792 = vrot.slane %v767, %v791
    %v793 = vsel %vm783, %v792, %v788
    %vm794 = vcmask 1041409
    %v795 = vsel %vm794, %v793, %v784
    %vm797 = vcmask 74752
    %v798 = vsel %vm797, %v795, -inf
    %799 = vmax.xlane.f32.xlu0 %v798
    %v800 = vpop.xlane.xlu0 %799
    %v802 = vlaneseq
    %v803 = vshrl.u32 %v802, 7
    %v804 = vsub.s32 0, %v803
    %v805 = vrot.slane %v800, %v804
    %v806 = vlaneseq
    %v807 = vshrl.u32 %v806, 7
    %v808 = vsub.s32 1, %v807
    %v809 = vrot.slane %v800, %v808
    %v812 = vsub.f32 %v764, %v805
    %v813 = vsub.f32 %v765, %v805
    %v814 = vsub.f32 %v766, %v809
    %v815 = vsub.f32 %v767, %v809
    %v816 = vmul.f32 %v812, 1.442695
    %v817 = vpow.pop %v816
    %v818 = vmul.f32 %v813, 1.442695
    %v819 = vpow.pop %v818
    %v820 = vmul.f32 %v814, 1.442695
    %v821 = vpow.pop %v820
    %v822 = vmul.f32 %v815, 1.442695
    %v823 = vpow.pop %v822
    %828 = vset.pattern.permute.xlu0 0
    %829 = vperm.xlu0 %828, %v817
    %v830 = vpop.permute.xlu0 %829
    %831 = vset.pattern.permute.xlu0 0
    %832 = vperm.xlu0 %831, %v819
    %v833 = vpop.permute.xlu0 %832
    %834 = vset.pattern.permute.xlu0 0
    %835 = vperm.xlu0 %834, %v821
    %v836 = vpop.permute.xlu0 %835
    %837 = vset.pattern.permute.xlu0 0
    %838 = vperm.xlu0 %837, %v823
    %v839 = vpop.permute.xlu0 %838
    %v840 = vlaneseq
    %v841 = vshrl.u32 %v840, 7
    %v842 = vsub.s32 %v773, %v841
    %v843 = vrot.slane %v830, %v842
    %v844 = vlaneseq
    %v845 = vshrl.u32 %v844, 7
    %v846 = vsub.s32 %v778, %v845
    %v847 = vrot.slane %v833, %v846
    %v848 = vsel %vm783, %v847, %v843
    %v849 = vlaneseq
    %v850 = vshrl.u32 %v849, 7
    %v851 = vsub.s32 %v773, %v850
    %v852 = vrot.slane %v836, %v851
    %v853 = vlaneseq
    %v854 = vshrl.u32 %v853, 7
    %v855 = vsub.s32 %v778, %v854
    %v856 = vrot.slane %v839, %v855
    %v857 = vsel %vm783, %v856, %v852
    %v858 = vsel %vm794, %v857, %v848
    %v860 = vsel %vm797, %v858, 0.0
    %861 = vadd.xlane.f32.xlu0 %v860
    %v862 = vpop.xlane.xlu0 %861
    %v864 = vlaneseq
    %v865 = vshrl.u32 %v864, 7
    %v866 = vsub.s32 0, %v865
    %v867 = vrot.slane %v862, %v866
    %v868 = vlaneseq
    %v869 = vshrl.u32 %v868, 7
    %v870 = vsub.s32 1, %v869
    %v871 = vrot.slane %v862, %v870
    %v874 = vrcp.pop %v867
    %v875 = vmul.f32 %v817, %v874
    %v876 = vmul.f32 %v819, %v874
    %v877 = vrcp.pop %v871
    %v878 = vmul.f32 %v821, %v877
    %v879 = vmul.f32 %v823, %v877
    %881 = vset.pattern.permute.xlu0 0
    %882 = vperm.xlu0 %881, %v875
    %v883 = vpop.permute.xlu0 %882
    %886 = vset.pattern.permute.xlu0 0
    %887 = vperm.xlu0 %886, %v876
    %v888 = vpop.permute.xlu0 %887
    %891 = vset.pattern.permute.xlu0 0
    %892 = vperm.xlu0 %891, %v878
    %v893 = vpop.permute.xlu0 %892
    %896 = vset.pattern.permute.xlu0 0
    %897 = vperm.xlu0 %896, %v879
    %v898 = vpop.permute.xlu0 %897
    %v900 = vmul.f32 %v883, %v114
    %v901 = vmul.f32 %v888, %v115
    %v902 = vmul.f32 %v893, %v116
    %v903 = vmul.f32 %v898, %v117
    %v904 = vsel %vm223, %v900, 0.0
    %v905 = vsel %vm745, %v901, 0.0
    %v906 = vadd.f32 %v904, %v905
    %v907 = vrot.slane %v906, 4
    %v908 = vadd.f32 %v906, %v907
    %v909 = vrot.slane %v908, 2
    %v910 = vadd.f32 %v908, %v909
    %v911 = vrot.slane %v910, 1
    %v912 = vadd.f32 %v910, %v911
    %v913 = vsel %vm223, %v902, 0.0
    %v914 = vsel %vm745, %v903, 0.0
    %v915 = vadd.f32 %v913, %v914
    %v916 = vrot.slane %v915, 4
    %v917 = vadd.f32 %v915, %v916
    %v918 = vrot.slane %v917, 2
    %v919 = vadd.f32 %v917, %v918
    %v920 = vrot.slane %v919, 1
    %v921 = vadd.f32 %v919, %v920
    %v922 = vld [vmem:[#allocation3] sm:$0x3]
    %v925 = vsel %vm794, %v921, %v912
    %v926 = vsel %vm223, %v925, 0
    %928 = vmatprep.subr.mxu0 0.0
    %929 = vmatpush1.msra.mxu0 %v553
    %930 = vmatprep.subr.mxu0 0.0
    %931 = vmatpush1.msra.mxu0 %v554
    %932 = vmatprep.subr.mxu0 0.0
    %933 = vmatpush1.msra.mxu0 %v555
    %934 = vmatprep.subr.mxu0 0.0
    %935 = vmatpush1.msra.mxu0 %v556
    %936 = vmatprep.subr.mxu0 0.0
    %937 = vmatpush1.msra.mxu0 0.0
    %938 = vmatprep.subr.mxu0 0.0
    %939 = vmatpush1.msra.mxu0 0.0
    %940 = vmatprep.subr.mxu0 0.0
    %941 = vmatpush1.msra.mxu0 0.0
    %942 = vmatprep.subr.mxu0 0.0
    %943 = vmatpush1.msra.mxu0 0.0
    %944 = vmatprep.subr.mxu0 0.0
    %945 = vmatpush1.msra.mxu0 0.0
    %946 = vmatprep.subr.mxu0 0.0
    %947 = vmatpush1.msra.mxu0 0.0
    %948 = vmatprep.subr.mxu0 0.0
    %949 = vmatpush1.msra.mxu0 0.0
    %950 = vmatprep.subr.mxu0 0.0
    %951 = vmatpush1.msra.mxu0 0.0
    %952 = vmatprep.subr.mxu0 0.0
    %953 = vmatpush1.msra.mxu0 0.0
    %954 = vmatprep.subr.mxu0 0.0
    %955 = vmatpush1.msra.mxu0 0.0
    %956 = vmatprep.subr.mxu0 0.0
    %957 = vmatpush1.msra.mxu0 0.0
    %958 = vmatprep.subr.mxu0 0.0
    %959 = vmatpush1.msra.mxu0 0.0
    %960 = vmatprep.subr.mxu0 0.0
    %961 = vmatpush1.msra.mxu0 0.0
    %962 = vmatprep.subr.mxu0 0.0
    %963 = vmatpush1.msra.mxu0 0.0
    %964 = vmatprep.subr.mxu0 0.0
    %965 = vmatpush1.msra.mxu0 0.0
    %966 = vmatprep.subr.mxu0 0.0
    %967 = vmatpush1.msra.mxu0 0.0
    %968 = vmatprep.subr.mxu0 0.0
    %969 = vmatpush1.msra.mxu0 0.0
    %970 = vmatprep.subr.mxu0 0.0
    %971 = vmatpush1.msra.mxu0 0.0
    %972 = vmatprep.subr.mxu0 0.0
    %973 = vmatpush1.msra.mxu0 0.0
    %974 = vmatprep.subr.mxu0 0.0
    %975 = vmatpush1.msra.mxu0 0.0
    %976 = vmatprep.subr.mxu0 0.0
    %977 = vmatpush1.msra.mxu0 0.0
    %978 = vmatprep.subr.mxu0 0.0
    %979 = vmatpush1.msra.mxu0 0.0
    %980 = vmatprep.subr.mxu0 0.0
    %981 = vmatpush1.msra.mxu0 0.0
    %982 = vmatprep.subr.mxu0 0.0
    %983 = vmatpush1.msra.mxu0 0.0
    %984 = vmatprep.subr.mxu0 0.0
    %985 = vmatpush1.msra.mxu0 0.0
    %986 = vmatprep.subr.mxu0 0.0
    %987 = vmatpush1.msra.mxu0 0.0
    %988 = vmatprep.subr.mxu0 0.0
    %989 = vmatpush1.msra.mxu0 0.0
    %990 = vmatprep.subr.mxu0 0.0
    %991 = vmatpush1.msra.mxu0 0.0
    %992 = vmatprep.mubr.f32.mxu0 0.0
    %993 = vmatmul.mubr.f32.gmra.mrb[0].mxu0 %v926
    %v994 = vpop.f32.mrb[0].mxu0
    %v995 = vadd.f32 0.0, %v994
    %v996 = vpop.f32.mrb[0].mxu0
    %997 = vdwg.mxu0
    %v998 = vadd.f32 %v922, %v995
    %999 = vrot.lane.b32.xlu0 %v636, 96
    %v1000 = vpop.permute.xlu0 %999
    %v1002 = vadd.f32 %v998, %v1000
    %v1003 = vxor.u32 %v1002, 2147483648
    %v1004 = vmul.f32 %v1003, 1.442695
    %v1005 = vpow.pop %v1004
    %v1006 = vadd.f32 %v1005, 1.0
    %v1007 = vrcp.pop %v1006
    %v1008 = vmul.f32 1.0, %v1007
    %1009 = vrot.lane.b32.xlu0 %v636, 32
    %v1010 = vpop.permute.xlu0 %1009
    %v1012 = vmul.f32 %v1008, %v1010
    %1014 = vrot.lane.b32.xlu0 %v1012, 64
    %v1015 = vpop.permute.xlu0 %1014
    %v1017 = vadd.f32 %v998, %v1015
    %v1018 = vtanh.pop %v1017
    %v1019 = vsub.f32 1.0, %v1008
    %1021 = vrot.lane.b32.xlu0 %v1018, 96
    %v1022 = vpop.permute.xlu0 %1021
    %v1024 = vmul.f32 %v1019, %v1022
    %1025 = vrot.lane.b32.xlu0 %v559, 32
    %v1026 = vpop.permute.xlu0 %1025
    %v1028 = vmul.f32 %v1008, %v1026
    %v1029 = vadd.f32 %v1024, %v1028
    %1031 = vrot.lane.b32.xlu0 %v1029, 96
    %v1032 = vpop.permute.xlu0 %1031
    %1034 = vst.msk [vmem:[#allocation2] sm:$0x3] %vm745, %v1032
    %v1035 = vlaneseq
    %v1036 = vshrl.u32 %v1035, 7
    %v1037 = vsub.s32 %v773, %v1036
    %v1038 = vrot.slane %v883, %v1037
    %v1039 = vlaneseq
    %v1040 = vshrl.u32 %v1039, 7
    %v1041 = vsub.s32 %v778, %v1040
    %v1042 = vrot.slane %v888, %v1041
    %v1043 = vsel %vm783, %v1042, %v1038
    %v1044 = vlaneseq
    %v1045 = vshrl.u32 %v1044, 7
    %v1046 = vsub.s32 %v773, %v1045
    %v1047 = vrot.slane %v893, %v1046
    %v1048 = vlaneseq
    %v1049 = vshrl.u32 %v1048, 7
    %v1050 = vsub.s32 %v778, %v1049
    %v1051 = vrot.slane %v898, %v1050
    %v1052 = vsel %vm783, %v1051, %v1047
    %v1053 = vsel %vm794, %v1052, %v1043
    %1055 = vst.msk [vmem:[#allocation15] sm:$0x3] %vm797, %v1053
    %v1056 = vsel %vm223, %v1032, 0
    %1058 = vmatprep.subr.mxu0 0.0
    %1059 = vmatpush1.msra.mxu0 %v548
    %1060 = vmatprep.subr.mxu0 0.0
    %1061 = vmatpush1.msra.mxu0 %v549
    %1062 = vmatprep.subr.mxu0 0.0
    %1063 = vmatpush1.msra.mxu0 %v550
    %1064 = vmatprep.subr.mxu0 0.0
    %1065 = vmatpush1.msra.mxu0 %v551
    %1066 = vmatprep.subr.mxu0 0.0
    %1067 = vmatpush1.msra.mxu0 0.0
    %1068 = vmatprep.subr.mxu0 0.0
    %1069 = vmatpush1.msra.mxu0 0.0
    %1070 = vmatprep.subr.mxu0 0.0
    %1071 = vmatpush1.msra.mxu0 0.0
    %1072 = vmatprep.subr.mxu0 0.0
    %1073 = vmatpush1.msra.mxu0 0.0
    %1074 = vmatprep.subr.mxu0 0.0
    %1075 = vmatpush1.msra.mxu0 0.0
    %1076 = vmatprep.subr.mxu0 0.0
    %1077 = vmatpush1.msra.mxu0 0.0
    %1078 = vmatprep.subr.mxu0 0.0
    %1079 = vmatpush1.msra.mxu0 0.0
    %1080 = vmatprep.subr.mxu0 0.0
    %1081 = vmatpush1.msra.mxu0 0.0
    %1082 = vmatprep.subr.mxu0 0.0
    %1083 = vmatpush1.msra.mxu0 0.0
    %1084 = vmatprep.subr.mxu0 0.0
    %1085 = vmatpush1.msra.mxu0 0.0
    %1086 = vmatprep.subr.mxu0 0.0
    %1087 = vmatpush1.msra.mxu0 0.0
    %1088 = vmatprep.subr.mxu0 0.0
    %1089 = vmatpush1.msra.mxu0 0.0
    %1090 = vmatprep.subr.mxu0 0.0
    %1091 = vmatpush1.msra.mxu0 0.0
    %1092 = vmatprep.subr.mxu0 0.0
    %1093 = vmatpush1.msra.mxu0 0.0
    %1094 = vmatprep.subr.mxu0 0.0
    %1095 = vmatpush1.msra.mxu0 0.0
    %1096 = vmatprep.subr.mxu0 0.0
    %1097 = vmatpush1.msra.mxu0 0.0
    %1098 = vmatprep.subr.mxu0 0.0
    %1099 = vmatpush1.msra.mxu0 0.0
    %1100 = vmatprep.subr.mxu0 0.0
    %1101 = vmatpush1.msra.mxu0 0.0
    %1102 = vmatprep.subr.mxu0 0.0
    %1103 = vmatpush1.msra.mxu0 0.0
    %1104 = vmatprep.subr.mxu0 0.0
    %1105 = vmatpush1.msra.mxu0 0.0
    %1106 = vmatprep.subr.mxu0 0.0
    %1107 = vmatpush1.msra.mxu0 0.0
    %1108 = vmatprep.subr.mxu0 0.0
    %1109 = vmatpush1.msra.mxu0 0.0
    %1110 = vmatprep.subr.mxu0 0.0
    %1111 = vmatpush1.msra.mxu0 0.0
    %1112 = vmatprep.subr.mxu0 0.0
    %1113 = vmatpush1.msra.mxu0 0.0
    %1114 = vmatprep.subr.mxu0 0.0
    %1115 = vmatpush1.msra.mxu0 0.0
    %1116 = vmatprep.subr.mxu0 0.0
    %1117 = vmatpush1.msra.mxu0 0.0
    %1118 = vmatprep.subr.mxu0 0.0
    %1119 = vmatpush1.msra.mxu0 0.0
    %1120 = vmatprep.subr.mxu0 0.0
    %1121 = vmatpush1.msra.mxu0 0.0
    %1122 = vmatprep.mubr.f32.mxu0 0.0
    %1123 = vmatmul.mubr.f32.gmra.mrb[0].mxu0 %v1056
    %v1124 = vpop.f32.mrb[0].mxu0
    %v1125 = vadd.f32 %v564, %v1124
    %v1126 = vpop.f32.mrb[0].mxu0
    %1127 = vdwg.mxu0
    %v1130 = vunpack.c.l.s4 1966171168
    %v1131 = vunpack.c.0.s8 %v1130
    %v1132 = vlaneseq
    %v1133 = vshrl.u32 %v1132, 7
    %v1134 = vsub.s32 %v1131, %v1133
    %v1135 = vrot.slane %v1125, %v1134
    %v1136 = vcombine.high %v1135, %v1135
    %v1138 = vunpack.c.l.s4 1966171168
    %v1139 = vunpack.c.0.s8 %v1138
    %v1140 = vlaneseq
    %v1141 = vshrl.u32 %v1140, 7
    %v1142 = vsub.s32 %v1139, %v1141
    %v1143 = vrot.slane %v1135, %v1142
    %v1145 = vunpack.c.l.s4 1966171168
    %v1146 = vunpack.c.0.s8 %v1145
    %v1147 = vlaneseq
    %v1148 = vshrl.u32 %v1147, 7
    %v1149 = vsub.s32 %v1146, %v1148
    %v1150 = vrot.slane %v1136, %v1149
    %v1151 = vlaneseq
    %v1152 = vshrl.u32 %v1151, 7
    %v1153 = vsub.s32 0, %v1152
    %v1154 = vrot.slane %v1143, %v1153
    %v1155 = vlaneseq
    %v1156 = vshrl.u32 %v1155, 7
    %v1157 = vsub.s32 0, %v1156
    %v1158 = vrot.slane %v1150, %v1157
    %v1161 = vadd.f32 %v1154, %v688
    %v1162 = vadd.f32 %v1154, %v695
    %v1163 = vadd.f32 %v1158, %v712
    %v1164 = vadd.f32 %v1158, %v719
    %v1165 = vtanh.pop %v1161
    %v1166 = vtanh.pop %v1162
    %v1167 = vtanh.pop %v1163
    %v1168 = vtanh.pop %v1164
    %v1169 = vmul.f32 %v1165, %v736
    %v1170 = vmul.f32 %v1166, %v736
    %v1171 = vmul.f32 %v1167, %v736
    %v1172 = vmul.f32 %v1168, %v736
    %v1173 = vsel %vm223, %v1169, 0.0
    %1174 = vadd.xlane.f32.xlu0 %v1173
    %v1175 = vpop.xlane.xlu0 %1174
    %v1176 = vsel %vm745, %v1170, 0.0
    %1177 = vadd.xlane.f32.xlu0 %v1176
    %v1178 = vpop.xlane.xlu0 %1177
    %v1179 = vsel %vm223, %v1171, 0.0
    %1180 = vadd.xlane.f32.xlu0 %v1179
    %v1181 = vpop.xlane.xlu0 %1180
    %v1182 = vsel %vm745, %v1172, 0.0
    %1183 = vadd.xlane.f32.xlu0 %v1182
    %v1184 = vpop.xlane.xlu0 %1183
    %v1185 = vadd.f32 %v1175, %v762
    %v1186 = vadd.f32 %v1178, %v762
    %v1187 = vadd.f32 %v1181, %v762
    %v1188 = vadd.f32 %v1184, %v762
    %v1193 = vlaneseq
    %v1194 = vshrl.u32 %v1193, 7
    %v1195 = vsub.s32 %v773, %v1194
    %v1196 = vrot.slane %v1185, %v1195
    %v1197 = vlaneseq
    %v1198 = vshrl.u32 %v1197, 7
    %v1199 = vsub.s32 %v778, %v1198
    %v1200 = vrot.slane %v1186, %v1199
    %v1201 = vsel %vm783, %v1200, %v1196
    %v1202 = vlaneseq
    %v1203 = vshrl.u32 %v1202, 7
    %v1204 = vsub.s32 %v773, %v1203
    %v1205 = vrot.slane %v1187, %v1204
    %v1206 = vlaneseq
    %v1207 = vshrl.u32 %v1206, 7
    %v1208 = vsub.s32 %v778, %v1207
    %v1209 = vrot.slane %v1188, %v1208
    %v1210 = vsel %vm783, %v1209, %v1205
    %v1211 = vsel %vm794, %v1210, %v1201
    %v1213 = vsel %vm797, %v1211, -inf
    %1214 = vmax.xlane.f32.xlu0 %v1213
    %v1215 = vpop.xlane.xlu0 %1214
    %v1217 = vlaneseq
    %v1218 = vshrl.u32 %v1217, 7
    %v1219 = vsub.s32 0, %v1218
    %v1220 = vrot.slane %v1215, %v1219
    %v1221 = vlaneseq
    %v1222 = vshrl.u32 %v1221, 7
    %v1223 = vsub.s32 1, %v1222
    %v1224 = vrot.slane %v1215, %v1223
    %v1227 = vsub.f32 %v1185, %v1220
    %v1228 = vsub.f32 %v1186, %v1220
    %v1229 = vsub.f32 %v1187, %v1224
    %v1230 = vsub.f32 %v1188, %v1224
    %v1231 = vmul.f32 %v1227, 1.442695
    %v1232 = vpow.pop %v1231
    %v1233 = vmul.f32 %v1228, 1.442695
    %v1234 = vpow.pop %v1233
    %v1235 = vmul.f32 %v1229, 1.442695
    %v1236 = vpow.pop %v1235
    %v1237 = vmul.f32 %v1230, 1.442695
    %v1238 = vpow.pop %v1237
    %1243 = vset.pattern.permute.xlu0 0
    %1244 = vperm.xlu0 %1243, %v1232
    %v1245 = vpop.permute.xlu0 %1244
    %1246 = vset.pattern.permute.xlu0 0
    %1247 = vperm.xlu0 %1246, %v1234
    %v1248 = vpop.permute.xlu0 %1247
    %1249 = vset.pattern.permute.xlu0 0
    %1250 = vperm.xlu0 %1249, %v1236
    %v1251 = vpop.permute.xlu0 %1250
    %1252 = vset.pattern.permute.xlu0 0
    %1253 = vperm.xlu0 %1252, %v1238
    %v1254 = vpop.permute.xlu0 %1253
    %v1255 = vlaneseq
    %v1256 = vshrl.u32 %v1255, 7
    %v1257 = vsub.s32 %v773, %v1256
    %v1258 = vrot.slane %v1245, %v1257
    %v1259 = vlaneseq
    %v1260 = vshrl.u32 %v1259, 7
    %v1261 = vsub.s32 %v778, %v1260
    %v1262 = vrot.slane %v1248, %v1261
    %v1263 = vsel %vm783, %v1262, %v1258
    %v1264 = vlaneseq
    %v1265 = vshrl.u32 %v1264, 7
    %v1266 = vsub.s32 %v773, %v1265
    %v1267 = vrot.slane %v1251, %v1266
    %v1268 = vlaneseq
    %v1269 = vshrl.u32 %v1268, 7
    %v1270 = vsub.s32 %v778, %v1269
    %v1271 = vrot.slane %v1254, %v1270
    %v1272 = vsel %vm783, %v1271, %v1267
    %v1273 = vsel %vm794, %v1272, %v1263
    %v1275 = vsel %vm797, %v1273, 0.0
    %1276 = vadd.xlane.f32.xlu0 %v1275
    %v1277 = vpop.xlane.xlu0 %1276
    %v1279 = vlaneseq
    %v1280 = vshrl.u32 %v1279, 7
    %v1281 = vsub.s32 0, %v1280
    %v1282 = vrot.slane %v1277, %v1281
    %v1283 = vlaneseq
    %v1284 = vshrl.u32 %v1283, 7
    %v1285 = vsub.s32 1, %v1284
    %v1286 = vrot.slane %v1277, %v1285
    %v1289 = vrcp.pop %v1282
    %v1290 = vmul.f32 %v1232, %v1289
    %v1291 = vmul.f32 %v1234, %v1289
    %v1292 = vrcp.pop %v1286
    %v1293 = vmul.f32 %v1236, %v1292
    %v1294 = vmul.f32 %v1238, %v1292
    %1296 = vset.pattern.permute.xlu0 0
    %1297 = vperm.xlu0 %1296, %v1290
    %v1298 = vpop.permute.xlu0 %1297
    %1301 = vset.pattern.permute.xlu0 0
    %1302 = vperm.xlu0 %1301, %v1291
    %v1303 = vpop.permute.xlu0 %1302
    %1306 = vset.pattern.permute.xlu0 0
    %1307 = vperm.xlu0 %1306, %v1293
    %v1308 = vpop.permute.xlu0 %1307
    %1311 = vset.pattern.permute.xlu0 0
    %1312 = vperm.xlu0 %1311, %v1294
    %v1313 = vpop.permute.xlu0 %1312
    %v1315 = vmul.f32 %v1298, %v114
    %v1316 = vmul.f32 %v1303, %v115
    %v1317 = vmul.f32 %v1308, %v116
    %v1318 = vmul.f32 %v1313, %v117
    %v1319 = vsel %vm223, %v1315, 0.0
    %v1320 = vsel %vm745, %v1316, 0.0
    %v1321 = vadd.f32 %v1319, %v1320
    %v1322 = vrot.slane %v1321, 4
    %v1323 = vadd.f32 %v1321, %v1322
    %v1324 = vrot.slane %v1323, 2
    %v1325 = vadd.f32 %v1323, %v1324
    %v1326 = vrot.slane %v1325, 1
    %v1327 = vadd.f32 %v1325, %v1326
    %v1328 = vsel %vm223, %v1317, 0.0
    %v1329 = vsel %vm745, %v1318, 0.0
    %v1330 = vadd.f32 %v1328, %v1329
    %v1331 = vrot.slane %v1330, 4
    %v1332 = vadd.f32 %v1330, %v1331
    %v1333 = vrot.slane %v1332, 2
    %v1334 = vadd.f32 %v1332, %v1333
    %v1335 = vrot.slane %v1334, 1
    %v1336 = vadd.f32 %v1334, %v1335
    %s1337 = scalar_lea.vmem [#allocation3], 2
    %v1338 = vld [vmem:[%s1337] sm:$0x3]
    %v1341 = vsel %vm794, %v1336, %v1327
    %v1342 = vsel %vm223, %v1341, 0
    %1344 = vmatprep.subr.mxu0 0.0
    %1345 = vmatpush1.msra.mxu0 %v553
    %1346 = vmatprep.subr.mxu0 0.0
    %1347 = vmatpush1.msra.mxu0 %v554
    %1348 = vmatprep.subr.mxu0 0.0
    %1349 = vmatpush1.msra.mxu0 %v555
    %1350 = vmatprep.subr.mxu0 0.0
    %1351 = vmatpush1.msra.mxu0 %v556
    %1352 = vmatprep.subr.mxu0 0.0
    %1353 = vmatpush1.msra.mxu0 0.0
    %1354 = vmatprep.subr.mxu0 0.0
    %1355 = vmatpush1.msra.mxu0 0.0
    %1356 = vmatprep.subr.mxu0 0.0
    %1357 = vmatpush1.msra.mxu0 0.0
    %1358 = vmatprep.subr.mxu0 0.0
    %1359 = vmatpush1.msra.mxu0 0.0
    %1360 = vmatprep.subr.mxu0 0.0
    %1361 = vmatpush1.msra.mxu0 0.0
    %1362 = vmatprep.subr.mxu0 0.0
    %1363 = vmatpush1.msra.mxu0 0.0
    %1364 = vmatprep.subr.mxu0 0.0
    %1365 = vmatpush1.msra.mxu0 0.0
    %1366 = vmatprep.subr.mxu0 0.0
    %1367 = vmatpush1.msra.mxu0 0.0
    %1368 = vmatprep.subr.mxu0 0.0
    %1369 = vmatpush1.msra.mxu0 0.0
    %1370 = vmatprep.subr.mxu0 0.0
    %1371 = vmatpush1.msra.mxu0 0.0
    %1372 = vmatprep.subr.mxu0 0.0
    %1373 = vmatpush1.msra.mxu0 0.0
    %1374 = vmatprep.subr.mxu0 0.0
    %1375 = vmatpush1.msra.mxu0 0.0
    %1376 = vmatprep.subr.mxu0 0.0
    %1377 = vmatpush1.msra.mxu0 0.0
    %1378 = vmatprep.subr.mxu0 0.0
    %1379 = vmatpush1.msra.mxu0 0.0
    %1380 = vmatprep.subr.mxu0 0.0
    %1381 = vmatpush1.msra.mxu0 0.0
    %1382 = vmatprep.subr.mxu0 0.0
    %1383 = vmatpush1.msra.mxu0 0.0
    %1384 = vmatprep.subr.mxu0 0.0
    %1385 = vmatpush1.msra.mxu0 0.0
    %1386 = vmatprep.subr.mxu0 0.0
    %1387 = vmatpush1.msra.mxu0 0.0
    %1388 = vmatprep.subr.mxu0 0.0
    %1389 = vmatpush1.msra.mxu0 0.0
    %1390 = vmatprep.subr.mxu0 0.0
    %1391 = vmatpush1.msra.mxu0 0.0
    %1392 = vmatprep.subr.mxu0 0.0
    %1393 = vmatpush1.msra.mxu0 0.0
    %1394 = vmatprep.subr.mxu0 0.0
    %1395 = vmatpush1.msra.mxu0 0.0
    %1396 = vmatprep.subr.mxu0 0.0
    %1397 = vmatpush1.msra.mxu0 0.0
    %1398 = vmatprep.subr.mxu0 0.0
    %1399 = vmatpush1.msra.mxu0 0.0
    %1400 = vmatprep.subr.mxu0 0.0
    %1401 = vmatpush1.msra.mxu0 0.0
    %1402 = vmatprep.subr.mxu0 0.0
    %1403 = vmatpush1.msra.mxu0 0.0
    %1404 = vmatprep.subr.mxu0 0.0
    %1405 = vmatpush1.msra.mxu0 0.0
    %1406 = vmatprep.subr.mxu0 0.0
    %1407 = vmatpush1.msra.mxu0 0.0
    %1408 = vmatprep.mubr.f32.mxu0 0.0
    %1409 = vmatmul.mubr.f32.gmra.mrb[0].mxu0 %v1342
    %v1410 = vpop.f32.mrb[0].mxu0
    %v1411 = vadd.f32 0.0, %v1410
    %v1412 = vpop.f32.mrb[0].mxu0
    %1413 = vdwg.mxu0
    %v1414 = vadd.f32 %v1338, %v1411
    %1415 = vrot.lane.b32.xlu0 %v1125, 96
    %v1416 = vpop.permute.xlu0 %1415
    %v1418 = vadd.f32 %v1414, %v1416
    %v1419 = vxor.u32 %v1418, 2147483648
    %v1420 = vmul.f32 %v1419, 1.442695
    %v1421 = vpow.pop %v1420
    %v1422 = vadd.f32 %v1421, 1.0
    %v1423 = vrcp.pop %v1422
    %v1424 = vmul.f32 1.0, %v1423
    %1425 = vrot.lane.b32.xlu0 %v1125, 32
    %v1426 = vpop.permute.xlu0 %1425
    %v1428 = vmul.f32 %v1424, %v1426
    %1430 = vrot.lane.b32.xlu0 %v1428, 64
    %v1431 = vpop.permute.xlu0 %1430
    %v1433 = vadd.f32 %v1414, %v1431
    %v1434 = vtanh.pop %v1433
    %v1435 = vsub.f32 1.0, %v1424
    %1437 = vrot.lane.b32.xlu0 %v1434, 96
    %v1438 = vpop.permute.xlu0 %1437
    %v1440 = vmul.f32 %v1435, %v1438
    %v1441 = vmul.f32 %v1424, %v1029
    %v1442 = vadd.f32 %v1440, %v1441
    %1444 = vrot.lane.b32.xlu0 %v1442, 96
    %v1445 = vpop.permute.xlu0 %1444
    %s1447 = scalar_lea.vmem [#allocation2], 2
    %1448 = vst.msk [vmem:[%s1447] sm:$0x3] %vm745, %v1445
    %v1449 = vlaneseq
    %v1450 = vshrl.u32 %v1449, 7
    %v1451 = vsub.s32 %v773, %v1450
    %v1452 = vrot.slane %v1298, %v1451
    %v1453 = vlaneseq
    %v1454 = vshrl.u32 %v1453, 7
    %v1455 = vsub.s32 %v778, %v1454
    %v1456 = vrot.slane %v1303, %v1455
    %v1457 = vsel %vm783, %v1456, %v1452
    %v1458 = vlaneseq
    %v1459 = vshrl.u32 %v1458, 7
    %v1460 = vsub.s32 %v773, %v1459
    %v1461 = vrot.slane %v1308, %v1460
    %v1462 = vlaneseq
    %v1463 = vshrl.u32 %v1462, 7
    %v1464 = vsub.s32 %v778, %v1463
    %v1465 = vrot.slane %v1313, %v1464
    %v1466 = vsel %vm783, %v1465, %v1461
    %v1467 = vsel %vm794, %v1466, %v1457
    %s1469 = scalar_lea.vmem [#allocation15], 2
    %1470 = vst.msk [vmem:[%s1469] sm:$0x3] %vm797, %v1467
    %v1471 = vsel %vm223, %v1445, 0
    %1473 = vmatprep.subr.mxu0 0.0
    %1474 = vmatpush1.msra.mxu0 %v548
    %1475 = vmatprep.subr.mxu0 0.0
    %1476 = vmatpush1.msra.mxu0 %v549
    %1477 = vmatprep.subr.mxu0 0.0
    %1478 = vmatpush1.msra.mxu0 %v550
    %1479 = vmatprep.subr.mxu0 0.0
    %1480 = vmatpush1.msra.mxu0 %v551
    %1481 = vmatprep.subr.mxu0 0.0
    %1482 = vmatpush1.msra.mxu0 0.0
    %1483 = vmatprep.subr.mxu0 0.0
    %1484 = vmatpush1.msra.mxu0 0.0
    %1485 = vmatprep.subr.mxu0 0.0
    %1486 = vmatpush1.msra.mxu0 0.0
    %1487 = vmatprep.subr.mxu0 0.0
    %1488 = vmatpush1.msra.mxu0 0.0
    %1489 = vmatprep.subr.mxu0 0.0
    %1490 = vmatpush1.msra.mxu0 0.0
    %1491 = vmatprep.subr.mxu0 0.0
    %1492 = vmatpush1.msra.mxu0 0.0
    %1493 = vmatprep.subr.mxu0 0.0
    %1494 = vmatpush1.msra.mxu0 0.0
    %1495 = vmatprep.subr.mxu0 0.0
    %1496 = vmatpush1.msra.mxu0 0.0
    %1497 = vmatprep.subr.mxu0 0.0
    %1498 = vmatpush1.msra.mxu0 0.0
    %1499 = vmatprep.subr.mxu0 0.0
    %1500 = vmatpush1.msra.mxu0 0.0
    %1501 = vmatprep.subr.mxu0 0.0
    %1502 = vmatpush1.msra.mxu0 0.0
    %1503 = vmatprep.subr.mxu0 0.0
    %1504 = vmatpush1.msra.mxu0 0.0
    %1505 = vmatprep.subr.mxu0 0.0
    %1506 = vmatpush1.msra.mxu0 0.0
    %1507 = vmatprep.subr.mxu0 0.0
    %1508 = vmatpush1.msra.mxu0 0.0
    %1509 = vmatprep.subr.mxu0 0.0
    %1510 = vmatpush1.msra.mxu0 0.0
    %1511 = vmatprep.subr.mxu0 0.0
    %1512 = vmatpush1.msra.mxu0 0.0
    %1513 = vmatprep.subr.mxu0 0.0
    %1514 = vmatpush1.msra.mxu0 0.0
    %1515 = vmatprep.subr.mxu0 0.0
    %1516 = vmatpush1.msra.mxu0 0.0
    %1517 = vmatprep.subr.mxu0 0.0
    %1518 = vmatpush1.msra.mxu0 0.0
    %1519 = vmatprep.subr.mxu0 0.0
    %1520 = vmatpush1.msra.mxu0 0.0
    %1521 = vmatprep.subr.mxu0 0.0
    %1522 = vmatpush1.msra.mxu0 0.0
    %1523 = vmatprep.subr.mxu0 0.0
    %1524 = vmatpush1.msra.mxu0 0.0
    %1525 = vmatprep.subr.mxu0 0.0
    %1526 = vmatpush1.msra.mxu0 0.0
    %1527 = vmatprep.subr.mxu0 0.0
    %1528 = vmatpush1.msra.mxu0 0.0
    %1529 = vmatprep.subr.mxu0 0.0
    %1530 = vmatpush1.msra.mxu0 0.0
    %1531 = vmatprep.subr.mxu0 0.0
    %1532 = vmatpush1.msra.mxu0 0.0
    %1533 = vmatprep.subr.mxu0 0.0
    %1534 = vmatpush1.msra.mxu0 0.0
    %1535 = vmatprep.subr.mxu0 0.0
    %1536 = vmatpush1.msra.mxu0 0.0
    %1537 = vmatprep.mubr.f32.mxu0 0.0
    %1538 = vmatmul.mubr.f32.gmra.mrb[0].mxu0 %v1471
    %v1539 = vpop.f32.mrb[0].mxu0
    %v1540 = vadd.f32 %v564, %v1539
    %v1541 = vpop.f32.mrb[0].mxu0
    %1542 = vdwg.mxu0
    %v1545 = vunpack.c.l.s4 1966171168
    %v1546 = vunpack.c.0.s8 %v1545
    %v1547 = vlaneseq
    %v1548 = vshrl.u32 %v1547, 7
    %v1549 = vsub.s32 %v1546, %v1548
    %v1550 = vrot.slane %v1540, %v1549
    %v1551 = vcombine.high %v1550, %v1550
    %v1553 = vunpack.c.l.s4 1966171168
    %v1554 = vunpack.c.0.s8 %v1553
    %v1555 = vlaneseq
    %v1556 = vshrl.u32 %v1555, 7
    %v1557 = vsub.s32 %v1554, %v1556
    %v1558 = vrot.slane %v1550, %v1557
    %v1560 = vunpack.c.l.s4 1966171168
    %v1561 = vunpack.c.0.s8 %v1560
    %v1562 = vlaneseq
    %v1563 = vshrl.u32 %v1562, 7
    %v1564 = vsub.s32 %v1561, %v1563
    %v1565 = vrot.slane %v1551, %v1564
    %v1566 = vlaneseq
    %v1567 = vshrl.u32 %v1566, 7
    %v1568 = vsub.s32 0, %v1567
    %v1569 = vrot.slane %v1558, %v1568
    %v1570 = vlaneseq
    %v1571 = vshrl.u32 %v1570, 7
    %v1572 = vsub.s32 0, %v1571
    %v1573 = vrot.slane %v1565, %v1572
    %v1576 = vadd.f32 %v1569, %v688
    %v1577 = vadd.f32 %v1569, %v695
    %v1578 = vadd.f32 %v1573, %v712
    %v1579 = vadd.f32 %v1573, %v719
    %v1580 = vtanh.pop %v1576
    %v1581 = vtanh.pop %v1577
    %v1582 = vtanh.pop %v1578
    %v1583 = vtanh.pop %v1579
    %v1584 = vmul.f32 %v1580, %v736
    %v1585 = vmul.f32 %v1581, %v736
    %v1586 = vmul.f32 %v1582, %v736
    %v1587 = vmul.f32 %v1583, %v736
    %v1588 = vsel %vm223, %v1584, 0.0
    %1589 = vadd.xlane.f32.xlu0 %v1588
    %v1590 = vpop.xlane.xlu0 %1589
    %v1591 = vsel %vm745, %v1585, 0.0
    %1592 = vadd.xlane.f32.xlu0 %v1591
    %v1593 = vpop.xlane.xlu0 %1592
    %v1594 = vsel %vm223, %v1586, 0.0
    %1595 = vadd.xlane.f32.xlu0 %v1594
    %v1596 = vpop.xlane.xlu0 %1595
    %v1597 = vsel %vm745, %v1587, 0.0
    %1598 = vadd.xlane.f32.xlu0 %v1597
    %v1599 = vpop.xlane.xlu0 %1598
    %v1600 = vadd.f32 %v1590, %v762
    %v1601 = vadd.f32 %v1593, %v762
    %v1602 = vadd.f32 %v1596, %v762
    %v1603 = vadd.f32 %v1599, %v762
    %v1608 = vlaneseq
    %v1609 = vshrl.u32 %v1608, 7
    %v1610 = vsub.s32 %v773, %v1609
    %v1611 = vrot.slane %v1600, %v1610
    %v1612 = vlaneseq
    %v1613 = vshrl.u32 %v1612, 7
    %v1614 = vsub.s32 %v778, %v1613
    %v1615 = vrot.slane %v1601, %v1614
    %v1616 = vsel %vm783, %v1615, %v1611
    %v1617 = vlaneseq
    %v1618 = vshrl.u32 %v1617, 7
    %v1619 = vsub.s32 %v773, %v1618
    %v1620 = vrot.slane %v1602, %v1619
    %v1621 = vlaneseq
    %v1622 = vshrl.u32 %v1621, 7
    %v1623 = vsub.s32 %v778, %v1622
    %v1624 = vrot.slane %v1603, %v1623
    %v1625 = vsel %vm783, %v1624, %v1620
    %v1626 = vsel %vm794, %v1625, %v1616
    %v1628 = vsel %vm797, %v1626, -inf
    %1629 = vmax.xlane.f32.xlu0 %v1628
    %v1630 = vpop.xlane.xlu0 %1629
    %v1632 = vlaneseq
    %v1633 = vshrl.u32 %v1632, 7
    %v1634 = vsub.s32 0, %v1633
    %v1635 = vrot.slane %v1630, %v1634
    %v1636 = vlaneseq
    %v1637 = vshrl.u32 %v1636, 7
    %v1638 = vsub.s32 1, %v1637
    %v1639 = vrot.slane %v1630, %v1638
    %v1642 = vsub.f32 %v1600, %v1635
    %v1643 = vsub.f32 %v1601, %v1635
    %v1644 = vsub.f32 %v1602, %v1639
    %v1645 = vsub.f32 %v1603, %v1639
    %v1646 = vmul.f32 %v1642, 1.442695
    %v1647 = vpow.pop %v1646
    %v1648 = vmul.f32 %v1643, 1.442695
    %v1649 = vpow.pop %v1648
    %v1650 = vmul.f32 %v1644, 1.442695
    %v1651 = vpow.pop %v1650
    %v1652 = vmul.f32 %v1645, 1.442695
    %v1653 = vpow.pop %v1652
    %1658 = vset.pattern.permute.xlu0 0
    %1659 = vperm.xlu0 %1658, %v1647
    %v1660 = vpop.permute.xlu0 %1659
    %1661 = vset.pattern.permute.xlu0 0
    %1662 = vperm.xlu0 %1661, %v1649
    %v1663 = vpop.permute.xlu0 %1662
    %1664 = vset.pattern.permute.xlu0 0
    %1665 = vperm.xlu0 %1664, %v1651
    %v1666 = vpop.permute.xlu0 %1665
    %1667 = vset.pattern.permute.xlu0 0
    %1668 = vperm.xlu0 %1667, %v1653
    %v1669 = vpop.permute.xlu0 %1668
    %v1670 = vlaneseq
    %v1671 = vshrl.u32 %v1670, 7
    %v1672 = vsub.s32 %v773, %v1671
    %v1673 = vrot.slane %v1660, %v1672
    %v1674 = vlaneseq
    %v1675 = vshrl.u32 %v1674, 7
    %v1676 = vsub.s32 %v778, %v1675
    %v1677 = vrot.slane %v1663, %v1676
    %v1678 = vsel %vm783, %v1677, %v1673
    %v1679 = vlaneseq
    %v1680 = vshrl.u32 %v1679, 7
    %v1681 = vsub.s32 %v773, %v1680
    %v1682 = vrot.slane %v1666, %v1681
    %v1683 = vlaneseq
    %v1684 = vshrl.u32 %v1683, 7
    %v1685 = vsub.s32 %v778, %v1684
    %v1686 = vrot.slane %v1669, %v1685
    %v1687 = vsel %vm783, %v1686, %v1682
    %v1688 = vsel %vm794, %v1687, %v1678
    %v1690 = vsel %vm797, %v1688, 0.0
    %1691 = vadd.xlane.f32.xlu0 %v1690
    %v1692 = vpop.xlane.xlu0 %1691
    %v1694 = vlaneseq
    %v1695 = vshrl.u32 %v1694, 7
    %v1696 = vsub.s32 0, %v1695
    %v1697 = vrot.slane %v1692, %v1696
    %v1698 = vlaneseq
    %v1699 = vshrl.u32 %v1698, 7
    %v1700 = vsub.s32 1, %v1699
    %v1701 = vrot.slane %v1692, %v1700
    %v1704 = vrcp.pop %v1697
    %v1705 = vmul.f32 %v1647, %v1704
    %v1706 = vmul.f32 %v1649, %v1704
    %v1707 = vrcp.pop %v1701
    %v1708 = vmul.f32 %v1651, %v1707
    %v1709 = vmul.f32 %v1653, %v1707
    %1711 = vset.pattern.permute.xlu0 0
    %1712 = vperm.xlu0 %1711, %v1705
    %v1713 = vpop.permute.xlu0 %1712
    %1716 = vset.pattern.permute.xlu0 0
    %1717 = vperm.xlu0 %1716, %v1706
    %v1718 = vpop.permute.xlu0 %1717
    %1721 = vset.pattern.permute.xlu0 0
    %1722 = vperm.xlu0 %1721, %v1708
    %v1723 = vpop.permute.xlu0 %1722
    %1726 = vset.pattern.permute.xlu0 0
    %1727 = vperm.xlu0 %1726, %v1709
    %v1728 = vpop.permute.xlu0 %1727
    %v1730 = vmul.f32 %v1713, %v114
    %v1731 = vmul.f32 %v1718, %v115
    %v1732 = vmul.f32 %v1723, %v116
    %v1733 = vmul.f32 %v1728, %v117
    %v1734 = vsel %vm223, %v1730, 0.0
    %v1735 = vsel %vm745, %v1731, 0.0
    %v1736 = vadd.f32 %v1734, %v1735
    %v1737 = vrot.slane %v1736, 4
    %v1738 = vadd.f32 %v1736, %v1737
    %v1739 = vrot.slane %v1738, 2
    %v1740 = vadd.f32 %v1738, %v1739
    %v1741 = vrot.slane %v1740, 1
    %v1742 = vadd.f32 %v1740, %v1741
    %v1743 = vsel %vm223, %v1732, 0.0
    %v1744 = vsel %vm745, %v1733, 0.0
    %v1745 = vadd.f32 %v1743, %v1744
    %v1746 = vrot.slane %v1745, 4
    %v1747 = vadd.f32 %v1745, %v1746
    %v1748 = vrot.slane %v1747, 2
    %v1749 = vadd.f32 %v1747, %v1748
    %v1750 = vrot.slane %v1749, 1
    %v1751 = vadd.f32 %v1749, %v1750
    %s1752 = scalar_lea.vmem [#allocation3], 4
    %v1753 = vld [vmem:[%s1752] sm:$0x3]
    %v1756 = vsel %vm794, %v1751, %v1742
    %v1757 = vsel %vm223, %v1756, 0
    %1759 = vmatprep.subr.mxu0 0.0
    %1760 = vmatpush1.msra.mxu0 %v553
    %1761 = vmatprep.subr.mxu0 0.0
    %1762 = vmatpush1.msra.mxu0 %v554
    %1763 = vmatprep.subr.mxu0 0.0
    %1764 = vmatpush1.msra.mxu0 %v555
    %1765 = vmatprep.subr.mxu0 0.0
    %1766 = vmatpush1.msra.mxu0 %v556
    %1767 = vmatprep.subr.mxu0 0.0
    %1768 = vmatpush1.msra.mxu0 0.0
    %1769 = vmatprep.subr.mxu0 0.0
    %1770 = vmatpush1.msra.mxu0 0.0
    %1771 = vmatprep.subr.mxu0 0.0
    %1772 = vmatpush1.msra.mxu0 0.0
    %1773 = vmatprep.subr.mxu0 0.0
    %1774 = vmatpush1.msra.mxu0 0.0
    %1775 = vmatprep.subr.mxu0 0.0
    %1776 = vmatpush1.msra.mxu0 0.0
    %1777 = vmatprep.subr.mxu0 0.0
    %1778 = vmatpush1.msra.mxu0 0.0
    %1779 = vmatprep.subr.mxu0 0.0
    %1780 = vmatpush1.msra.mxu0 0.0
    %1781 = vmatprep.subr.mxu0 0.0
    %1782 = vmatpush1.msra.mxu0 0.0
    %1783 = vmatprep.subr.mxu0 0.0
    %1784 = vmatpush1.msra.mxu0 0.0
    %1785 = vmatprep.subr.mxu0 0.0
    %1786 = vmatpush1.msra.mxu0 0.0
    %1787 = vmatprep.subr.mxu0 0.0
    %1788 = vmatpush1.msra.mxu0 0.0
    %1789 = vmatprep.subr.mxu0 0.0
    %1790 = vmatpush1.msra.mxu0 0.0
    %1791 = vmatprep.subr.mxu0 0.0
    %1792 = vmatpush1.msra.mxu0 0.0
    %1793 = vmatprep.subr.mxu0 0.0
    %1794 = vmatpush1.msra.mxu0 0.0
    %1795 = vmatprep.subr.mxu0 0.0
    %1796 = vmatpush1.msra.mxu0 0.0
    %1797 = vmatprep.subr.mxu0 0.0
    %1798 = vmatpush1.msra.mxu0 0.0
    %1799 = vmatprep.subr.mxu0 0.0
    %1800 = vmatpush1.msra.mxu0 0.0
    %1801 = vmatprep.subr.mxu0 0.0
    %1802 = vmatpush1.msra.mxu0 0.0
    %1803 = vmatprep.subr.mxu0 0.0
    %1804 = vmatpush1.msra.mxu0 0.0
    %1805 = vmatprep.subr.mxu0 0.0
    %1806 = vmatpush1.msra.mxu0 0.0
    %1807 = vmatprep.subr.mxu0 0.0
    %1808 = vmatpush1.msra.mxu0 0.0
    %1809 = vmatprep.subr.mxu0 0.0
    %1810 = vmatpush1.msra.mxu0 0.0
    %1811 = vmatprep.subr.mxu0 0.0
    %1812 = vmatpush1.msra.mxu0 0.0
    %1813 = vmatprep.subr.mxu0 0.0
    %1814 = vmatpush1.msra.mxu0 0.0
    %1815 = vmatprep.subr.mxu0 0.0
    %1816 = vmatpush1.msra.mxu0 0.0
    %1817 = vmatprep.subr.mxu0 0.0
    %1818 = vmatpush1.msra.mxu0 0.0
    %1819 = vmatprep.subr.mxu0 0.0
    %1820 = vmatpush1.msra.mxu0 0.0
    %1821 = vmatprep.subr.mxu0 0.0
    %1822 = vmatpush1.msra.mxu0 0.0
    %1823 = vmatprep.mubr.f32.mxu0 0.0
    %1824 = vmatmul.mubr.f32.gmra.mrb[0].mxu0 %v1757
    %v1825 = vpop.f32.mrb[0].mxu0
    %v1826 = vadd.f32 0.0, %v1825
    %v1827 = vpop.f32.mrb[0].mxu0
    %1828 = vdwg.mxu0
    %v1829 = vadd.f32 %v1753, %v1826
    %1830 = vrot.lane.b32.xlu0 %v1540, 96
    %v1831 = vpop.permute.xlu0 %1830
    %v1833 = vadd.f32 %v1829, %v1831
    %v1834 = vxor.u32 %v1833, 2147483648
    %v1835 = vmul.f32 %v1834, 1.442695
    %v1836 = vpow.pop %v1835
    %v1837 = vadd.f32 %v1836, 1.0
    %v1838 = vrcp.pop %v1837
    %v1839 = vmul.f32 1.0, %v1838
    %1840 = vrot.lane.b32.xlu0 %v1540, 32
    %v1841 = vpop.permute.xlu0 %1840
    %v1843 = vmul.f32 %v1839, %v1841
    %1845 = vrot.lane.b32.xlu0 %v1843, 64
    %v1846 = vpop.permute.xlu0 %1845
    %v1848 = vadd.f32 %v1829, %v1846
    %v1849 = vtanh.pop %v1848
    %v1850 = vsub.f32 1.0, %v1839
    %1852 = vrot.lane.b32.xlu0 %v1849, 96
    %v1853 = vpop.permute.xlu0 %1852
    %v1855 = vmul.f32 %v1850, %v1853
    %v1856 = vmul.f32 %v1839, %v1442
    %v1857 = vadd.f32 %v1855, %v1856
    %1859 = vrot.lane.b32.xlu0 %v1857, 96
    %v1860 = vpop.permute.xlu0 %1859
    %s1862 = scalar_lea.vmem [#allocation2], 4
    %1863 = vst.msk [vmem:[%s1862] sm:$0x3] %vm745, %v1860
    %v1864 = vlaneseq
    %v1865 = vshrl.u32 %v1864, 7
    %v1866 = vsub.s32 %v773, %v1865
    %v1867 = vrot.slane %v1713, %v1866
    %v1868 = vlaneseq
    %v1869 = vshrl.u32 %v1868, 7
    %v1870 = vsub.s32 %v778, %v1869
    %v1871 = vrot.slane %v1718, %v1870
    %v1872 = vsel %vm783, %v1871, %v1867
    %v1873 = vlaneseq
    %v1874 = vshrl.u32 %v1873, 7
    %v1875 = vsub.s32 %v773, %v1874
    %v1876 = vrot.slane %v1723, %v1875
    %v1877 = vlaneseq
    %v1878 = vshrl.u32 %v1877, 7
    %v1879 = vsub.s32 %v778, %v1878
    %v1880 = vrot.slane %v1728, %v1879
    %v1881 = vsel %vm783, %v1880, %v1876
    %v1882 = vsel %vm794, %v1881, %v1872
    %s1884 = scalar_lea.vmem [#allocation15], 4
    %1885 = vst.msk [vmem:[%s1884] sm:$0x3] %vm797, %v1882
    %v1886 = vsel %vm223, %v1860, 0
    %1888 = vmatprep.subr.mxu0 0.0
    %1889 = vmatpush1.msra.mxu0 %v548
    %1890 = vmatprep.subr.mxu0 0.0
    %1891 = vmatpush1.msra.mxu0 %v549
    %1892 = vmatprep.subr.mxu0 0.0
    %1893 = vmatpush1.msra.mxu0 %v550
    %1894 = vmatprep.subr.mxu0 0.0
    %1895 = vmatpush1.msra.mxu0 %v551
    %1896 = vmatprep.subr.mxu0 0.0
    %1897 = vmatpush1.msra.mxu0 0.0
    %1898 = vmatprep.subr.mxu0 0.0
    %1899 = vmatpush1.msra.mxu0 0.0
    %1900 = vmatprep.subr.mxu0 0.0
    %1901 = vmatpush1.msra.mxu0 0.0
    %1902 = vmatprep.subr.mxu0 0.0
    %1903 = vmatpush1.msra.mxu0 0.0
    %1904 = vmatprep.subr.mxu0 0.0
    %1905 = vmatpush1.msra.mxu0 0.0
    %1906 = vmatprep.subr.mxu0 0.0
    %1907 = vmatpush1.msra.mxu0 0.0
    %1908 = vmatprep.subr.mxu0 0.0
    %1909 = vmatpush1.msra.mxu0 0.0
    %1910 = vmatprep.subr.mxu0 0.0
    %1911 = vmatpush1.msra.mxu0 0.0
    %1912 = vmatprep.subr.mxu0 0.0
    %1913 = vmatpush1.msra.mxu0 0.0
    %1914 = vmatprep.subr.mxu0 0.0
    %1915 = vmatpush1.msra.mxu0 0.0
    %1916 = vmatprep.subr.mxu0 0.0
    %1917 = vmatpush1.msra.mxu0 0.0
    %1918 = vmatprep.subr.mxu0 0.0
    %1919 = vmatpush1.msra.mxu0 0.0
    %1920 = vmatprep.subr.mxu0 0.0
    %1921 = vmatpush1.msra.mxu0 0.0
    %1922 = vmatprep.subr.mxu0 0.0
    %1923 = vmatpush1.msra.mxu0 0.0
    %1924 = vmatprep.subr.mxu0 0.0
    %1925 = vmatpush1.msra.mxu0 0.0
    %1926 = vmatprep.subr.mxu0 0.0
    %1927 = vmatpush1.msra.mxu0 0.0
    %1928 = vmatprep.subr.mxu0 0.0
    %1929 = vmatpush1.msra.mxu0 0.0
    %1930 = vmatprep.subr.mxu0 0.0
    %1931 = vmatpush1.msra.mxu0 0.0
    %1932 = vmatprep.subr.mxu0 0.0
    %1933 = vmatpush1.msra.mxu0 0.0
    %1934 = vmatprep.subr.mxu0 0.0
    %1935 = vmatpush1.msra.mxu0 0.0
    %1936 = vmatprep.subr.mxu0 0.0
    %1937 = vmatpush1.msra.mxu0 0.0
    %1938 = vmatprep.subr.mxu0 0.0
    %1939 = vmatpush1.msra.mxu0 0.0
    %1940 = vmatprep.subr.mxu0 0.0
    %1941 = vmatpush1.msra.mxu0 0.0
    %1942 = vmatprep.subr.mxu0 0.0
    %1943 = vmatpush1.msra.mxu0 0.0
    %1944 = vmatprep.subr.mxu0 0.0
    %1945 = vmatpush1.msra.mxu0 0.0
    %1946 = vmatprep.subr.mxu0 0.0
    %1947 = vmatpush1.msra.mxu0 0.0
    %1948 = vmatprep.subr.mxu0 0.0
    %1949 = vmatpush1.msra.mxu0 0.0
    %1950 = vmatprep.subr.mxu0 0.0
    %1951 = vmatpush1.msra.mxu0 0.0
    %1952 = vmatprep.mubr.f32.mxu0 0.0
    %1953 = vmatmul.mubr.f32.gmra.mrb[0].mxu0 %v1886
    %v1954 = vpop.f32.mrb[0].mxu0
    %v1955 = vadd.f32 %v564, %v1954
    %v1956 = vpop.f32.mrb[0].mxu0
    %1957 = vdwg.mxu0
    %v1960 = vunpack.c.l.s4 1966171168
    %v1961 = vunpack.c.0.s8 %v1960
    %v1962 = vlaneseq
    %v1963 = vshrl.u32 %v1962, 7
    %v1964 = vsub.s32 %v1961, %v1963
    %v1965 = vrot.slane %v1955, %v1964
    %v1966 = vcombine.high %v1965, %v1965
    %v1968 = vunpack.c.l.s4 1966171168
    %v1969 = vunpack.c.0.s8 %v1968
    %v1970 = vlaneseq
    %v1971 = vshrl.u32 %v1970, 7
    %v1972 = vsub.s32 %v1969, %v1971
    %v1973 = vrot.slane %v1965, %v1972
    %v1975 = vunpack.c.l.s4 1966171168
    %v1976 = vunpack.c.0.s8 %v1975
    %v1977 = vlaneseq
    %v1978 = vshrl.u32 %v1977, 7
    %v1979 = vsub.s32 %v1976, %v1978
    %v1980 = vrot.slane %v1966, %v1979
    %v1981 = vlaneseq
    %v1982 = vshrl.u32 %v1981, 7
    %v1983 = vsub.s32 0, %v1982
    %v1984 = vrot.slane %v1973, %v1983
    %v1985 = vlaneseq
    %v1986 = vshrl.u32 %v1985, 7
    %v1987 = vsub.s32 0, %v1986
    %v1988 = vrot.slane %v1980, %v1987
    %v1991 = vadd.f32 %v1984, %v688
    %v1992 = vadd.f32 %v1984, %v695
    %v1993 = vadd.f32 %v1988, %v712
    %v1994 = vadd.f32 %v1988, %v719
    %v1995 = vtanh.pop %v1991
    %v1996 = vtanh.pop %v1992
    %v1997 = vtanh.pop %v1993
    %v1998 = vtanh.pop %v1994
    %v1999 = vmul.f32 %v1995, %v736
    %v2000 = vmul.f32 %v1996, %v736
    %v2001 = vmul.f32 %v1997, %v736
    %v2002 = vmul.f32 %v1998, %v736
    %v2003 = vsel %vm223, %v1999, 0.0
    %2004 = vadd.xlane.f32.xlu0 %v2003
    %v2005 = vpop.xlane.xlu0 %2004
    %v2006 = vsel %vm745, %v2000, 0.0
    %2007 = vadd.xlane.f32.xlu0 %v2006
    %v2008 = vpop.xlane.xlu0 %2007
    %v2009 = vsel %vm223, %v2001, 0.0
    %2010 = vadd.xlane.f32.xlu0 %v2009
    %v2011 = vpop.xlane.xlu0 %2010
    %v2012 = vsel %vm745, %v2002, 0.0
    %2013 = vadd.xlane.f32.xlu0 %v2012
    %v2014 = vpop.xlane.xlu0 %2013
    %v2015 = vadd.f32 %v2005, %v762
    %v2016 = vadd.f32 %v2008, %v762
    %v2017 = vadd.f32 %v2011, %v762
    %v2018 = vadd.f32 %v2014, %v762
    %v2023 = vlaneseq
    %v2024 = vshrl.u32 %v2023, 7
    %v2025 = vsub.s32 %v773, %v2024
    %v2026 = vrot.slane %v2015, %v2025
    %v2027 = vlaneseq
    %v2028 = vshrl.u32 %v2027, 7
    %v2029 = vsub.s32 %v778, %v2028
    %v2030 = vrot.slane %v2016, %v2029
    %v2031 = vsel %vm783, %v2030, %v2026
    %v2032 = vlaneseq
    %v2033 = vshrl.u32 %v2032, 7
    %v2034 = vsub.s32 %v773, %v2033
    %v2035 = vrot.slane %v2017, %v2034
    %v2036 = vlaneseq
    %v2037 = vshrl.u32 %v2036, 7
    %v2038 = vsub.s32 %v778, %v2037
    %v2039 = vrot.slane %v2018, %v2038
    %v2040 = vsel %vm783, %v2039, %v2035
    %v2041 = vsel %vm794, %v2040, %v2031
    %v2043 = vsel %vm797, %v2041, -inf
    %2044 = vmax.xlane.f32.xlu0 %v2043
    %v2045 = vpop.xlane.xlu0 %2044
    %v2047 = vlaneseq
    %v2048 = vshrl.u32 %v2047, 7
    %v2049 = vsub.s32 0, %v2048
    %v2050 = vrot.slane %v2045, %v2049
    %v2051 = vlaneseq
    %v2052 = vshrl.u32 %v2051, 7
    %v2053 = vsub.s32 1, %v2052
    %v2054 = vrot.slane %v2045, %v2053
    %v2057 = vsub.f32 %v2015, %v2050
    %v2058 = vsub.f32 %v2016, %v2050
    %v2059 = vsub.f32 %v2017, %v2054
    %v2060 = vsub.f32 %v2018, %v2054
    %v2061 = vmul.f32 %v2057, 1.442695
    %v2062 = vpow.pop %v2061
    %v2063 = vmul.f32 %v2058, 1.442695
    %v2064 = vpow.pop %v2063
    %v2065 = vmul.f32 %v2059, 1.442695
    %v2066 = vpow.pop %v2065
    %v2067 = vmul.f32 %v2060, 1.442695
    %v2068 = vpow.pop %v2067
    %2073 = vset.pattern.permute.xlu0 0
    %2074 = vperm.xlu0 %2073, %v2062
    %v2075 = vpop.permute.xlu0 %2074
    %2076 = vset.pattern.permute.xlu0 0
    %2077 = vperm.xlu0 %2076, %v2064
    %v2078 = vpop.permute.xlu0 %2077
    %2079 = vset.pattern.permute.xlu0 0
    %2080 = vperm.xlu0 %2079, %v2066
    %v2081 = vpop.permute.xlu0 %2080
    %2082 = vset.pattern.permute.xlu0 0
    %2083 = vperm.xlu0 %2082, %v2068
    %v2084 = vpop.permute.xlu0 %2083
    %v2085 = vlaneseq
    %v2086 = vshrl.u32 %v2085, 7
    %v2087 = vsub.s32 %v773, %v2086
    %v2088 = vrot.slane %v2075, %v2087
    %v2089 = vlaneseq
    %v2090 = vshrl.u32 %v2089, 7
    %v2091 = vsub.s32 %v778, %v2090
    %v2092 = vrot.slane %v2078, %v2091
    %v2093 = vsel %vm783, %v2092, %v2088
    %v2094 = vlaneseq
    %v2095 = vshrl.u32 %v2094, 7
    %v2096 = vsub.s32 %v773, %v2095
    %v2097 = vrot.slane %v2081, %v2096
    %v2098 = vlaneseq
    %v2099 = vshrl.u32 %v2098, 7
    %v2100 = vsub.s32 %v778, %v2099
    %v2101 = vrot.slane %v2084, %v2100
    %v2102 = vsel %vm783, %v2101, %v2097
    %v2103 = vsel %vm794, %v2102, %v2093
    %v2105 = vsel %vm797, %v2103, 0.0
    %2106 = vadd.xlane.f32.xlu0 %v2105
    %v2107 = vpop.xlane.xlu0 %2106
    %v2109 = vlaneseq
    %v2110 = vshrl.u32 %v2109, 7
    %v2111 = vsub.s32 0, %v2110
    %v2112 = vrot.slane %v2107, %v2111
    %v2113 = vlaneseq
    %v2114 = vshrl.u32 %v2113, 7
    %v2115 = vsub.s32 1, %v2114
    %v2116 = vrot.slane %v2107, %v2115
    %v2119 = vrcp.pop %v2112
    %v2120 = vmul.f32 %v2062, %v2119
    %v2121 = vmul.f32 %v2064, %v2119
    %v2122 = vrcp.pop %v2116
    %v2123 = vmul.f32 %v2066, %v2122
    %v2124 = vmul.f32 %v2068, %v2122
    %2126 = vset.pattern.permute.xlu0 0
    %2127 = vperm.xlu0 %2126, %v2120
    %v2128 = vpop.permute.xlu0 %2127
    %2131 = vset.pattern.permute.xlu0 0
    %2132 = vperm.xlu0 %2131, %v2121
    %v2133 = vpop.permute.xlu0 %2132
    %2136 = vset.pattern.permute.xlu0 0
    %2137 = vperm.xlu0 %2136, %v2123
    %v2138 = vpop.permute.xlu0 %2137
    %2141 = vset.pattern.permute.xlu0 0
    %2142 = vperm.xlu0 %2141, %v2124
    %v2143 = vpop.permute.xlu0 %2142
    %v2145 = vmul.f32 %v2128, %v114
    %v2146 = vmul.f32 %v2133, %v115
    %v2147 = vmul.f32 %v2138, %v116
    %v2148 = vmul.f32 %v2143, %v117
    %v2149 = vsel %vm223, %v2145, 0.0
    %v2150 = vsel %vm745, %v2146, 0.0
    %v2151 = vadd.f32 %v2149, %v2150
    %v2152 = vrot.slane %v2151, 4
    %v2153 = vadd.f32 %v2151, %v2152
    %v2154 = vrot.slane %v2153, 2
    %v2155 = vadd.f32 %v2153, %v2154
    %v2156 = vrot.slane %v2155, 1
    %v2157 = vadd.f32 %v2155, %v2156
    %v2158 = vsel %vm223, %v2147, 0.0
    %v2159 = vsel %vm745, %v2148, 0.0
    %v2160 = vadd.f32 %v2158, %v2159
    %v2161 = vrot.slane %v2160, 4
    %v2162 = vadd.f32 %v2160, %v2161
    %v2163 = vrot.slane %v2162, 2
    %v2164 = vadd.f32 %v2162, %v2163
    %v2165 = vrot.slane %v2164, 1
    %v2166 = vadd.f32 %v2164, %v2165
    %s2167 = scalar_lea.vmem [#allocation3], 6
    %v2168 = vld [vmem:[%s2167] sm:$0x3]
    %v2171 = vsel %vm794, %v2166, %v2157
    %v2172 = vsel %vm223, %v2171, 0
    %2174 = vmatprep.subr.mxu0 0.0
    %2175 = vmatpush1.msra.mxu0 %v553
    %2176 = vmatprep.subr.mxu0 0.0
    %2177 = vmatpush1.msra.mxu0 %v554
    %2178 = vmatprep.subr.mxu0 0.0
    %2179 = vmatpush1.msra.mxu0 %v555
    %2180 = vmatprep.subr.mxu0 0.0
    %2181 = vmatpush1.msra.mxu0 %v556
    %2182 = vmatprep.subr.mxu0 0.0
    %2183 = vmatpush1.msra.mxu0 0.0
    %2184 = vmatprep.subr.mxu0 0.0
    %2185 = vmatpush1.msra.mxu0 0.0
    %2186 = vmatprep.subr.mxu0 0.0
    %2187 = vmatpush1.msra.mxu0 0.0
    %2188 = vmatprep.subr.mxu0 0.0
    %2189 = vmatpush1.msra.mxu0 0.0
    %2190 = vmatprep.subr.mxu0 0.0
    %2191 = vmatpush1.msra.mxu0 0.0
    %2192 = vmatprep.subr.mxu0 0.0
    %2193 = vmatpush1.msra.mxu0 0.0
    %2194 = vmatprep.subr.mxu0 0.0
    %2195 = vmatpush1.msra.mxu0 0.0
    %2196 = vmatprep.subr.mxu0 0.0
    %2197 = vmatpush1.msra.mxu0 0.0
    %2198 = vmatprep.subr.mxu0 0.0
    %2199 = vmatpush1.msra.mxu0 0.0
    %2200 = vmatprep.subr.mxu0 0.0
    %2201 = vmatpush1.msra.mxu0 0.0
    %2202 = vmatprep.subr.mxu0 0.0
    %2203 = vmatpush1.msra.mxu0 0.0
    %2204 = vmatprep.subr.mxu0 0.0
    %2205 = vmatpush1.msra.mxu0 0.0
    %2206 = vmatprep.subr.mxu0 0.0
    %2207 = vmatpush1.msra.mxu0 0.0
    %2208 = vmatprep.subr.mxu0 0.0
    %2209 = vmatpush1.msra.mxu0 0.0
    %2210 = vmatprep.subr.mxu0 0.0
    %2211 = vmatpush1.msra.mxu0 0.0
    %2212 = vmatprep.subr.mxu0 0.0
    %2213 = vmatpush1.msra.mxu0 0.0
    %2214 = vmatprep.subr.mxu0 0.0
    %2215 = vmatpush1.msra.mxu0 0.0
    %2216 = vmatprep.subr.mxu0 0.0
    %2217 = vmatpush1.msra.mxu0 0.0
    %2218 = vmatprep.subr.mxu0 0.0
    %2219 = vmatpush1.msra.mxu0 0.0
    %2220 = vmatprep.subr.mxu0 0.0
    %2221 = vmatpush1.msra.mxu0 0.0
    %2222 = vmatprep.subr.mxu0 0.0
    %2223 = vmatpush1.msra.mxu0 0.0
    %2224 = vmatprep.subr.mxu0 0.0
    %2225 = vmatpush1.msra.mxu0 0.0
    %2226 = vmatprep.subr.mxu0 0.0
    %2227 = vmatpush1.msra.mxu0 0.0
    %2228 = vmatprep.subr.mxu0 0.0
    %2229 = vmatpush1.msra.mxu0 0.0
    %2230 = vmatprep.subr.mxu0 0.0
    %2231 = vmatpush1.msra.mxu0 0.0
    %2232 = vmatprep.subr.mxu0 0.0
    %2233 = vmatpush1.msra.mxu0 0.0
    %2234 = vmatprep.subr.mxu0 0.0
    %2235 = vmatpush1.msra.mxu0 0.0
    %2236 = vmatprep.subr.mxu0 0.0
    %2237 = vmatpush1.msra.mxu0 0.0
    %2238 = vmatprep.mubr.f32.mxu0 0.0
    %2239 = vmatmul.mubr.f32.gmra.mrb[0].mxu0 %v2172
    %v2240 = vpop.f32.mrb[0].mxu0
    %v2241 = vadd.f32 0.0, %v2240
    %v2242 = vpop.f32.mrb[0].mxu0
    %2243 = vdwg.mxu0
    %v2244 = vadd.f32 %v2168, %v2241
    %2245 = vrot.lane.b32.xlu0 %v1955, 96
    %v2246 = vpop.permute.xlu0 %2245
    %v2248 = vadd.f32 %v2244, %v2246
    %v2249 = vxor.u32 %v2248, 2147483648
    %v2250 = vmul.f32 %v2249, 1.442695
    %v2251 = vpow.pop %v2250
    %v2252 = vadd.f32 %v2251, 1.0
    %v2253 = vrcp.pop %v2252
    %v2254 = vmul.f32 1.0, %v2253
    %2255 = vrot.lane.b32.xlu0 %v1955, 32
    %v2256 = vpop.permute.xlu0 %2255
    %v2258 = vmul.f32 %v2254, %v2256
    %2260 = vrot.lane.b32.xlu0 %v2258, 64
    %v2261 = vpop.permute.xlu0 %2260
    %v2263 = vadd.f32 %v2244, %v2261
    %v2264 = vtanh.pop %v2263
    %v2265 = vsub.f32 1.0, %v2254
    %2267 = vrot.lane.b32.xlu0 %v2264, 96
    %v2268 = vpop.permute.xlu0 %2267
    %v2270 = vmul.f32 %v2265, %v2268
    %v2271 = vmul.f32 %v2254, %v1857
    %v2272 = vadd.f32 %v2270, %v2271
    %2274 = vrot.lane.b32.xlu0 %v2272, 96
    %v2275 = vpop.permute.xlu0 %2274
    %s2277 = scalar_lea.vmem [#allocation2], 6
    %2278 = vst.msk [vmem:[%s2277] sm:$0x3] %vm745, %v2275
    %v2279 = vlaneseq
    %v2280 = vshrl.u32 %v2279, 7
    %v2281 = vsub.s32 %v773, %v2280
    %v2282 = vrot.slane %v2128, %v2281
    %v2283 = vlaneseq
    %v2284 = vshrl.u32 %v2283, 7
    %v2285 = vsub.s32 %v778, %v2284
    %v2286 = vrot.slane %v2133, %v2285
    %v2287 = vsel %vm783, %v2286, %v2282
    %v2288 = vlaneseq
    %v2289 = vshrl.u32 %v2288, 7
    %v2290 = vsub.s32 %v773, %v2289
    %v2291 = vrot.slane %v2138, %v2290
    %v2292 = vlaneseq
    %v2293 = vshrl.u32 %v2292, 7
    %v2294 = vsub.s32 %v778, %v2293
    %v2295 = vrot.slane %v2143, %v2294
    %v2296 = vsel %vm783, %v2295, %v2291
    %v2297 = vsel %vm794, %v2296, %v2287
    %s2299 = scalar_lea.vmem [#allocation15], 6
    %2300 = vst.msk [vmem:[%s2299] sm:$0x3] %vm797, %v2297
    %v2301 = vsel %vm223, %v2275, 0
    %2303 = vmatprep.subr.mxu0 0.0
    %2304 = vmatpush1.msra.mxu0 %v548
    %2305 = vmatprep.subr.mxu0 0.0
    %2306 = vmatpush1.msra.mxu0 %v549
    %2307 = vmatprep.subr.mxu0 0.0
    %2308 = vmatpush1.msra.mxu0 %v550
    %2309 = vmatprep.subr.mxu0 0.0
    %2310 = vmatpush1.msra.mxu0 %v551
    %2311 = vmatprep.subr.mxu0 0.0
    %2312 = vmatpush1.msra.mxu0 0.0
    %2313 = vmatprep.subr.mxu0 0.0
    %2314 = vmatpush1.msra.mxu0 0.0
    %2315 = vmatprep.subr.mxu0 0.0
    %2316 = vmatpush1.msra.mxu0 0.0
    %2317 = vmatprep.subr.mxu0 0.0
    %2318 = vmatpush1.msra.mxu0 0.0
    %2319 = vmatprep.subr.mxu0 0.0
    %2320 = vmatpush1.msra.mxu0 0.0
    %2321 = vmatprep.subr.mxu0 0.0
    %2322 = vmatpush1.msra.mxu0 0.0
    %2323 = vmatprep.subr.mxu0 0.0
    %2324 = vmatpush1.msra.mxu0 0.0
    %2325 = vmatprep.subr.mxu0 0.0
    %2326 = vmatpush1.msra.mxu0 0.0
    %2327 = vmatprep.subr.mxu0 0.0
    %2328 = vmatpush1.msra.mxu0 0.0
    %2329 = vmatprep.subr.mxu0 0.0
    %2330 = vmatpush1.msra.mxu0 0.0
    %2331 = vmatprep.subr.mxu0 0.0
    %2332 = vmatpush1.msra.mxu0 0.0
    %2333 = vmatprep.subr.mxu0 0.0
    %2334 = vmatpush1.msra.mxu0 0.0
    %2335 = vmatprep.subr.mxu0 0.0
    %2336 = vmatpush1.msra.mxu0 0.0
    %2337 = vmatprep.subr.mxu0 0.0
    %2338 = vmatpush1.msra.mxu0 0.0
    %2339 = vmatprep.subr.mxu0 0.0
    %2340 = vmatpush1.msra.mxu0 0.0
    %2341 = vmatprep.subr.mxu0 0.0
    %2342 = vmatpush1.msra.mxu0 0.0
    %2343 = vmatprep.subr.mxu0 0.0
    %2344 = vmatpush1.msra.mxu0 0.0
    %2345 = vmatprep.subr.mxu0 0.0
    %2346 = vmatpush1.msra.mxu0 0.0
    %2347 = vmatprep.subr.mxu0 0.0
    %2348 = vmatpush1.msra.mxu0 0.0
    %2349 = vmatprep.subr.mxu0 0.0
    %2350 = vmatpush1.msra.mxu0 0.0
    %2351 = vmatprep.subr.mxu0 0.0
    %2352 = vmatpush1.msra.mxu0 0.0
    %2353 = vmatprep.subr.mxu0 0.0
    %2354 = vmatpush1.msra.mxu0 0.0
    %2355 = vmatprep.subr.mxu0 0.0
    %2356 = vmatpush1.msra.mxu0 0.0
    %2357 = vmatprep.subr.mxu0 0.0
    %2358 = vmatpush1.msra.mxu0 0.0
    %2359 = vmatprep.subr.mxu0 0.0
    %2360 = vmatpush1.msra.mxu0 0.0
    %2361 = vmatprep.subr.mxu0 0.0
    %2362 = vmatpush1.msra.mxu0 0.0
    %2363 = vmatprep.subr.mxu0 0.0
    %2364 = vmatpush1.msra.mxu0 0.0
    %2365 = vmatprep.subr.mxu0 0.0
    %2366 = vmatpush1.msra.mxu0 0.0
    %2367 = vmatprep.mubr.f32.mxu0 0.0
    %2368 = vmatmul.mubr.f32.gmra.mrb[0].mxu0 %v2301
    %v2369 = vpop.f32.mrb[0].mxu0
    %v2370 = vadd.f32 %v564, %v2369
    %v2371 = vpop.f32.mrb[0].mxu0
    %2372 = vdwg.mxu0
    %v2375 = vunpack.c.l.s4 1966171168
    %v2376 = vunpack.c.0.s8 %v2375
    %v2377 = vlaneseq
    %v2378 = vshrl.u32 %v2377, 7
    %v2379 = vsub.s32 %v2376, %v2378
    %v2380 = vrot.slane %v2370, %v2379
    %v2381 = vcombine.high %v2380, %v2380
    %v2383 = vunpack.c.l.s4 1966171168
    %v2384 = vunpack.c.0.s8 %v2383
    %v2385 = vlaneseq
    %v2386 = vshrl.u32 %v2385, 7
    %v2387 = vsub.s32 %v2384, %v2386
    %v2388 = vrot.slane %v2380, %v2387
    %v2390 = vunpack.c.l.s4 1966171168
    %v2391 = vunpack.c.0.s8 %v2390
    %v2392 = vlaneseq
    %v2393 = vshrl.u32 %v2392, 7
    %v2394 = vsub.s32 %v2391, %v2393
    %v2395 = vrot.slane %v2381, %v2394
    %v2396 = vlaneseq
    %v2397 = vshrl.u32 %v2396, 7
    %v2398 = vsub.s32 0, %v2397
    %v2399 = vrot.slane %v2388, %v2398
    %v2400 = vlaneseq
    %v2401 = vshrl.u32 %v2400, 7
    %v2402 = vsub.s32 0, %v2401
    %v2403 = vrot.slane %v2395, %v2402
    %v2406 = vadd.f32 %v2399, %v688
    %v2407 = vadd.f32 %v2399, %v695
    %v2408 = vadd.f32 %v2403, %v712
    %v2409 = vadd.f32 %v2403, %v719
    %v2410 = vtanh.pop %v2406
    %v2411 = vtanh.pop %v2407
    %v2412 = vtanh.pop %v2408
    %v2413 = vtanh.pop %v2409
    %v2414 = vmul.f32 %v2410, %v736
    %v2415 = vmul.f32 %v2411, %v736
    %v2416 = vmul.f32 %v2412, %v736
    %v2417 = vmul.f32 %v2413, %v736
    %v2418 = vsel %vm223, %v2414, 0.0
    %2419 = vadd.xlane.f32.xlu0 %v2418
    %v2420 = vpop.xlane.xlu0 %2419
    %v2421 = vsel %vm745, %v2415, 0.0
    %2422 = vadd.xlane.f32.xlu0 %v2421
    %v2423 = vpop.xlane.xlu0 %2422
    %v2424 = vsel %vm223, %v2416, 0.0
    %2425 = vadd.xlane.f32.xlu0 %v2424
    %v2426 = vpop.xlane.xlu0 %2425
    %v2427 = vsel %vm745, %v2417, 0.0
    %2428 = vadd.xlane.f32.xlu0 %v2427
    %v2429 = vpop.xlane.xlu0 %2428
    %v2430 = vadd.f32 %v2420, %v762
    %v2431 = vadd.f32 %v2423, %v762
    %v2432 = vadd.f32 %v2426, %v762
    %v2433 = vadd.f32 %v2429, %v762
    %v2438 = vlaneseq
    %v2439 = vshrl.u32 %v2438, 7
    %v2440 = vsub.s32 %v773, %v2439
    %v2441 = vrot.slane %v2430, %v2440
    %v2442 = vlaneseq
    %v2443 = vshrl.u32 %v2442, 7
    %v2444 = vsub.s32 %v778, %v2443
    %v2445 = vrot.slane %v2431, %v2444
    %v2446 = vsel %vm783, %v2445, %v2441
    %v2447 = vlaneseq
    %v2448 = vshrl.u32 %v2447, 7
    %v2449 = vsub.s32 %v773, %v2448
    %v2450 = vrot.slane %v2432, %v2449
    %v2451 = vlaneseq
    %v2452 = vshrl.u32 %v2451, 7
    %v2453 = vsub.s32 %v778, %v2452
    %v2454 = vrot.slane %v2433, %v2453
    %v2455 = vsel %vm783, %v2454, %v2450
    %v2456 = vsel %vm794, %v2455, %v2446
    %v2458 = vsel %vm797, %v2456, -inf
    %2459 = vmax.xlane.f32.xlu0 %v2458
    %v2460 = vpop.xlane.xlu0 %2459
    %v2462 = vlaneseq
    %v2463 = vshrl.u32 %v2462, 7
    %v2464 = vsub.s32 0, %v2463
    %v2465 = vrot.slane %v2460, %v2464
    %v2466 = vlaneseq
    %v2467 = vshrl.u32 %v2466, 7
    %v2468 = vsub.s32 1, %v2467
    %v2469 = vrot.slane %v2460, %v2468
    %v2472 = vsub.f32 %v2430, %v2465
    %v2473 = vsub.f32 %v2431, %v2465
    %v2474 = vsub.f32 %v2432, %v2469
    %v2475 = vsub.f32 %v2433, %v2469
    %v2476 = vmul.f32 %v2472, 1.442695
    %v2477 = vpow.pop %v2476
    %v2478 = vmul.f32 %v2473, 1.442695
    %v2479 = vpow.pop %v2478
    %v2480 = vmul.f32 %v2474, 1.442695
    %v2481 = vpow.pop %v2480
    %v2482 = vmul.f32 %v2475, 1.442695
    %v2483 = vpow.pop %v2482
    %2488 = vset.pattern.permute.xlu0 0
    %2489 = vperm.xlu0 %2488, %v2477
    %v2490 = vpop.permute.xlu0 %2489
    %2491 = vset.pattern.permute.xlu0 0
    %2492 = vperm.xlu0 %2491, %v2479
    %v2493 = vpop.permute.xlu0 %2492
    %2494 = vset.pattern.permute.xlu0 0
    %2495 = vperm.xlu0 %2494, %v2481
    %v2496 = vpop.permute.xlu0 %2495
    %2497 = vset.pattern.permute.xlu0 0
    %2498 = vperm.xlu0 %2497, %v2483
    %v2499 = vpop.permute.xlu0 %2498
    %v2500 = vlaneseq
    %v2501 = vshrl.u32 %v2500, 7
    %v2502 = vsub.s32 %v773, %v2501
    %v2503 = vrot.slane %v2490, %v2502
    %v2504 = vlaneseq
    %v2505 = vshrl.u32 %v2504, 7
    %v2506 = vsub.s32 %v778, %v2505
    %v2507 = vrot.slane %v2493, %v2506
    %v2508 = vsel %vm783, %v2507, %v2503
    %v2509 = vlaneseq
    %v2510 = vshrl.u32 %v2509, 7
    %v2511 = vsub.s32 %v773, %v2510
    %v2512 = vrot.slane %v2496, %v2511
    %v2513 = vlaneseq
    %v2514 = vshrl.u32 %v2513, 7
    %v2515 = vsub.s32 %v778, %v2514
    %v2516 = vrot.slane %v2499, %v2515
    %v2517 = vsel %vm783, %v2516, %v2512
    %v2518 = vsel %vm794, %v2517, %v2508
    %v2520 = vsel %vm797, %v2518, 0.0
    %2521 = vadd.xlane.f32.xlu0 %v2520
    %v2522 = vpop.xlane.xlu0 %2521
    %v2524 = vlaneseq
    %v2525 = vshrl.u32 %v2524, 7
    %v2526 = vsub.s32 0, %v2525
    %v2527 = vrot.slane %v2522, %v2526
    %v2528 = vlaneseq
    %v2529 = vshrl.u32 %v2528, 7
    %v2530 = vsub.s32 1, %v2529
    %v2531 = vrot.slane %v2522, %v2530
    %v2534 = vrcp.pop %v2527
    %v2535 = vmul.f32 %v2477, %v2534
    %v2536 = vmul.f32 %v2479, %v2534
    %v2537 = vrcp.pop %v2531
    %v2538 = vmul.f32 %v2481, %v2537
    %v2539 = vmul.f32 %v2483, %v2537
    %2541 = vset.pattern.permute.xlu0 0
    %2542 = vperm.xlu0 %2541, %v2535
    %v2543 = vpop.permute.xlu0 %2542
    %2546 = vset.pattern.permute.xlu0 0
    %2547 = vperm.xlu0 %2546, %v2536
    %v2548 = vpop.permute.xlu0 %2547
    %2551 = vset.pattern.permute.xlu0 0
    %2552 = vperm.xlu0 %2551, %v2538
    %v2553 = vpop.permute.xlu0 %2552
    %2556 = vset.pattern.permute.xlu0 0
    %2557 = vperm.xlu0 %2556, %v2539
    %v2558 = vpop.permute.xlu0 %2557
    %v2560 = vmul.f32 %v2543, %v114
    %v2561 = vmul.f32 %v2548, %v115
    %v2562 = vmul.f32 %v2553, %v116
    %v2563 = vmul.f32 %v2558, %v117
    %v2564 = vsel %vm223, %v2560, 0.0
    %v2565 = vsel %vm745, %v2561, 0.0
    %v2566 = vadd.f32 %v2564, %v2565
    %v2567 = vrot.slane %v2566, 4
    %v2568 = vadd.f32 %v2566, %v2567
    %v2569 = vrot.slane %v2568, 2
    %v2570 = vadd.f32 %v2568, %v2569
    %v2571 = vrot.slane %v2570, 1
    %v2572 = vadd.f32 %v2570, %v2571
    %v2573 = vsel %vm223, %v2562, 0.0
    %v2574 = vsel %vm745, %v2563, 0.0
    %v2575 = vadd.f32 %v2573, %v2574
    %v2576 = vrot.slane %v2575, 4
    %v2577 = vadd.f32 %v2575, %v2576
    %v2578 = vrot.slane %v2577, 2
    %v2579 = vadd.f32 %v2577, %v2578
    %v2580 = vrot.slane %v2579, 1
    %v2581 = vadd.f32 %v2579, %v2580
    %s2582 = scalar_lea.vmem [#allocation3], 8
    %v2583 = vld [vmem:[%s2582] sm:$0x3]
    %v2586 = vsel %vm794, %v2581, %v2572
    %v2587 = vsel %vm223, %v2586, 0
    %2589 = vmatprep.subr.mxu0 0.0
    %2590 = vmatpush1.msra.mxu0 %v553
    %2591 = vmatprep.subr.mxu0 0.0
    %2592 = vmatpush1.msra.mxu0 %v554
    %2593 = vmatprep.subr.mxu0 0.0
    %2594 = vmatpush1.msra.mxu0 %v555
    %2595 = vmatprep.subr.mxu0 0.0
    %2596 = vmatpush1.msra.mxu0 %v556
    %2597 = vmatprep.subr.mxu0 0.0
    %2598 = vmatpush1.msra.mxu0 0.0
    %2599 = vmatprep.subr.mxu0 0.0
    %2600 = vmatpush1.msra.mxu0 0.0
    %2601 = vmatprep.subr.mxu0 0.0
    %2602 = vmatpush1.msra.mxu0 0.0
    %2603 = vmatprep.subr.mxu0 0.0
    %2604 = vmatpush1.msra.mxu0 0.0
    %2605 = vmatprep.subr.mxu0 0.0
    %2606 = vmatpush1.msra.mxu0 0.0
    %2607 = vmatprep.subr.mxu0 0.0
    %2608 = vmatpush1.msra.mxu0 0.0
    %2609 = vmatprep.subr.mxu0 0.0
    %2610 = vmatpush1.msra.mxu0 0.0
    %2611 = vmatprep.subr.mxu0 0.0
    %2612 = vmatpush1.msra.mxu0 0.0
    %2613 = vmatprep.subr.mxu0 0.0
    %2614 = vmatpush1.msra.mxu0 0.0
    %2615 = vmatprep.subr.mxu0 0.0
    %2616 = vmatpush1.msra.mxu0 0.0
    %2617 = vmatprep.subr.mxu0 0.0
    %2618 = vmatpush1.msra.mxu0 0.0
    %2619 = vmatprep.subr.mxu0 0.0
    %2620 = vmatpush1.msra.mxu0 0.0
    %2621 = vmatprep.subr.mxu0 0.0
    %2622 = vmatpush1.msra.mxu0 0.0
    %2623 = vmatprep.subr.mxu0 0.0
    %2624 = vmatpush1.msra.mxu0 0.0
    %2625 = vmatprep.subr.mxu0 0.0
    %2626 = vmatpush1.msra.mxu0 0.0
    %2627 = vmatprep.subr.mxu0 0.0
    %2628 = vmatpush1.msra.mxu0 0.0
    %2629 = vmatprep.subr.mxu0 0.0
    %2630 = vmatpush1.msra.mxu0 0.0
    %2631 = vmatprep.subr.mxu0 0.0
    %2632 = vmatpush1.msra.mxu0 0.0
    %2633 = vmatprep.subr.mxu0 0.0
    %2634 = vmatpush1.msra.mxu0 0.0
    %2635 = vmatprep.subr.mxu0 0.0
    %2636 = vmatpush1.msra.mxu0 0.0
    %2637 = vmatprep.subr.mxu0 0.0
    %2638 = vmatpush1.msra.mxu0 0.0
    %2639 = vmatprep.subr.mxu0 0.0
    %2640 = vmatpush1.msra.mxu0 0.0
    %2641 = vmatprep.subr.mxu0 0.0
    %2642 = vmatpush1.msra.mxu0 0.0
    %2643 = vmatprep.subr.mxu0 0.0
    %2644 = vmatpush1.msra.mxu0 0.0
    %2645 = vmatprep.subr.mxu0 0.0
    %2646 = vmatpush1.msra.mxu0 0.0
    %2647 = vmatprep.subr.mxu0 0.0
    %2648 = vmatpush1.msra.mxu0 0.0
    %2649 = vmatprep.subr.mxu0 0.0
    %2650 = vmatpush1.msra.mxu0 0.0
    %2651 = vmatprep.subr.mxu0 0.0
    %2652 = vmatpush1.msra.mxu0 0.0
    %2653 = vmatprep.mubr.f32.mxu0 0.0
    %2654 = vmatmul.mubr.f32.gmra.mrb[0].mxu0 %v2587
    %v2655 = vpop.f32.mrb[0].mxu0
    %v2656 = vadd.f32 0.0, %v2655
    %v2657 = vpop.f32.mrb[0].mxu0
    %2658 = vdwg.mxu0
    %v2659 = vadd.f32 %v2583, %v2656
    %2660 = vrot.lane.b32.xlu0 %v2370, 96
    %v2661 = vpop.permute.xlu0 %2660
    %v2663 = vadd.f32 %v2659, %v2661
    %v2664 = vxor.u32 %v2663, 2147483648
    %v2665 = vmul.f32 %v2664, 1.442695
    %v2666 = vpow.pop %v2665
    %v2667 = vadd.f32 %v2666, 1.0
    %v2668 = vrcp.pop %v2667
    %v2669 = vmul.f32 1.0, %v2668
    %2670 = vrot.lane.b32.xlu0 %v2370, 32
    %v2671 = vpop.permute.xlu0 %2670
    %v2673 = vmul.f32 %v2669, %v2671
    %2675 = vrot.lane.b32.xlu0 %v2673, 64
    %v2676 = vpop.permute.xlu0 %2675
    %v2678 = vadd.f32 %v2659, %v2676
    %v2679 = vtanh.pop %v2678
    %v2680 = vsub.f32 1.0, %v2669
    %2682 = vrot.lane.b32.xlu0 %v2679, 96
    %v2683 = vpop.permute.xlu0 %2682
    %v2685 = vmul.f32 %v2680, %v2683
    %v2686 = vmul.f32 %v2669, %v2272
    %v2687 = vadd.f32 %v2685, %v2686
    %2689 = vrot.lane.b32.xlu0 %v2687, 96
    %v2690 = vpop.permute.xlu0 %2689
    %s2692 = scalar_lea.vmem [#allocation2], 8
    %2693 = vst.msk [vmem:[%s2692] sm:$0x3] %vm745, %v2690
    %v2694 = vlaneseq
    %v2695 = vshrl.u32 %v2694, 7
    %v2696 = vsub.s32 %v773, %v2695
    %v2697 = vrot.slane %v2543, %v2696
    %v2698 = vlaneseq
    %v2699 = vshrl.u32 %v2698, 7
    %v2700 = vsub.s32 %v778, %v2699
    %v2701 = vrot.slane %v2548, %v2700
    %v2702 = vsel %vm783, %v2701, %v2697
    %v2703 = vlaneseq
    %v2704 = vshrl.u32 %v2703, 7
    %v2705 = vsub.s32 %v773, %v2704
    %v2706 = vrot.slane %v2553, %v2705
    %v2707 = vlaneseq
    %v2708 = vshrl.u32 %v2707, 7
    %v2709 = vsub.s32 %v778, %v2708
    %v2710 = vrot.slane %v2558, %v2709
    %v2711 = vsel %vm783, %v2710, %v2706
    %v2712 = vsel %vm794, %v2711, %v2702
    %s2714 = scalar_lea.vmem [#allocation15], 8
    %2715 = vst.msk [vmem:[%s2714] sm:$0x3] %vm797, %v2712
    %v2716 = vsel %vm223, %v2690, 0
    %2718 = vmatprep.subr.mxu0 0.0
    %2719 = vmatpush1.msra.mxu0 %v548
    %2720 = vmatprep.subr.mxu0 0.0
    %2721 = vmatpush1.msra.mxu0 %v549
    %2722 = vmatprep.subr.mxu0 0.0
    %2723 = vmatpush1.msra.mxu0 %v550
    %2724 = vmatprep.subr.mxu0 0.0
    %2725 = vmatpush1.msra.mxu0 %v551
    %2726 = vmatprep.subr.mxu0 0.0
    %2727 = vmatpush1.msra.mxu0 0.0
    %2728 = vmatprep.subr.mxu0 0.0
    %2729 = vmatpush1.msra.mxu0 0.0
    %2730 = vmatprep.subr.mxu0 0.0
    %2731 = vmatpush1.msra.mxu0 0.0
    %2732 = vmatprep.subr.mxu0 0.0
    %2733 = vmatpush1.msra.mxu0 0.0
    %2734 = vmatprep.subr.mxu0 0.0
    %2735 = vmatpush1.msra.mxu0 0.0
    %2736 = vmatprep.subr.mxu0 0.0
    %2737 = vmatpush1.msra.mxu0 0.0
    %2738 = vmatprep.subr.mxu0 0.0
    %2739 = vmatpush1.msra.mxu0 0.0
    %2740 = vmatprep.subr.mxu0 0.0
    %2741 = vmatpush1.msra.mxu0 0.0
    %2742 = vmatprep.subr.mxu0 0.0
    %2743 = vmatpush1.msra.mxu0 0.0
    %2744 = vmatprep.subr.mxu0 0.0
    %2745 = vmatpush1.msra.mxu0 0.0
    %2746 = vmatprep.subr.mxu0 0.0
    %2747 = vmatpush1.msra.mxu0 0.0
    %2748 = vmatprep.subr.mxu0 0.0
    %2749 = vmatpush1.msra.mxu0 0.0
    %2750 = vmatprep.subr.mxu0 0.0
    %2751 = vmatpush1.msra.mxu0 0.0
    %2752 = vmatprep.subr.mxu0 0.0
    %2753 = vmatpush1.msra.mxu0 0.0
    %2754 = vmatprep.subr.mxu0 0.0
    %2755 = vmatpush1.msra.mxu0 0.0
    %2756 = vmatprep.subr.mxu0 0.0
    %2757 = vmatpush1.msra.mxu0 0.0
    %2758 = vmatprep.subr.mxu0 0.0
    %2759 = vmatpush1.msra.mxu0 0.0
    %2760 = vmatprep.subr.mxu0 0.0
    %2761 = vmatpush1.msra.mxu0 0.0
    %2762 = vmatprep.subr.mxu0 0.0
    %2763 = vmatpush1.msra.mxu0 0.0
    %2764 = vmatprep.subr.mxu0 0.0
    %2765 = vmatpush1.msra.mxu0 0.0
    %2766 = vmatprep.subr.mxu0 0.0
    %2767 = vmatpush1.msra.mxu0 0.0
    %2768 = vmatprep.subr.mxu0 0.0
    %2769 = vmatpush1.msra.mxu0 0.0
    %2770 = vmatprep.subr.mxu0 0.0
    %2771 = vmatpush1.msra.mxu0 0.0
    %2772 = vmatprep.subr.mxu0 0.0
    %2773 = vmatpush1.msra.mxu0 0.0
    %2774 = vmatprep.subr.mxu0 0.0
    %2775 = vmatpush1.msra.mxu0 0.0
    %2776 = vmatprep.subr.mxu0 0.0
    %2777 = vmatpush1.msra.mxu0 0.0
    %2778 = vmatprep.subr.mxu0 0.0
    %2779 = vmatpush1.msra.mxu0 0.0
    %2780 = vmatprep.subr.mxu0 0.0
    %2781 = vmatpush1.msra.mxu0 0.0
    %2782 = vmatprep.mubr.f32.mxu0 0.0
    %2783 = vmatmul.mubr.f32.gmra.mrb[0].mxu0 %v2716
    %v2784 = vpop.f32.mrb[0].mxu0
    %v2785 = vadd.f32 %v564, %v2784
    %v2786 = vpop.f32.mrb[0].mxu0
    %2787 = vdwg.mxu0
    %v2790 = vunpack.c.l.s4 1966171168
    %v2791 = vunpack.c.0.s8 %v2790
    %v2792 = vlaneseq
    %v2793 = vshrl.u32 %v2792, 7
    %v2794 = vsub.s32 %v2791, %v2793
    %v2795 = vrot.slane %v2785, %v2794
    %v2796 = vcombine.high %v2795, %v2795
    %v2798 = vunpack.c.l.s4 1966171168
    %v2799 = vunpack.c.0.s8 %v2798
    %v2800 = vlaneseq
    %v2801 = vshrl.u32 %v2800, 7
    %v2802 = vsub.s32 %v2799, %v2801
    %v2803 = vrot.slane %v2795, %v2802
    %v2805 = vunpack.c.l.s4 1966171168
    %v2806 = vunpack.c.0.s8 %v2805
    %v2807 = vlaneseq
    %v2808 = vshrl.u32 %v2807, 7
    %v2809 = vsub.s32 %v2806, %v2808
    %v2810 = vrot.slane %v2796, %v2809
    %v2811 = vlaneseq
    %v2812 = vshrl.u32 %v2811, 7
    %v2813 = vsub.s32 0, %v2812
    %v2814 = vrot.slane %v2803, %v2813
    %v2815 = vlaneseq
    %v2816 = vshrl.u32 %v2815, 7
    %v2817 = vsub.s32 0, %v2816
    %v2818 = vrot.slane %v2810, %v2817
    %v2821 = vadd.f32 %v2814, %v688
    %v2822 = vadd.f32 %v2814, %v695
    %v2823 = vadd.f32 %v2818, %v712
    %v2824 = vadd.f32 %v2818, %v719
    %v2825 = vtanh.pop %v2821
    %v2826 = vtanh.pop %v2822
    %v2827 = vtanh.pop %v2823
    %v2828 = vtanh.pop %v2824
    %v2829 = vmul.f32 %v2825, %v736
    %v2830 = vmul.f32 %v2826, %v736
    %v2831 = vmul.f32 %v2827, %v736
    %v2832 = vmul.f32 %v2828, %v736
    %v2833 = vsel %vm223, %v2829, 0.0
    %2834 = vadd.xlane.f32.xlu0 %v2833
    %v2835 = vpop.xlane.xlu0 %2834
    %v2836 = vsel %vm745, %v2830, 0.0
    %2837 = vadd.xlane.f32.xlu0 %v2836
    %v2838 = vpop.xlane.xlu0 %2837
    %v2839 = vsel %vm223, %v2831, 0.0
    %2840 = vadd.xlane.f32.xlu0 %v2839
    %v2841 = vpop.xlane.xlu0 %2840
    %v2842 = vsel %vm745, %v2832, 0.0
    %2843 = vadd.xlane.f32.xlu0 %v2842
    %v2844 = vpop.xlane.xlu0 %2843
    %v2845 = vadd.f32 %v2835, %v762
    %v2846 = vadd.f32 %v2838, %v762
    %v2847 = vadd.f32 %v2841, %v762
    %v2848 = vadd.f32 %v2844, %v762
    %v2853 = vlaneseq
    %v2854 = vshrl.u32 %v2853, 7
    %v2855 = vsub.s32 %v773, %v2854
    %v2856 = vrot.slane %v2845, %v2855
    %v2857 = vlaneseq
    %v2858 = vshrl.u32 %v2857, 7
    %v2859 = vsub.s32 %v778, %v2858
    %v2860 = vrot.slane %v2846, %v2859
    %v2861 = vsel %vm783, %v2860, %v2856
    %v2862 = vlaneseq
    %v2863 = vshrl.u32 %v2862, 7
    %v2864 = vsub.s32 %v773, %v2863
    %v2865 = vrot.slane %v2847, %v2864
    %v2866 = vlaneseq
    %v2867 = vshrl.u32 %v2866, 7
    %v2868 = vsub.s32 %v778, %v2867
    %v2869 = vrot.slane %v2848, %v2868
    %v2870 = vsel %vm783, %v2869, %v2865
    %v2871 = vsel %vm794, %v2870, %v2861
    %v2873 = vsel %vm797, %v2871, -inf
    %2874 = vmax.xlane.f32.xlu0 %v2873
    %v2875 = vpop.xlane.xlu0 %2874
    %v2877 = vlaneseq
    %v2878 = vshrl.u32 %v2877, 7
    %v2879 = vsub.s32 0, %v2878
    %v2880 = vrot.slane %v2875, %v2879
    %v2881 = vlaneseq
    %v2882 = vshrl.u32 %v2881, 7
    %v2883 = vsub.s32 1, %v2882
    %v2884 = vrot.slane %v2875, %v2883
    %v2887 = vsub.f32 %v2845, %v2880
    %v2888 = vsub.f32 %v2846, %v2880
    %v2889 = vsub.f32 %v2847, %v2884
    %v2890 = vsub.f32 %v2848, %v2884
    %v2891 = vmul.f32 %v2887, 1.442695
    %v2892 = vpow.pop %v2891
    %v2893 = vmul.f32 %v2888, 1.442695
    %v2894 = vpow.pop %v2893
    %v2895 = vmul.f32 %v2889, 1.442695
    %v2896 = vpow.pop %v2895
    %v2897 = vmul.f32 %v2890, 1.442695
    %v2898 = vpow.pop %v2897
    %2903 = vset.pattern.permute.xlu0 0
    %2904 = vperm.xlu0 %2903, %v2892
    %v2905 = vpop.permute.xlu0 %2904
    %2906 = vset.pattern.permute.xlu0 0
    %2907 = vperm.xlu0 %2906, %v2894
    %v2908 = vpop.permute.xlu0 %2907
    %2909 = vset.pattern.permute.xlu0 0
    %2910 = vperm.xlu0 %2909, %v2896
    %v2911 = vpop.permute.xlu0 %2910
    %2912 = vset.pattern.permute.xlu0 0
    %2913 = vperm.xlu0 %2912, %v2898
    %v2914 = vpop.permute.xlu0 %2913
    %v2915 = vlaneseq
    %v2916 = vshrl.u32 %v2915, 7
    %v2917 = vsub.s32 %v773, %v2916
    %v2918 = vrot.slane %v2905, %v2917
    %v2919 = vlaneseq
    %v2920 = vshrl.u32 %v2919, 7
    %v2921 = vsub.s32 %v778, %v2920
    %v2922 = vrot.slane %v2908, %v2921
    %v2923 = vsel %vm783, %v2922, %v2918
    %v2924 = vlaneseq
    %v2925 = vshrl.u32 %v2924, 7
    %v2926 = vsub.s32 %v773, %v2925
    %v2927 = vrot.slane %v2911, %v2926
    %v2928 = vlaneseq
    %v2929 = vshrl.u32 %v2928, 7
    %v2930 = vsub.s32 %v778, %v2929
    %v2931 = vrot.slane %v2914, %v2930
    %v2932 = vsel %vm783, %v2931, %v2927
    %v2933 = vsel %vm794, %v2932, %v2923
    %v2935 = vsel %vm797, %v2933, 0.0
    %2936 = vadd.xlane.f32.xlu0 %v2935
    %v2937 = vpop.xlane.xlu0 %2936
    %v2939 = vlaneseq
    %v2940 = vshrl.u32 %v2939, 7
    %v2941 = vsub.s32 0, %v2940
    %v2942 = vrot.slane %v2937, %v2941
    %v2943 = vlaneseq
    %v2944 = vshrl.u32 %v2943, 7
    %v2945 = vsub.s32 1, %v2944
    %v2946 = vrot.slane %v2937, %v2945
    %v2949 = vrcp.pop %v2942
    %v2950 = vmul.f32 %v2892, %v2949
    %v2951 = vmul.f32 %v2894, %v2949
    %v2952 = vrcp.pop %v2946
    %v2953 = vmul.f32 %v2896, %v2952
    %v2954 = vmul.f32 %v2898, %v2952
    %2956 = vset.pattern.permute.xlu0 0
    %2957 = vperm.xlu0 %2956, %v2950
    %v2958 = vpop.permute.xlu0 %2957
    %2961 = vset.pattern.permute.xlu0 0
    %2962 = vperm.xlu0 %2961, %v2951
    %v2963 = vpop.permute.xlu0 %2962
    %2966 = vset.pattern.permute.xlu0 0
    %2967 = vperm.xlu0 %2966, %v2953
    %v2968 = vpop.permute.xlu0 %2967
    %2971 = vset.pattern.permute.xlu0 0
    %2972 = vperm.xlu0 %2971, %v2954
    %v2973 = vpop.permute.xlu0 %2972
    %v2975 = vmul.f32 %v2958, %v114
    %v2976 = vmul.f32 %v2963, %v115
    %v2977 = vmul.f32 %v2968, %v116
    %v2978 = vmul.f32 %v2973, %v117
    %v2979 = vsel %vm223, %v2975, 0.0
    %v2980 = vsel %vm745, %v2976, 0.0
    %v2981 = vadd.f32 %v2979, %v2980
    %v2982 = vrot.slane %v2981, 4
    %v2983 = vadd.f32 %v2981, %v2982
    %v2984 = vrot.slane %v2983, 2
    %v2985 = vadd.f32 %v2983, %v2984
    %v2986 = vrot.slane %v2985, 1
    %v2987 = vadd.f32 %v2985, %v2986
    %v2988 = vsel %vm223, %v2977, 0.0
    %v2989 = vsel %vm745, %v2978, 0.0
    %v2990 = vadd.f32 %v2988, %v2989
    %v2991 = vrot.slane %v2990, 4
    %v2992 = vadd.f32 %v2990, %v2991
    %v2993 = vrot.slane %v2992, 2
    %v2994 = vadd.f32 %v2992, %v2993
    %v2995 = vrot.slane %v2994, 1
    %v2996 = vadd.f32 %v2994, %v2995
    %s2997 = scalar_lea.vmem [#allocation3], 10
    %v2998 = vld [vmem:[%s2997] sm:$0x3]
    %v3001 = vsel %vm794, %v2996, %v2987
    %v3002 = vsel %vm223, %v3001, 0
    %3004 = vmatprep.subr.mxu0 0.0
    %3005 = vmatpush1.msra.mxu0 %v553
    %3006 = vmatprep.subr.mxu0 0.0
    %3007 = vmatpush1.msra.mxu0 %v554
    %3008 = vmatprep.subr.mxu0 0.0
    %3009 = vmatpush1.msra.mxu0 %v555
    %3010 = vmatprep.subr.mxu0 0.0
    %3011 = vmatpush1.msra.mxu0 %v556
    %3012 = vmatprep.subr.mxu0 0.0
    %3013 = vmatpush1.msra.mxu0 0.0
    %3014 = vmatprep.subr.mxu0 0.0
    %3015 = vmatpush1.msra.mxu0 0.0
    %3016 = vmatprep.subr.mxu0 0.0
    %3017 = vmatpush1.msra.mxu0 0.0
    %3018 = vmatprep.subr.mxu0 0.0
    %3019 = vmatpush1.msra.mxu0 0.0
    %3020 = vmatprep.subr.mxu0 0.0
    %3021 = vmatpush1.msra.mxu0 0.0
    %3022 = vmatprep.subr.mxu0 0.0
    %3023 = vmatpush1.msra.mxu0 0.0
    %3024 = vmatprep.subr.mxu0 0.0
    %3025 = vmatpush1.msra.mxu0 0.0
    %3026 = vmatprep.subr.mxu0 0.0
    %3027 = vmatpush1.msra.mxu0 0.0
    %3028 = vmatprep.subr.mxu0 0.0
    %3029 = vmatpush1.msra.mxu0 0.0
    %3030 = vmatprep.subr.mxu0 0.0
    %3031 = vmatpush1.msra.mxu0 0.0
    %3032 = vmatprep.subr.mxu0 0.0
    %3033 = vmatpush1.msra.mxu0 0.0
    %3034 = vmatprep.subr.mxu0 0.0
    %3035 = vmatpush1.msra.mxu0 0.0
    %3036 = vmatprep.subr.mxu0 0.0
    %3037 = vmatpush1.msra.mxu0 0.0
    %3038 = vmatprep.subr.mxu0 0.0
    %3039 = vmatpush1.msra.mxu0 0.0
    %3040 = vmatprep.subr.mxu0 0.0
    %3041 = vmatpush1.msra.mxu0 0.0
    %3042 = vmatprep.subr.mxu0 0.0
    %3043 = vmatpush1.msra.mxu0 0.0
    %3044 = vmatprep.subr.mxu0 0.0
    %3045 = vmatpush1.msra.mxu0 0.0
    %3046 = vmatprep.subr.mxu0 0.0
    %3047 = vmatpush1.msra.mxu0 0.0
    %3048 = vmatprep.subr.mxu0 0.0
    %3049 = vmatpush1.msra.mxu0 0.0
    %3050 = vmatprep.subr.mxu0 0.0
    %3051 = vmatpush1.msra.mxu0 0.0
    %3052 = vmatprep.subr.mxu0 0.0
    %3053 = vmatpush1.msra.mxu0 0.0
    %3054 = vmatprep.subr.mxu0 0.0
    %3055 = vmatpush1.msra.mxu0 0.0
    %3056 = vmatprep.subr.mxu0 0.0
    %3057 = vmatpush1.msra.mxu0 0.0
    %3058 = vmatprep.subr.mxu0 0.0
    %3059 = vmatpush1.msra.mxu0 0.0
    %3060 = vmatprep.subr.mxu0 0.0
    %3061 = vmatpush1.msra.mxu0 0.0
    %3062 = vmatprep.subr.mxu0 0.0
    %3063 = vmatpush1.msra.mxu0 0.0
    %3064 = vmatprep.subr.mxu0 0.0
    %3065 = vmatpush1.msra.mxu0 0.0
    %3066 = vmatprep.subr.mxu0 0.0
    %3067 = vmatpush1.msra.mxu0 0.0
    %3068 = vmatprep.mubr.f32.mxu0 0.0
    %3069 = vmatmul.mubr.f32.gmra.mrb[0].mxu0 %v3002
    %v3070 = vpop.f32.mrb[0].mxu0
    %v3071 = vadd.f32 0.0, %v3070
    %v3072 = vpop.f32.mrb[0].mxu0
    %3073 = vdwg.mxu0
    %v3074 = vadd.f32 %v2998, %v3071
    %3075 = vrot.lane.b32.xlu0 %v2785, 96
    %v3076 = vpop.permute.xlu0 %3075
    %v3078 = vadd.f32 %v3074, %v3076
    %v3079 = vxor.u32 %v3078, 2147483648
    %v3080 = vmul.f32 %v3079, 1.442695
    %v3081 = vpow.pop %v3080
    %v3082 = vadd.f32 %v3081, 1.0
    %v3083 = vrcp.pop %v3082
    %v3084 = vmul.f32 1.0, %v3083
    %3085 = vrot.lane.b32.xlu0 %v2785, 32
    %v3086 = vpop.permute.xlu0 %3085
    %v3088 = vmul.f32 %v3084, %v3086
    %3090 = vrot.lane.b32.xlu0 %v3088, 64
    %v3091 = vpop.permute.xlu0 %3090
    %v3093 = vadd.f32 %v3074, %v3091
    %v3094 = vtanh.pop %v3093
    %v3095 = vsub.f32 1.0, %v3084
    %3097 = vrot.lane.b32.xlu0 %v3094, 96
    %v3098 = vpop.permute.xlu0 %3097
    %v3100 = vmul.f32 %v3095, %v3098
    %v3101 = vmul.f32 %v3084, %v2687
    %v3102 = vadd.f32 %v3100, %v3101
    %3104 = vrot.lane.b32.xlu0 %v3102, 96
    %v3105 = vpop.permute.xlu0 %3104
    %s3107 = scalar_lea.vmem [#allocation2], 10
    %3108 = vst.msk [vmem:[%s3107] sm:$0x3] %vm745, %v3105
    %v3109 = vlaneseq
    %v3110 = vshrl.u32 %v3109, 7
    %v3111 = vsub.s32 %v773, %v3110
    %v3112 = vrot.slane %v2958, %v3111
    %v3113 = vlaneseq
    %v3114 = vshrl.u32 %v3113, 7
    %v3115 = vsub.s32 %v778, %v3114
    %v3116 = vrot.slane %v2963, %v3115
    %v3117 = vsel %vm783, %v3116, %v3112
    %v3118 = vlaneseq
    %v3119 = vshrl.u32 %v3118, 7
    %v3120 = vsub.s32 %v773, %v3119
    %v3121 = vrot.slane %v2968, %v3120
    %v3122 = vlaneseq
    %v3123 = vshrl.u32 %v3122, 7
    %v3124 = vsub.s32 %v778, %v3123
    %v3125 = vrot.slane %v2973, %v3124
    %v3126 = vsel %vm783, %v3125, %v3121
    %v3127 = vsel %vm794, %v3126, %v3117
    %s3129 = scalar_lea.vmem [#allocation15], 10
    %3130 = vst.msk [vmem:[%s3129] sm:$0x3] %vm797, %v3127
    %v3131 = vsel %vm223, %v3105, 0
    %3133 = vmatprep.subr.mxu0 0.0
    %3134 = vmatpush1.msra.mxu0 %v548
    %3135 = vmatprep.subr.mxu0 0.0
    %3136 = vmatpush1.msra.mxu0 %v549
    %3137 = vmatprep.subr.mxu0 0.0
    %3138 = vmatpush1.msra.mxu0 %v550
    %3139 = vmatprep.subr.mxu0 0.0
    %3140 = vmatpush1.msra.mxu0 %v551
    %3141 = vmatprep.subr.mxu0 0.0
    %3142 = vmatpush1.msra.mxu0 0.0
    %3143 = vmatprep.subr.mxu0 0.0
    %3144 = vmatpush1.msra.mxu0 0.0
    %3145 = vmatprep.subr.mxu0 0.0
    %3146 = vmatpush1.msra.mxu0 0.0
    %3147 = vmatprep.subr.mxu0 0.0
    %3148 = vmatpush1.msra.mxu0 0.0
    %3149 = vmatprep.subr.mxu0 0.0
    %3150 = vmatpush1.msra.mxu0 0.0
    %3151 = vmatprep.subr.mxu0 0.0
    %3152 = vmatpush1.msra.mxu0 0.0
    %3153 = vmatprep.subr.mxu0 0.0
    %3154 = vmatpush1.msra.mxu0 0.0
    %3155 = vmatprep.subr.mxu0 0.0
    %3156 = vmatpush1.msra.mxu0 0.0
    %3157 = vmatprep.subr.mxu0 0.0
    %3158 = vmatpush1.msra.mxu0 0.0
    %3159 = vmatprep.subr.mxu0 0.0
    %3160 = vmatpush1.msra.mxu0 0.0
    %3161 = vmatprep.subr.mxu0 0.0
    %3162 = vmatpush1.msra.mxu0 0.0
    %3163 = vmatprep.subr.mxu0 0.0
    %3164 = vmatpush1.msra.mxu0 0.0
    %3165 = vmatprep.subr.mxu0 0.0
    %3166 = vmatpush1.msra.mxu0 0.0
    %3167 = vmatprep.subr.mxu0 0.0
    %3168 = vmatpush1.msra.mxu0 0.0
    %3169 = vmatprep.subr.mxu0 0.0
    %3170 = vmatpush1.msra.mxu0 0.0
    %3171 = vmatprep.subr.mxu0 0.0
    %3172 = vmatpush1.msra.mxu0 0.0
    %3173 = vmatprep.subr.mxu0 0.0
    %3174 = vmatpush1.msra.mxu0 0.0
    %3175 = vmatprep.subr.mxu0 0.0
    %3176 = vmatpush1.msra.mxu0 0.0
    %3177 = vmatprep.subr.mxu0 0.0
    %3178 = vmatpush1.msra.mxu0 0.0
    %3179 = vmatprep.subr.mxu0 0.0
    %3180 = vmatpush1.msra.mxu0 0.0
    %3181 = vmatprep.subr.mxu0 0.0
    %3182 = vmatpush1.msra.mxu0 0.0
    %3183 = vmatprep.subr.mxu0 0.0
    %3184 = vmatpush1.msra.mxu0 0.0
    %3185 = vmatprep.subr.mxu0 0.0
    %3186 = vmatpush1.msra.mxu0 0.0
    %3187 = vmatprep.subr.mxu0 0.0
    %3188 = vmatpush1.msra.mxu0 0.0
    %3189 = vmatprep.subr.mxu0 0.0
    %3190 = vmatpush1.msra.mxu0 0.0
    %3191 = vmatprep.subr.mxu0 0.0
    %3192 = vmatpush1.msra.mxu0 0.0
    %3193 = vmatprep.subr.mxu0 0.0
    %3194 = vmatpush1.msra.mxu0 0.0
    %3195 = vmatprep.subr.mxu0 0.0
    %3196 = vmatpush1.msra.mxu0 0.0
    %3197 = vmatprep.mubr.f32.mxu0 0.0
    %3198 = vmatmul.mubr.f32.gmra.mrb[0].mxu0 %v3131
    %v3199 = vpop.f32.mrb[0].mxu0
    %v3200 = vadd.f32 %v564, %v3199
    %v3201 = vpop.f32.mrb[0].mxu0
    %3202 = vdwg.mxu0
    %v3205 = vunpack.c.l.s4 1966171168
    %v3206 = vunpack.c.0.s8 %v3205
    %v3207 = vlaneseq
    %v3208 = vshrl.u32 %v3207, 7
    %v3209 = vsub.s32 %v3206, %v3208
    %v3210 = vrot.slane %v3200, %v3209
    %v3211 = vcombine.high %v3210, %v3210
    %v3213 = vunpack.c.l.s4 1966171168
    %v3214 = vunpack.c.0.s8 %v3213
    %v3215 = vlaneseq
    %v3216 = vshrl.u32 %v3215, 7
    %v3217 = vsub.s32 %v3214, %v3216
    %v3218 = vrot.slane %v3210, %v3217
    %v3220 = vunpack.c.l.s4 1966171168
    %v3221 = vunpack.c.0.s8 %v3220
    %v3222 = vlaneseq
    %v3223 = vshrl.u32 %v3222, 7
    %v3224 = vsub.s32 %v3221, %v3223
    %v3225 = vrot.slane %v3211, %v3224
    %v3226 = vlaneseq
    %v3227 = vshrl.u32 %v3226, 7
    %v3228 = vsub.s32 0, %v3227
    %v3229 = vrot.slane %v3218, %v3228
    %v3230 = vlaneseq
    %v3231 = vshrl.u32 %v3230, 7
    %v3232 = vsub.s32 0, %v3231
    %v3233 = vrot.slane %v3225, %v3232
    %v3236 = vadd.f32 %v3229, %v688
    %v3237 = vadd.f32 %v3229, %v695
    %v3238 = vadd.f32 %v3233, %v712
    %v3239 = vadd.f32 %v3233, %v719
    %v3240 = vtanh.pop %v3236
    %v3241 = vtanh.pop %v3237
    %v3242 = vtanh.pop %v3238
    %v3243 = vtanh.pop %v3239
    %v3244 = vmul.f32 %v3240, %v736
    %v3245 = vmul.f32 %v3241, %v736
    %v3246 = vmul.f32 %v3242, %v736
    %v3247 = vmul.f32 %v3243, %v736
    %v3248 = vsel %vm223, %v3244, 0.0
    %3249 = vadd.xlane.f32.xlu0 %v3248
    %v3250 = vpop.xlane.xlu0 %3249
    %v3251 = vsel %vm745, %v3245, 0.0
    %3252 = vadd.xlane.f32.xlu0 %v3251
    %v3253 = vpop.xlane.xlu0 %3252
    %v3254 = vsel %vm223, %v3246, 0.0
    %3255 = vadd.xlane.f32.xlu0 %v3254
    %v3256 = vpop.xlane.xlu0 %3255
    %v3257 = vsel %vm745, %v3247, 0.0
    %3258 = vadd.xlane.f32.xlu0 %v3257
    %v3259 = vpop.xlane.xlu0 %3258
    %v3260 = vadd.f32 %v3250, %v762
    %v3261 = vadd.f32 %v3253, %v762
    %v3262 = vadd.f32 %v3256, %v762
    %v3263 = vadd.f32 %v3259, %v762
    %v3268 = vlaneseq
    %v3269 = vshrl.u32 %v3268, 7
    %v3270 = vsub.s32 %v773, %v3269
    %v3271 = vrot.slane %v3260, %v3270
    %v3272 = vlaneseq
    %v3273 = vshrl.u32 %v3272, 7
    %v3274 = vsub.s32 %v778, %v3273
    %v3275 = vrot.slane %v3261, %v3274
    %v3276 = vsel %vm783, %v3275, %v3271
    %v3277 = vlaneseq
    %v3278 = vshrl.u32 %v3277, 7
    %v3279 = vsub.s32 %v773, %v3278
    %v3280 = vrot.slane %v3262, %v3279
    %v3281 = vlaneseq
    %v3282 = vshrl.u32 %v3281, 7
    %v3283 = vsub.s32 %v778, %v3282
    %v3284 = vrot.slane %v3263, %v3283
    %v3285 = vsel %vm783, %v3284, %v3280
    %v3286 = vsel %vm794, %v3285, %v3276
    %v3288 = vsel %vm797, %v3286, -inf
    %3289 = vmax.xlane.f32.xlu0 %v3288
    %v3290 = vpop.xlane.xlu0 %3289
    %v3292 = vlaneseq
    %v3293 = vshrl.u32 %v3292, 7
    %v3294 = vsub.s32 0, %v3293
    %v3295 = vrot.slane %v3290, %v3294
    %v3296 = vlaneseq
    %v3297 = vshrl.u32 %v3296, 7
    %v3298 = vsub.s32 1, %v3297
    %v3299 = vrot.slane %v3290, %v3298
    %v3302 = vsub.f32 %v3260, %v3295
    %v3303 = vsub.f32 %v3261, %v3295
    %v3304 = vsub.f32 %v3262, %v3299
    %v3305 = vsub.f32 %v3263, %v3299
    %v3306 = vmul.f32 %v3302, 1.442695
    %v3307 = vpow.pop %v3306
    %v3308 = vmul.f32 %v3303, 1.442695
    %v3309 = vpow.pop %v3308
    %v3310 = vmul.f32 %v3304, 1.442695
    %v3311 = vpow.pop %v3310
    %v3312 = vmul.f32 %v3305, 1.442695
    %v3313 = vpow.pop %v3312
    %3318 = vset.pattern.permute.xlu0 0
    %3319 = vperm.xlu0 %3318, %v3307
    %v3320 = vpop.permute.xlu0 %3319
    %3321 = vset.pattern.permute.xlu0 0
    %3322 = vperm.xlu0 %3321, %v3309
    %v3323 = vpop.permute.xlu0 %3322
    %3324 = vset.pattern.permute.xlu0 0
    %3325 = vperm.xlu0 %3324, %v3311
    %v3326 = vpop.permute.xlu0 %3325
    %3327 = vset.pattern.permute.xlu0 0
    %3328 = vperm.xlu0 %3327, %v3313
    %v3329 = vpop.permute.xlu0 %3328
    %v3330 = vlaneseq
    %v3331 = vshrl.u32 %v3330, 7
    %v3332 = vsub.s32 %v773, %v3331
    %v3333 = vrot.slane %v3320, %v3332
    %v3334 = vlaneseq
    %v3335 = vshrl.u32 %v3334, 7
    %v3336 = vsub.s32 %v778, %v3335
    %v3337 = vrot.slane %v3323, %v3336
    %v3338 = vsel %vm783, %v3337, %v3333
    %v3339 = vlaneseq
    %v3340 = vshrl.u32 %v3339, 7
    %v3341 = vsub.s32 %v773, %v3340
    %v3342 = vrot.slane %v3326, %v3341
    %v3343 = vlaneseq
    %v3344 = vshrl.u32 %v3343, 7
    %v3345 = vsub.s32 %v778, %v3344
    %v3346 = vrot.slane %v3329, %v3345
    %v3347 = vsel %vm783, %v3346, %v3342
    %v3348 = vsel %vm794, %v3347, %v3338
    %v3350 = vsel %vm797, %v3348, 0.0
    %3351 = vadd.xlane.f32.xlu0 %v3350
    %v3352 = vpop.xlane.xlu0 %3351
    %v3354 = vlaneseq
    %v3355 = vshrl.u32 %v3354, 7
    %v3356 = vsub.s32 0, %v3355
    %v3357 = vrot.slane %v3352, %v3356
    %v3358 = vlaneseq
    %v3359 = vshrl.u32 %v3358, 7
    %v3360 = vsub.s32 1, %v3359
    %v3361 = vrot.slane %v3352, %v3360
    %v3364 = vrcp.pop %v3357
    %v3365 = vmul.f32 %v3307, %v3364
    %v3366 = vmul.f32 %v3309, %v3364
    %v3367 = vrcp.pop %v3361
    %v3368 = vmul.f32 %v3311, %v3367
    %v3369 = vmul.f32 %v3313, %v3367
    %3371 = vset.pattern.permute.xlu0 0
    %3372 = vperm.xlu0 %3371, %v3365
    %v3373 = vpop.permute.xlu0 %3372
    %3376 = vset.pattern.permute.xlu0 0
    %3377 = vperm.xlu0 %3376, %v3366
    %v3378 = vpop.permute.xlu0 %3377
    %3381 = vset.pattern.permute.xlu0 0
    %3382 = vperm.xlu0 %3381, %v3368
    %v3383 = vpop.permute.xlu0 %3382
    %3386 = vset.pattern.permute.xlu0 0
    %3387 = vperm.xlu0 %3386, %v3369
    %v3388 = vpop.permute.xlu0 %3387
    %v3390 = vmul.f32 %v3373, %v114
    %v3391 = vmul.f32 %v3378, %v115
    %v3392 = vmul.f32 %v3383, %v116
    %v3393 = vmul.f32 %v3388, %v117
    %v3394 = vsel %vm223, %v3390, 0.0
    %v3395 = vsel %vm745, %v3391, 0.0
    %v3396 = vadd.f32 %v3394, %v3395
    %v3397 = vrot.slane %v3396, 4
    %v3398 = vadd.f32 %v3396, %v3397
    %v3399 = vrot.slane %v3398, 2
    %v3400 = vadd.f32 %v3398, %v3399
    %v3401 = vrot.slane %v3400, 1
    %v3402 = vadd.f32 %v3400, %v3401
    %v3403 = vsel %vm223, %v3392, 0.0
    %v3404 = vsel %vm745, %v3393, 0.0
    %v3405 = vadd.f32 %v3403, %v3404
    %v3406 = vrot.slane %v3405, 4
    %v3407 = vadd.f32 %v3405, %v3406
    %v3408 = vrot.slane %v3407, 2
    %v3409 = vadd.f32 %v3407, %v3408
    %v3410 = vrot.slane %v3409, 1
    %v3411 = vadd.f32 %v3409, %v3410
    %s3412 = scalar_lea.vmem [#allocation3], 12
    %v3413 = vld [vmem:[%s3412] sm:$0x3]
    %v3416 = vsel %vm794, %v3411, %v3402
    %v3417 = vsel %vm223, %v3416, 0
    %3419 = vmatprep.subr.mxu0 0.0
    %3420 = vmatpush1.msra.mxu0 %v553
    %3421 = vmatprep.subr.mxu0 0.0
    %3422 = vmatpush1.msra.mxu0 %v554
    %3423 = vmatprep.subr.mxu0 0.0
    %3424 = vmatpush1.msra.mxu0 %v555
    %3425 = vmatprep.subr.mxu0 0.0
    %3426 = vmatpush1.msra.mxu0 %v556
    %3427 = vmatprep.subr.mxu0 0.0
    %3428 = vmatpush1.msra.mxu0 0.0
    %3429 = vmatprep.subr.mxu0 0.0
    %3430 = vmatpush1.msra.mxu0 0.0
    %3431 = vmatprep.subr.mxu0 0.0
    %3432 = vmatpush1.msra.mxu0 0.0
    %3433 = vmatprep.subr.mxu0 0.0
    %3434 = vmatpush1.msra.mxu0 0.0
    %3435 = vmatprep.subr.mxu0 0.0
    %3436 = vmatpush1.msra.mxu0 0.0
    %3437 = vmatprep.subr.mxu0 0.0
    %3438 = vmatpush1.msra.mxu0 0.0
    %3439 = vmatprep.subr.mxu0 0.0
    %3440 = vmatpush1.msra.mxu0 0.0
    %3441 = vmatprep.subr.mxu0 0.0
    %3442 = vmatpush1.msra.mxu0 0.0
    %3443 = vmatprep.subr.mxu0 0.0
    %3444 = vmatpush1.msra.mxu0 0.0
    %3445 = vmatprep.subr.mxu0 0.0
    %3446 = vmatpush1.msra.mxu0 0.0
    %3447 = vmatprep.subr.mxu0 0.0
    %3448 = vmatpush1.msra.mxu0 0.0
    %3449 = vmatprep.subr.mxu0 0.0
    %3450 = vmatpush1.msra.mxu0 0.0
    %3451 = vmatprep.subr.mxu0 0.0
    %3452 = vmatpush1.msra.mxu0 0.0
    %3453 = vmatprep.subr.mxu0 0.0
    %3454 = vmatpush1.msra.mxu0 0.0
    %3455 = vmatprep.subr.mxu0 0.0
    %3456 = vmatpush1.msra.mxu0 0.0
    %3457 = vmatprep.subr.mxu0 0.0
    %3458 = vmatpush1.msra.mxu0 0.0
    %3459 = vmatprep.subr.mxu0 0.0
    %3460 = vmatpush1.msra.mxu0 0.0
    %3461 = vmatprep.subr.mxu0 0.0
    %3462 = vmatpush1.msra.mxu0 0.0
    %3463 = vmatprep.subr.mxu0 0.0
    %3464 = vmatpush1.msra.mxu0 0.0
    %3465 = vmatprep.subr.mxu0 0.0
    %3466 = vmatpush1.msra.mxu0 0.0
    %3467 = vmatprep.subr.mxu0 0.0
    %3468 = vmatpush1.msra.mxu0 0.0
    %3469 = vmatprep.subr.mxu0 0.0
    %3470 = vmatpush1.msra.mxu0 0.0
    %3471 = vmatprep.subr.mxu0 0.0
    %3472 = vmatpush1.msra.mxu0 0.0
    %3473 = vmatprep.subr.mxu0 0.0
    %3474 = vmatpush1.msra.mxu0 0.0
    %3475 = vmatprep.subr.mxu0 0.0
    %3476 = vmatpush1.msra.mxu0 0.0
    %3477 = vmatprep.subr.mxu0 0.0
    %3478 = vmatpush1.msra.mxu0 0.0
    %3479 = vmatprep.subr.mxu0 0.0
    %3480 = vmatpush1.msra.mxu0 0.0
    %3481 = vmatprep.subr.mxu0 0.0
    %3482 = vmatpush1.msra.mxu0 0.0
    %3483 = vmatprep.mubr.f32.mxu0 0.0
    %3484 = vmatmul.mubr.f32.gmra.mrb[0].mxu0 %v3417
    %v3485 = vpop.f32.mrb[0].mxu0
    %v3486 = vadd.f32 0.0, %v3485
    %v3487 = vpop.f32.mrb[0].mxu0
    %3488 = vdwg.mxu0
    %v3489 = vadd.f32 %v3413, %v3486
    %3490 = vrot.lane.b32.xlu0 %v3200, 96
    %v3491 = vpop.permute.xlu0 %3490
    %v3493 = vadd.f32 %v3489, %v3491
    %v3494 = vxor.u32 %v3493, 2147483648
    %v3495 = vmul.f32 %v3494, 1.442695
    %v3496 = vpow.pop %v3495
    %v3497 = vadd.f32 %v3496, 1.0
    %v3498 = vrcp.pop %v3497
    %v3499 = vmul.f32 1.0, %v3498
    %3500 = vrot.lane.b32.xlu0 %v3200, 32
    %v3501 = vpop.permute.xlu0 %3500
    %v3503 = vmul.f32 %v3499, %v3501
    %3505 = vrot.lane.b32.xlu0 %v3503, 64
    %v3506 = vpop.permute.xlu0 %3505
    %v3508 = vadd.f32 %v3489, %v3506
    %v3509 = vtanh.pop %v3508
    %v3510 = vsub.f32 1.0, %v3499
    %3512 = vrot.lane.b32.xlu0 %v3509, 96
    %v3513 = vpop.permute.xlu0 %3512
    %v3515 = vmul.f32 %v3510, %v3513
    %v3516 = vmul.f32 %v3499, %v3102
    %v3517 = vadd.f32 %v3515, %v3516
    %3519 = vrot.lane.b32.xlu0 %v3517, 96
    %v3520 = vpop.permute.xlu0 %3519
    %s3522 = scalar_lea.vmem [#allocation2], 12
    %3523 = vst.msk [vmem:[%s3522] sm:$0x3] %vm745, %v3520
    %v3524 = vlaneseq
    %v3525 = vshrl.u32 %v3524, 7
    %v3526 = vsub.s32 %v773, %v3525
    %v3527 = vrot.slane %v3373, %v3526
    %v3528 = vlaneseq
    %v3529 = vshrl.u32 %v3528, 7
    %v3530 = vsub.s32 %v778, %v3529
    %v3531 = vrot.slane %v3378, %v3530
    %v3532 = vsel %vm783, %v3531, %v3527
    %v3533 = vlaneseq
    %v3534 = vshrl.u32 %v3533, 7
    %v3535 = vsub.s32 %v773, %v3534
    %v3536 = vrot.slane %v3383, %v3535
    %v3537 = vlaneseq
    %v3538 = vshrl.u32 %v3537, 7
    %v3539 = vsub.s32 %v778, %v3538
    %v3540 = vrot.slane %v3388, %v3539
    %v3541 = vsel %vm783, %v3540, %v3536
    %v3542 = vsel %vm794, %v3541, %v3532
    %s3544 = scalar_lea.vmem [#allocation15], 12
    %3545 = vst.msk [vmem:[%s3544] sm:$0x3] %vm797, %v3542
    %v3546 = vsel %vm223, %v3520, 0
    %3548 = vmatprep.subr.mxu0 0.0
    %3549 = vmatpush1.msra.mxu0 %v548
    %3550 = vmatprep.subr.mxu0 0.0
    %3551 = vmatpush1.msra.mxu0 %v549
    %3552 = vmatprep.subr.mxu0 0.0
    %3553 = vmatpush1.msra.mxu0 %v550
    %3554 = vmatprep.subr.mxu0 0.0
    %3555 = vmatpush1.msra.mxu0 %v551
    %3556 = vmatprep.subr.mxu0 0.0
    %3557 = vmatpush1.msra.mxu0 0.0
    %3558 = vmatprep.subr.mxu0 0.0
    %3559 = vmatpush1.msra.mxu0 0.0
    %3560 = vmatprep.subr.mxu0 0.0
    %3561 = vmatpush1.msra.mxu0 0.0
    %3562 = vmatprep.subr.mxu0 0.0
    %3563 = vmatpush1.msra.mxu0 0.0
    %3564 = vmatprep.subr.mxu0 0.0
    %3565 = vmatpush1.msra.mxu0 0.0
    %3566 = vmatprep.subr.mxu0 0.0
    %3567 = vmatpush1.msra.mxu0 0.0
    %3568 = vmatprep.subr.mxu0 0.0
    %3569 = vmatpush1.msra.mxu0 0.0
    %3570 = vmatprep.subr.mxu0 0.0
    %3571 = vmatpush1.msra.mxu0 0.0
    %3572 = vmatprep.subr.mxu0 0.0
    %3573 = vmatpush1.msra.mxu0 0.0
    %3574 = vmatprep.subr.mxu0 0.0
    %3575 = vmatpush1.msra.mxu0 0.0
    %3576 = vmatprep.subr.mxu0 0.0
    %3577 = vmatpush1.msra.mxu0 0.0
    %3578 = vmatprep.subr.mxu0 0.0
    %3579 = vmatpush1.msra.mxu0 0.0
    %3580 = vmatprep.subr.mxu0 0.0
    %3581 = vmatpush1.msra.mxu0 0.0
    %3582 = vmatprep.subr.mxu0 0.0
    %3583 = vmatpush1.msra.mxu0 0.0
    %3584 = vmatprep.subr.mxu0 0.0
    %3585 = vmatpush1.msra.mxu0 0.0
    %3586 = vmatprep.subr.mxu0 0.0
    %3587 = vmatpush1.msra.mxu0 0.0
    %3588 = vmatprep.subr.mxu0 0.0
    %3589 = vmatpush1.msra.mxu0 0.0
    %3590 = vmatprep.subr.mxu0 0.0
    %3591 = vmatpush1.msra.mxu0 0.0
    %3592 = vmatprep.subr.mxu0 0.0
    %3593 = vmatpush1.msra.mxu0 0.0
    %3594 = vmatprep.subr.mxu0 0.0
    %3595 = vmatpush1.msra.mxu0 0.0
    %3596 = vmatprep.subr.mxu0 0.0
    %3597 = vmatpush1.msra.mxu0 0.0
    %3598 = vmatprep.subr.mxu0 0.0
    %3599 = vmatpush1.msra.mxu0 0.0
    %3600 = vmatprep.subr.mxu0 0.0
    %3601 = vmatpush1.msra.mxu0 0.0
    %3602 = vmatprep.subr.mxu0 0.0
    %3603 = vmatpush1.msra.mxu0 0.0
    %3604 = vmatprep.subr.mxu0 0.0
    %3605 = vmatpush1.msra.mxu0 0.0
    %3606 = vmatprep.subr.mxu0 0.0
    %3607 = vmatpush1.msra.mxu0 0.0
    %3608 = vmatprep.subr.mxu0 0.0
    %3609 = vmatpush1.msra.mxu0 0.0
    %3610 = vmatprep.subr.mxu0 0.0
    %3611 = vmatpush1.msra.mxu0 0.0
    %3612 = vmatprep.mubr.f32.mxu0 0.0
    %3613 = vmatmul.mubr.f32.gmra.mrb[0].mxu0 %v3546
    %v3614 = vpop.f32.mrb[0].mxu0
    %v3615 = vadd.f32 %v564, %v3614
    %v3616 = vpop.f32.mrb[0].mxu0
    %3617 = vdwg.mxu0
    %v3620 = vunpack.c.l.s4 1966171168
    %v3621 = vunpack.c.0.s8 %v3620
    %v3622 = vlaneseq
    %v3623 = vshrl.u32 %v3622, 7
    %v3624 = vsub.s32 %v3621, %v3623
    %v3625 = vrot.slane %v3615, %v3624
    %v3626 = vcombine.high %v3625, %v3625
    %v3628 = vunpack.c.l.s4 1966171168
    %v3629 = vunpack.c.0.s8 %v3628
    %v3630 = vlaneseq
    %v3631 = vshrl.u32 %v3630, 7
    %v3632 = vsub.s32 %v3629, %v3631
    %v3633 = vrot.slane %v3625, %v3632
    %v3635 = vunpack.c.l.s4 1966171168
    %v3636 = vunpack.c.0.s8 %v3635
    %v3637 = vlaneseq
    %v3638 = vshrl.u32 %v3637, 7
    %v3639 = vsub.s32 %v3636, %v3638
    %v3640 = vrot.slane %v3626, %v3639
    %v3641 = vlaneseq
    %v3642 = vshrl.u32 %v3641, 7
    %v3643 = vsub.s32 0, %v3642
    %v3644 = vrot.slane %v3633, %v3643
    %v3645 = vlaneseq
    %v3646 = vshrl.u32 %v3645, 7
    %v3647 = vsub.s32 0, %v3646
    %v3648 = vrot.slane %v3640, %v3647
    %v3651 = vadd.f32 %v3644, %v688
    %v3652 = vadd.f32 %v3644, %v695
    %v3653 = vadd.f32 %v3648, %v712
    %v3654 = vadd.f32 %v3648, %v719
    %v3655 = vtanh.pop %v3651
    %v3656 = vtanh.pop %v3652
    %v3657 = vtanh.pop %v3653
    %v3658 = vtanh.pop %v3654
    %v3659 = vmul.f32 %v3655, %v736
    %v3660 = vmul.f32 %v3656, %v736
    %v3661 = vmul.f32 %v3657, %v736
    %v3662 = vmul.f32 %v3658, %v736
    %v3663 = vsel %vm223, %v3659, 0.0
    %3664 = vadd.xlane.f32.xlu0 %v3663
    %v3665 = vpop.xlane.xlu0 %3664
    %v3666 = vsel %vm745, %v3660, 0.0
    %3667 = vadd.xlane.f32.xlu0 %v3666
    %v3668 = vpop.xlane.xlu0 %3667
    %v3669 = vsel %vm223, %v3661, 0.0
    %3670 = vadd.xlane.f32.xlu0 %v3669
    %v3671 = vpop.xlane.xlu0 %3670
    %v3672 = vsel %vm745, %v3662, 0.0
    %3673 = vadd.xlane.f32.xlu0 %v3672
    %v3674 = vpop.xlane.xlu0 %3673
    %v3675 = vadd.f32 %v3665, %v762
    %v3676 = vadd.f32 %v3668, %v762
    %v3677 = vadd.f32 %v3671, %v762
    %v3678 = vadd.f32 %v3674, %v762
    %v3683 = vlaneseq
    %v3684 = vshrl.u32 %v3683, 7
    %v3685 = vsub.s32 %v773, %v3684
    %v3686 = vrot.slane %v3675, %v3685
    %v3687 = vlaneseq
    %v3688 = vshrl.u32 %v3687, 7
    %v3689 = vsub.s32 %v778, %v3688
    %v3690 = vrot.slane %v3676, %v3689
    %v3691 = vsel %vm783, %v3690, %v3686
    %v3692 = vlaneseq
    %v3693 = vshrl.u32 %v3692, 7
    %v3694 = vsub.s32 %v773, %v3693
    %v3695 = vrot.slane %v3677, %v3694
    %v3696 = vlaneseq
    %v3697 = vshrl.u32 %v3696, 7
    %v3698 = vsub.s32 %v778, %v3697
    %v3699 = vrot.slane %v3678, %v3698
    %v3700 = vsel %vm783, %v3699, %v3695
    %v3701 = vsel %vm794, %v3700, %v3691
    %v3703 = vsel %vm797, %v3701, -inf
    %3704 = vmax.xlane.f32.xlu0 %v3703
    %v3705 = vpop.xlane.xlu0 %3704
    %v3707 = vlaneseq
    %v3708 = vshrl.u32 %v3707, 7
    %v3709 = vsub.s32 0, %v3708
    %v3710 = vrot.slane %v3705, %v3709
    %v3711 = vlaneseq
    %v3712 = vshrl.u32 %v3711, 7
    %v3713 = vsub.s32 1, %v3712
    %v3714 = vrot.slane %v3705, %v3713
    %v3717 = vsub.f32 %v3675, %v3710
    %v3718 = vsub.f32 %v3676, %v3710
    %v3719 = vsub.f32 %v3677, %v3714
    %v3720 = vsub.f32 %v3678, %v3714
    %v3721 = vmul.f32 %v3717, 1.442695
    %v3722 = vpow.pop %v3721
    %v3723 = vmul.f32 %v3718, 1.442695
    %v3724 = vpow.pop %v3723
    %v3725 = vmul.f32 %v3719, 1.442695
    %v3726 = vpow.pop %v3725
    %v3727 = vmul.f32 %v3720, 1.442695
    %v3728 = vpow.pop %v3727
    %3733 = vset.pattern.permute.xlu0 0
    %3734 = vperm.xlu0 %3733, %v3722
    %v3735 = vpop.permute.xlu0 %3734
    %3736 = vset.pattern.permute.xlu0 0
    %3737 = vperm.xlu0 %3736, %v3724
    %v3738 = vpop.permute.xlu0 %3737
    %3739 = vset.pattern.permute.xlu0 0
    %3740 = vperm.xlu0 %3739, %v3726
    %v3741 = vpop.permute.xlu0 %3740
    %3742 = vset.pattern.permute.xlu0 0
    %3743 = vperm.xlu0 %3742, %v3728
    %v3744 = vpop.permute.xlu0 %3743
    %v3745 = vlaneseq
    %v3746 = vshrl.u32 %v3745, 7
    %v3747 = vsub.s32 %v773, %v3746
    %v3748 = vrot.slane %v3735, %v3747
    %v3749 = vlaneseq
    %v3750 = vshrl.u32 %v3749, 7
    %v3751 = vsub.s32 %v778, %v3750
    %v3752 = vrot.slane %v3738, %v3751
    %v3753 = vsel %vm783, %v3752, %v3748
    %v3754 = vlaneseq
    %v3755 = vshrl.u32 %v3754, 7
    %v3756 = vsub.s32 %v773, %v3755
    %v3757 = vrot.slane %v3741, %v3756
    %v3758 = vlaneseq
    %v3759 = vshrl.u32 %v3758, 7
    %v3760 = vsub.s32 %v778, %v3759
    %v3761 = vrot.slane %v3744, %v3760
    %v3762 = vsel %vm783, %v3761, %v3757
    %v3763 = vsel %vm794, %v3762, %v3753
    %v3765 = vsel %vm797, %v3763, 0.0
    %3766 = vadd.xlane.f32.xlu0 %v3765
    %v3767 = vpop.xlane.xlu0 %3766
    %v3769 = vlaneseq
    %v3770 = vshrl.u32 %v3769, 7
    %v3771 = vsub.s32 0, %v3770
    %v3772 = vrot.slane %v3767, %v3771
    %v3773 = vlaneseq
    %v3774 = vshrl.u32 %v3773, 7
    %v3775 = vsub.s32 1, %v3774
    %v3776 = vrot.slane %v3767, %v3775
    %v3779 = vrcp.pop %v3772
    %v3780 = vmul.f32 %v3722, %v3779
    %v3781 = vmul.f32 %v3724, %v3779
    %v3782 = vrcp.pop %v3776
    %v3783 = vmul.f32 %v3726, %v3782
    %v3784 = vmul.f32 %v3728, %v3782
    %3786 = vset.pattern.permute.xlu0 0
    %3787 = vperm.xlu0 %3786, %v3780
    %v3788 = vpop.permute.xlu0 %3787
    %3791 = vset.pattern.permute.xlu0 0
    %3792 = vperm.xlu0 %3791, %v3781
    %v3793 = vpop.permute.xlu0 %3792
    %3796 = vset.pattern.permute.xlu0 0
    %3797 = vperm.xlu0 %3796, %v3783
    %v3798 = vpop.permute.xlu0 %3797
    %3801 = vset.pattern.permute.xlu0 0
    %3802 = vperm.xlu0 %3801, %v3784
    %v3803 = vpop.permute.xlu0 %3802
    %v3805 = vmul.f32 %v3788, %v114
    %v3806 = vmul.f32 %v3793, %v115
    %v3807 = vmul.f32 %v3798, %v116
    %v3808 = vmul.f32 %v3803, %v117
    %v3809 = vsel %vm223, %v3805, 0.0
    %v3810 = vsel %vm745, %v3806, 0.0
    %v3811 = vadd.f32 %v3809, %v3810
    %v3812 = vrot.slane %v3811, 4
    %v3813 = vadd.f32 %v3811, %v3812
    %v3814 = vrot.slane %v3813, 2
    %v3815 = vadd.f32 %v3813, %v3814
    %v3816 = vrot.slane %v3815, 1
    %v3817 = vadd.f32 %v3815, %v3816
    %v3818 = vsel %vm223, %v3807, 0.0
    %v3819 = vsel %vm745, %v3808, 0.0
    %v3820 = vadd.f32 %v3818, %v3819
    %v3821 = vrot.slane %v3820, 4
    %v3822 = vadd.f32 %v3820, %v3821
    %v3823 = vrot.slane %v3822, 2
    %v3824 = vadd.f32 %v3822, %v3823
    %v3825 = vrot.slane %v3824, 1
    %v3826 = vadd.f32 %v3824, %v3825
    %s3827 = scalar_lea.vmem [#allocation3], 14
    %v3828 = vld [vmem:[%s3827] sm:$0x3]
    %v3831 = vsel %vm794, %v3826, %v3817
    %v3832 = vsel %vm223, %v3831, 0
    %3834 = vmatprep.subr.mxu0 0.0
    %3835 = vmatpush1.msra.mxu0 %v553
    %3836 = vmatprep.subr.mxu0 0.0
    %3837 = vmatpush1.msra.mxu0 %v554
    %3838 = vmatprep.subr.mxu0 0.0
    %3839 = vmatpush1.msra.mxu0 %v555
    %3840 = vmatprep.subr.mxu0 0.0
    %3841 = vmatpush1.msra.mxu0 %v556
    %3842 = vmatprep.subr.mxu0 0.0
    %3843 = vmatpush1.msra.mxu0 0.0
    %3844 = vmatprep.subr.mxu0 0.0
    %3845 = vmatpush1.msra.mxu0 0.0
    %3846 = vmatprep.subr.mxu0 0.0
    %3847 = vmatpush1.msra.mxu0 0.0
    %3848 = vmatprep.subr.mxu0 0.0
    %3849 = vmatpush1.msra.mxu0 0.0
    %3850 = vmatprep.subr.mxu0 0.0
    %3851 = vmatpush1.msra.mxu0 0.0
    %3852 = vmatprep.subr.mxu0 0.0
    %3853 = vmatpush1.msra.mxu0 0.0
    %3854 = vmatprep.subr.mxu0 0.0
    %3855 = vmatpush1.msra.mxu0 0.0
    %3856 = vmatprep.subr.mxu0 0.0
    %3857 = vmatpush1.msra.mxu0 0.0
    %3858 = vmatprep.subr.mxu0 0.0
    %3859 = vmatpush1.msra.mxu0 0.0
    %3860 = vmatprep.subr.mxu0 0.0
    %3861 = vmatpush1.msra.mxu0 0.0
    %3862 = vmatprep.subr.mxu0 0.0
    %3863 = vmatpush1.msra.mxu0 0.0
    %3864 = vmatprep.subr.mxu0 0.0
    %3865 = vmatpush1.msra.mxu0 0.0
    %3866 = vmatprep.subr.mxu0 0.0
    %3867 = vmatpush1.msra.mxu0 0.0
    %3868 = vmatprep.subr.mxu0 0.0
    %3869 = vmatpush1.msra.mxu0 0.0
    %3870 = vmatprep.subr.mxu0 0.0
    %3871 = vmatpush1.msra.mxu0 0.0
    %3872 = vmatprep.subr.mxu0 0.0
    %3873 = vmatpush1.msra.mxu0 0.0
    %3874 = vmatprep.subr.mxu0 0.0
    %3875 = vmatpush1.msra.mxu0 0.0
    %3876 = vmatprep.subr.mxu0 0.0
    %3877 = vmatpush1.msra.mxu0 0.0
    %3878 = vmatprep.subr.mxu0 0.0
    %3879 = vmatpush1.msra.mxu0 0.0
    %3880 = vmatprep.subr.mxu0 0.0
    %3881 = vmatpush1.msra.mxu0 0.0
    %3882 = vmatprep.subr.mxu0 0.0
    %3883 = vmatpush1.msra.mxu0 0.0
    %3884 = vmatprep.subr.mxu0 0.0
    %3885 = vmatpush1.msra.mxu0 0.0
    %3886 = vmatprep.subr.mxu0 0.0
    %3887 = vmatpush1.msra.mxu0 0.0
    %3888 = vmatprep.subr.mxu0 0.0
    %3889 = vmatpush1.msra.mxu0 0.0
    %3890 = vmatprep.subr.mxu0 0.0
    %3891 = vmatpush1.msra.mxu0 0.0
    %3892 = vmatprep.subr.mxu0 0.0
    %3893 = vmatpush1.msra.mxu0 0.0
    %3894 = vmatprep.subr.mxu0 0.0
    %3895 = vmatpush1.msra.mxu0 0.0
    %3896 = vmatprep.subr.mxu0 0.0
    %3897 = vmatpush1.msra.mxu0 0.0
    %3898 = vmatprep.mubr.f32.mxu0 0.0
    %3899 = vmatmul.mubr.f32.gmra.mrb[0].mxu0 %v3832
    %v3900 = vpop.f32.mrb[0].mxu0
    %v3901 = vadd.f32 0.0, %v3900
    %v3902 = vpop.f32.mrb[0].mxu0
    %3903 = vdwg.mxu0
    %v3904 = vadd.f32 %v3828, %v3901
    %3905 = vrot.lane.b32.xlu0 %v3615, 96
    %v3906 = vpop.permute.xlu0 %3905
    %v3908 = vadd.f32 %v3904, %v3906
    %v3909 = vxor.u32 %v3908, 2147483648
    %v3910 = vmul.f32 %v3909, 1.442695
    %v3911 = vpow.pop %v3910
    %v3912 = vadd.f32 %v3911, 1.0
    %v3913 = vrcp.pop %v3912
    %v3914 = vmul.f32 1.0, %v3913
    %3915 = vrot.lane.b32.xlu0 %v3615, 32
    %v3916 = vpop.permute.xlu0 %3915
    %v3918 = vmul.f32 %v3914, %v3916
    %3920 = vrot.lane.b32.xlu0 %v3918, 64
    %v3921 = vpop.permute.xlu0 %3920
    %v3923 = vadd.f32 %v3904, %v3921
    %v3924 = vtanh.pop %v3923
    %v3925 = vsub.f32 1.0, %v3914
    %3927 = vrot.lane.b32.xlu0 %v3924, 96
    %v3928 = vpop.permute.xlu0 %3927
    %v3930 = vmul.f32 %v3925, %v3928
    %v3931 = vmul.f32 %v3914, %v3517
    %v3932 = vadd.f32 %v3930, %v3931
    %3934 = vrot.lane.b32.xlu0 %v3932, 96
    %v3935 = vpop.permute.xlu0 %3934
    %s3937 = scalar_lea.vmem [#allocation2], 14
    %3938 = vst.msk [vmem:[%s3937] sm:$0x3] %vm745, %v3935
    %v3939 = vlaneseq
    %v3940 = vshrl.u32 %v3939, 7
    %v3941 = vsub.s32 %v773, %v3940
    %v3942 = vrot.slane %v3788, %v3941
    %v3943 = vlaneseq
    %v3944 = vshrl.u32 %v3943, 7
    %v3945 = vsub.s32 %v778, %v3944
    %v3946 = vrot.slane %v3793, %v3945
    %v3947 = vsel %vm783, %v3946, %v3942
    %v3948 = vlaneseq
    %v3949 = vshrl.u32 %v3948, 7
    %v3950 = vsub.s32 %v773, %v3949
    %v3951 = vrot.slane %v3798, %v3950
    %v3952 = vlaneseq
    %v3953 = vshrl.u32 %v3952, 7
    %v3954 = vsub.s32 %v778, %v3953
    %v3955 = vrot.slane %v3803, %v3954
    %v3956 = vsel %vm783, %v3955, %v3951
    %v3957 = vsel %vm794, %v3956, %v3947
    %s3959 = scalar_lea.vmem [#allocation15], 14
    %3960 = vst.msk [vmem:[%s3959] sm:$0x3] %vm797, %v3957
    %3961 = vst.msk [vmem:[#allocation17] sm:$0x3] %vm745, %v3935
    %v3962 = vld [vmem:[#allocation2] sm:$0x3]
    %v3963 = vld [vmem:[#allocation2 + $0x2] sm:$0x3]
    %v3964 = vld [vmem:[#allocation2 + $0x4] sm:$0x3]
    %v3965 = vld [vmem:[#allocation2 + $0x6] sm:$0x3]
    %v3966 = vld [vmem:[#allocation2 + $0x8] sm:$0x3]
    %v3967 = vld [vmem:[#allocation2 + $0xa] sm:$0x3]
    %v3968 = vld [vmem:[#allocation2 + $0xc] sm:$0x3]
    %v3969 = vld [vmem:[#allocation2 + $0xe] sm:$0x3]
    %v3970 = vld [vmem:[%s12] sm:$0xff]
    %v3971 = vld [vmem:[%s12 + $0x8] sm:$0xff]
    %v3972 = vld [vmem:[%s12 + $0x10] sm:$0xff]
    %v3973 = vld [vmem:[%s12 + $0x18] sm:$0xff]
    %v3974 = vld [vmem:[%s13] sm:$0x1]
    %v3976 = vlaneseq
    %v3977 = vshrl.u32 %v3976, 7
    %v3978 = vsub.s32 0, %v3977
    %v3979 = vrot.slane %v3974, %v3978
    %v3989 = vcombine.low %v3962, %v3963
    %v3990 = vcombine.low %v3964, %v3965
    %v3992 = vunpack.c.l.s4 1983009808
    %v3993 = vunpack.c.0.s8 %v3992
    %v3994 = vlaneseq
    %v3995 = vshrl.u32 %v3994, 7
    %v3996 = vsub.s32 %v3993, %v3995
    %v3997 = vrot.slane %v3989, %v3996
    %v3999 = vunpack.c.l.s4 1983009808
    %v4000 = vunpack.c.0.s8 %v3999
    %v4001 = vlaneseq
    %v4002 = vshrl.u32 %v4001, 7
    %v4003 = vsub.s32 %v4000, %v4002
    %v4004 = vrot.slane %v3990, %v4003
    %v4005 = vcombine.low %v3997, %v4004
    %v4006 = vcombine.low %v3966, %v3967
    %v4007 = vcombine.low %v3968, %v3969
    %v4009 = vunpack.c.l.s4 1983009808
    %v4010 = vunpack.c.0.s8 %v4009
    %v4011 = vlaneseq
    %v4012 = vshrl.u32 %v4011, 7
    %v4013 = vsub.s32 %v4010, %v4012
    %v4014 = vrot.slane %v4006, %v4013
    %v4016 = vunpack.c.l.s4 1983009808
    %v4017 = vunpack.c.0.s8 %v4016
    %v4018 = vlaneseq
    %v4019 = vshrl.u32 %v4018, 7
    %v4020 = vsub.s32 %v4017, %v4019
    %v4021 = vrot.slane %v4007, %v4020
    %v4022 = vcombine.low %v4014, %v4021
    %v4023 = vsel %vm223, %v4005, 0
    %v4025 = vsel %vm223, %v4022, 0
    %4027 = vmatprep.subr.mxu0 0.0
    %4028 = vmatpush1.msra.mxu0 %v3970
    %4029 = vmatprep.subr.mxu0 0.0
    %4030 = vmatpush1.msra.mxu0 %v3971
    %4031 = vmatprep.subr.mxu0 0.0
    %4032 = vmatpush1.msra.mxu0 %v3972
    %4033 = vmatprep.subr.mxu0 0.0
    %4034 = vmatpush1.msra.mxu0 %v3973
    %4035 = vmatprep.subr.mxu0 0.0
    %4036 = vmatpush1.msra.mxu0 0.0
    %4037 = vmatprep.subr.mxu0 0.0
    %4038 = vmatpush1.msra.mxu0 0.0
    %4039 = vmatprep.subr.mxu0 0.0
    %4040 = vmatpush1.msra.mxu0 0.0
    %4041 = vmatprep.subr.mxu0 0.0
    %4042 = vmatpush1.msra.mxu0 0.0
    %4043 = vmatprep.subr.mxu0 0.0
    %4044 = vmatpush1.msra.mxu0 0.0
    %4045 = vmatprep.subr.mxu0 0.0
    %4046 = vmatpush1.msra.mxu0 0.0
    %4047 = vmatprep.subr.mxu0 0.0
    %4048 = vmatpush1.msra.mxu0 0.0
    %4049 = vmatprep.subr.mxu0 0.0
    %4050 = vmatpush1.msra.mxu0 0.0
    %4051 = vmatprep.subr.mxu0 0.0
    %4052 = vmatpush1.msra.mxu0 0.0
    %4053 = vmatprep.subr.mxu0 0.0
    %4054 = vmatpush1.msra.mxu0 0.0
    %4055 = vmatprep.subr.mxu0 0.0
    %4056 = vmatpush1.msra.mxu0 0.0
    %4057 = vmatprep.subr.mxu0 0.0
    %4058 = vmatpush1.msra.mxu0 0.0
    %4059 = vmatprep.subr.mxu0 0.0
    %4060 = vmatpush1.msra.mxu0 0.0
    %4061 = vmatprep.subr.mxu0 0.0
    %4062 = vmatpush1.msra.mxu0 0.0
    %4063 = vmatprep.subr.mxu0 0.0
    %4064 = vmatpush1.msra.mxu0 0.0
    %4065 = vmatprep.subr.mxu0 0.0
    %4066 = vmatpush1.msra.mxu0 0.0
    %4067 = vmatprep.subr.mxu0 0.0
    %4068 = vmatpush1.msra.mxu0 0.0
    %4069 = vmatprep.subr.mxu0 0.0
    %4070 = vmatpush1.msra.mxu0 0.0
    %4071 = vmatprep.subr.mxu0 0.0
    %4072 = vmatpush1.msra.mxu0 0.0
    %4073 = vmatprep.subr.mxu0 0.0
    %4074 = vmatpush1.msra.mxu0 0.0
    %4075 = vmatprep.subr.mxu0 0.0
    %4076 = vmatpush1.msra.mxu0 0.0
    %4077 = vmatprep.subr.mxu0 0.0
    %4078 = vmatpush1.msra.mxu0 0.0
    %4079 = vmatprep.subr.mxu0 0.0
    %4080 = vmatpush1.msra.mxu0 0.0
    %4081 = vmatprep.subr.mxu0 0.0
    %4082 = vmatpush1.msra.mxu0 0.0
    %4083 = vmatprep.subr.mxu0 0.0
    %4084 = vmatpush1.msra.mxu0 0.0
    %4085 = vmatprep.subr.mxu0 0.0
    %4086 = vmatpush1.msra.mxu0 0.0
    %4087 = vmatprep.subr.mxu0 0.0
    %4088 = vmatpush1.msra.mxu0 0.0
    %4089 = vmatprep.subr.mxu0 0.0
    %4090 = vmatpush1.msra.mxu0 0.0
    %4091 = vmatprep.mubr.f32.mxu0 0.0
    %4092 = vmatmul.mubr.f32.gmra.mrb[0].mxu0 %v4023
    %v4093 = vpop.f32.mrb[0].mxu0
    %v4094 = vadd.f32 %v3979, %v4093
    %v4095 = vpop.f32.mrb[0].mxu0
    %4096 = vmatprep.mubr.f32.mxu0 0.0
    %4097 = vmatmul.mubr.f32.gmra.mrb[0].mxu0 %v4025
    %v4098 = vpop.f32.mrb[0].mxu0
    %v4099 = vadd.f32 %v3979, %v4098
    %v4100 = vpop.f32.mrb[0].mxu0
    %4101 = vdwg.mxu0
    %v4104 = vcombine.high %v4094, %v4094
    %v4106 = vunpack.c.l.s4 1983009808
    %v4107 = vunpack.c.0.s8 %v4106
    %v4108 = vlaneseq
    %v4109 = vshrl.u32 %v4108, 7
    %v4110 = vsub.s32 %v4107, %v4109
    %v4111 = vrot.slane %v4094, %v4110
    %v4113 = vunpack.c.l.s4 1983009808
    %v4114 = vunpack.c.0.s8 %v4113
    %v4115 = vlaneseq
    %v4116 = vshrl.u32 %v4115, 7
    %v4117 = vsub.s32 %v4114, %v4116
    %v4118 = vrot.slane %v4104, %v4117
    %v4119 = vcombine.high %v4111, %v4111
    %v4120 = vcombine.high %v4118, %v4118
    %v4121 = vcombine.high %v4099, %v4099
    %v4123 = vunpack.c.l.s4 1983009808
    %v4124 = vunpack.c.0.s8 %v4123
    %v4125 = vlaneseq
    %v4126 = vshrl.u32 %v4125, 7
    %v4127 = vsub.s32 %v4124, %v4126
    %v4128 = vrot.slane %v4099, %v4127
    %v4130 = vunpack.c.l.s4 1983009808
    %v4131 = vunpack.c.0.s8 %v4130
    %v4132 = vlaneseq
    %v4133 = vshrl.u32 %v4132, 7
    %v4134 = vsub.s32 %v4131, %v4133
    %v4135 = vrot.slane %v4121, %v4134
    %v4136 = vcombine.high %v4128, %v4128
    %v4137 = vcombine.high %v4135, %v4135
    %vm4146 = vcmask 189440
    %4147 = vst.msk [vmem:[#allocation14] sm:$0x3] %vm4146, %v4111
    %4148 = vst.msk [vmem:[#allocation14 + $0x2] sm:$0x3] %vm4146, %v4119
    %4149 = vst.msk [vmem:[#allocation14 + $0x4] sm:$0x3] %vm4146, %v4118
    %4150 = vst.msk [vmem:[#allocation14 + $0x6] sm:$0x3] %vm4146, %v4120
    %4151 = vst.msk [vmem:[#allocation14 + $0x8] sm:$0x3] %vm4146, %v4128
    %4152 = vst.msk [vmem:[#allocation14 + $0xa] sm:$0x3] %vm4146, %v4136
    %4153 = vst.msk [vmem:[#allocation14 + $0xc] sm:$0x3] %vm4146, %v4135
    %4154 = vst.msk [vmem:[#allocation14 + $0xe] sm:$0x3] %vm4146, %v4137
    // Predicated region
    $region78: #{tpu_custom_call.1} parent=1 // pred_check
      _
    $region79: #{tpu_custom_call.1} parent=1 // pred_check_branch
      %4156 = sbr.rel (0) target = $region81
    $region80: #{tpu_custom_call.1} parent=1 // pred_region
      %s4158 = ssub.s32 256, 256
      %4159 = vsyncadd [#allocation7], %s4158
      %s4160 = sshll.u32 [#allocation14], 4
      %s4161 = int_to_ptr.vmem [resolvable:$true] %s4160
      %4166 = dma.vmem_to_hbm [thread:$0]  %s4161, 256, %s14, [#allocation7], 32, 32, 2
    $region81: #{tpu_custom_call.1} parent=1 // pred_fallthru
      _
    // Predicated region
    $region82: #{tpu_custom_call.1} parent=1 // pred_check
      _
    $region83: #{tpu_custom_call.1} parent=1 // pred_check_branch
      %4168 = sbr.rel (0) target = $region85
    $region84: #{tpu_custom_call.1} parent=1 // pred_region
      %s4170 = ssub.s32 256, 256
      %4171 = vsyncadd [#allocation16], %s4170
      %s4172 = sshll.u32 [#allocation15], 4
      %s4173 = int_to_ptr.vmem [resolvable:$true] %s4172
      %4178 = dma.vmem_to_hbm [thread:$0]  %s4173, 256, %s15, [#allocation16], 32, 32, 2
    $region85: #{tpu_custom_call.1} parent=1 // pred_fallthru
      _
    // Predicated region
    $region86: #{tpu_custom_call.1} parent=1 // pred_check
      _
    $region87: #{tpu_custom_call.1} parent=1 // pred_check_branch
      %4180 = sbr.rel (0) target = $region89
    $region88: #{tpu_custom_call.1} parent=1 // pred_region
      %s4182 = ssub.s32 32, 32
      %4183 = vsyncadd [#allocation16], %s4182
      %s4185 = sshll.u32 [#allocation17], 4
      %s4186 = int_to_ptr.vmem [resolvable:$true] %s4185
      %4188 = dma.vmem_to_hbm [thread:$0]  %s4186, 32, %s16, [#allocation16]
    $region89: #{tpu_custom_call.1} parent=1 // pred_fallthru
      _
    // Predicated region
    $region90: #{tpu_custom_call.1} parent=1 // pred_check
      _
    $region91: #{tpu_custom_call.1} parent=1 // pred_check_branch
      %4190 = sbr.rel (0) target = $region93
    $region92: #{tpu_custom_call.1} parent=1 // pred_region
      %4191 = dma.done [#allocation7], 256
    $region93: #{tpu_custom_call.1} parent=1 // pred_fallthru
      _
    // Predicated region
    $region94: #{tpu_custom_call.1} parent=1 // pred_check
      _
    $region95: #{tpu_custom_call.1} parent=1 // pred_check_branch
      %4193 = sbr.rel (0) target = $region97
    $region96: #{tpu_custom_call.1} parent=1 // pred_region
      %4194 = dma.done [#allocation16], 256
    $region97: #{tpu_custom_call.1} parent=1 // pred_fallthru
      _
    // Predicated region
    $region98: #{tpu_custom_call.1} parent=1 // pred_check
      _
    $region99: #{tpu_custom_call.1} parent=1 // pred_check_branch
      %4196 = sbr.rel (0) target = $region101
    $region100: #{tpu_custom_call.1} parent=1 // pred_region
      %4197 = dma.done [#allocation16], 32
    $region101: #{tpu_custom_call.1} parent=1 // pred_fallthru
      _
    %4198 = vsyncpa [#allocation6], 1
    %4199 = vsyncpa [#allocation9], 1
    %4200 = vsyncpa [#allocation12], 1
    %4201 = vsyncpa [#allocation7], 1
    %4202 = vsyncpa [#allocation16], 1

</llo_original>
